<compile_context>
chip_gen: v7x
topology: tpu7x:2x2x1
jax: 0.10.0
libtpu: 0.0.40
codegen_flags: <defaults>
</compile_context>

<pallas_src>
import jax
import jax.numpy as jnp
from jax.experimental import pallas as pl
from jax.experimental.pallas import tpu as pltpu


HIDDEN = 32        # true hidden channel count of the placeholder backbone
NUM_CLASS = 5
LANE = 128         # TPU lane width; only the class dim is zero-padded to this
KSIZE = 3


# ----------------------------------------------------------------------------
# Fused per-image kernel: conv1+ReLU -> conv2+ReLU -> global-avg-pool -> head
# ----------------------------------------------------------------------------
def _fused_image_kernel(x_ref, w1_ref, b1_ref, w2_ref, b2_ref,
                        wh_ref, bh_ref, o_ref, h1_ref):
    """
    x_ref  : (1, H*W, 9*Cin)      bf16  conv1 im2col patches for this image
    w1_ref : (9*Cin, HIDDEN)      bf16
    b1_ref : (1, HIDDEN)          f32
    w2_ref : (9*HIDDEN, HIDDEN)   bf16
    b2_ref : (1, HIDDEN)          f32
    wh_ref : (HIDDEN, LANE)       f32   head weights (classes zero-padded)
    bh_ref : (1, LANE)            f32
    o_ref  : (1, 1, LANE)         f32   logits (first NUM_CLASS lanes valid)
    h1_ref : (H+2, W+2, HIDDEN)   bf16  VMEM scratch, halo-padded conv1 output
    """
    Hp, Wp, _ = h1_ref.shape
    H, W = Hp - 2, Wp - 2
    M = H * W

    # ---- conv1 (3x3, pad 1): single im2col matmul, K = 9*Cin ---------------
    h1 = jnp.dot(x_ref[0], w1_ref[...], preferred_element_type=jnp.float32)
    h1 = jnp.maximum(h1 + b1_ref[...], 0.0)                      # (M, 32) f32

    # zero only the 1-px halo border; the interior is fully overwritten next
    zrow = jnp.zeros((1, Wp, HIDDEN), h1_ref.dtype)
    zcol = jnp.zeros((Hp, 1, HIDDEN), h1_ref.dtype)
    h1_ref[0:1, :, :] = zrow
    h1_ref[Hp - 1:Hp, :, :] = zrow
    h1_ref[:, 0:1, :] = zcol
    h1_ref[:, Wp - 1:Wp, :] = zcol
    h1_ref[1:1 + H, 1:1 + W, :] = (
        h1.reshape(H, W, HIDDEN).astype(h1_ref.dtype))

    # ---- conv2 (3x3, pad 1): build (M, 9*32) im2col via lane concat, one dot
    taps = []
    for kh in range(KSIZE):
        for kw in range(KSIZE):
            taps.append(h1_ref[kh:kh + H, kw:kw + W, :].reshape(M, HIDDEN))
    lhs2 = jnp.concatenate(taps, axis=-1)                        # (M, 288) bf16
    h2 = jnp.dot(lhs2, w2_ref[...], preferred_element_type=jnp.float32)
    h2 = jnp.maximum(h2 + b2_ref[...], 0.0)                      # (M, 32) f32

    # ---- global average pool + linear head (f32; K=32 is tiny) -------------
    pooled = jnp.mean(h2, axis=0, keepdims=True)                 # (1, 32) f32
    logits = jnp.dot(pooled, wh_ref[...],
                     preferred_element_type=jnp.float32) + bh_ref[...]
    o_ref[0] = logits.astype(o_ref.dtype)


# ----------------------------------------------------------------------------
# Wrapper: layout plumbing (NCHW->NHWC, conv1 im2col, class padding) + call
# ----------------------------------------------------------------------------
def ubc_forward(x_nchw, params):
    """NCHW image batch -> (B, NUM_CLASS) logits; forward in one pallas_call."""
    x = jnp.transpose(x_nchw, (0, 2, 3, 1)).astype(jnp.float32)  # NCHW -> NHWC
    B, H, W, Cin = x.shape
    assert Cin <= LANE and HIDDEN <= LANE and NUM_CLASS <= LANE, (
        "channel/class dims must not exceed lane width")
    K1 = KSIZE * KSIZE * Cin
    K2 = KSIZE * KSIZE * HIDDEN

    # conv1 im2col built host-side (first layer only; HBM cost trivial) so the
    # kernel does a single (M, 9*Cin) x (9*Cin, 32) matmul. bf16 cast once here.
    xp = jnp.pad(x, ((0, 0), (1, 1), (1, 1), (0, 0)))
    cols = [xp[:, kh:kh + H, kw:kw + W, :]
            for kh in range(KSIZE) for kw in range(KSIZE)]
    x_cols = jnp.concatenate(cols, axis=-1).reshape(B, H * W, K1)
    x_cols = x_cols.astype(jnp.bfloat16)

    # weights: (kh, kw, cin, cout) -> (9*cin, cout); same tap order as im2col
    w1 = params["w1"].reshape(K1, HIDDEN).astype(jnp.bfloat16)
    w2 = params["w2"].reshape(K2, HIDDEN).astype(jnp.bfloat16)
    b1 = params["b1"].reshape(1, HIDDEN).astype(jnp.float32)
    b2 = params["b2"].reshape(1, HIDDEN).astype(jnp.float32)
    # head kept f32; classes zero-padded to LANE so logits store is lane-dense
    wh = jnp.pad(params["wh"].astype(jnp.float32),
                 ((0, 0), (0, LANE - NUM_CLASS)))
    bh = jnp.pad(params["bh"].reshape(1, -1).astype(jnp.float32),
                 ((0, 0), (0, LANE - NUM_CLASS)))

    out = pl.pallas_call(
        _fused_image_kernel,
        out_shape=jax.ShapeDtypeStruct((B, 1, LANE), jnp.float32),
        grid_spec=pltpu.PrefetchScalarGridSpec(
            num_scalar_prefetch=0,
            grid=(B,),                                   # one image per step
            in_specs=[
                pl.BlockSpec((1, H * W, K1), lambda b: (b, 0, 0)),
                pl.BlockSpec((K1, HIDDEN), lambda b: (0, 0)),
                pl.BlockSpec((1, HIDDEN), lambda b: (0, 0)),
                pl.BlockSpec((K2, HIDDEN), lambda b: (0, 0)),
                pl.BlockSpec((1, HIDDEN), lambda b: (0, 0)),
                pl.BlockSpec((HIDDEN, LANE), lambda b: (0, 0)),
                pl.BlockSpec((1, LANE), lambda b: (0, 0)),
            ],
            out_specs=pl.BlockSpec((1, 1, LANE), lambda b: (b, 0, 0)),
            scratch_shapes=[
                pltpu.VMEM((H + 2, W + 2, HIDDEN), jnp.bfloat16),
            ],
        ),
        compiler_params=pltpu.CompilerParams(
            # batch axis is independent per step -> megacore-shard on v7x
            dimension_semantics=("parallel",),
            vmem_limit_bytes=32 * 1024 * 1024),
    )(x_cols, w1, b1, w2, b2, wh, bh)

    return out.reshape(B, LANE)[:, :NUM_CLASS]


# ----------------------------------------------------------------------------
# Pure-JAX reference (same math, f32) for a sanity check
# ----------------------------------------------------------------------------
def _forward_ref(x_nchw, params):
    x = jnp.transpose(x_nchw, (0, 2, 3, 1)).astype(jnp.float32)
    B, H, W, Cin = x.shape

    def conv3x3(a, w, b):
        ap = jnp.pad(a, ((0, 0), (1, 1), (1, 1), (0, 0)))
        out = jnp.zeros(a.shape[:3] + (w.shape[-1],), jnp.float32)
        for kh in range(3):
            for kw in range(3):
                out = out + jnp.tensordot(ap[:, kh:kh + H, kw:kw + W, :],
                                          w[kh, kw], axes=1)
        return jnp.maximum(out + b, 0.0)

    h1 = conv3x3(x, params["w1"], params["b1"])
    h2 = conv3x3(h1, params["w2"], params["b2"])
    pooled = jnp.mean(h2.reshape(B, H * W, -1), axis=1)
    return pooled @ params["wh"] + params["bh"]


if __name__ == "__main__":
    B, C_in, H, W = 2, 4, 16, 16

    key = jax.random.PRNGKey(0)
    k_x, k_w1, k_w2, k_wh = jax.random.split(key, 4)

    x_nchw = jax.random.normal(k_x, (B, C_in, H, W), dtype=jnp.float32)

    params = {
        # conv weights stored as (kh, kw, C_in, C_out)
        "w1": 0.10 * jax.random.normal(k_w1, (3, 3, C_in, HIDDEN), jnp.float32),
        "b1": jnp.zeros((HIDDEN,), jnp.float32),
        "w2": 0.05 * jax.random.normal(k_w2, (3, 3, HIDDEN, HIDDEN), jnp.float32),
        "b2": jnp.zeros((HIDDEN,), jnp.float32),
        "wh": 0.10 * jax.random.normal(k_wh, (HIDDEN, NUM_CLASS), jnp.float32),
        "bh": jnp.zeros((NUM_CLASS,), jnp.float32),
    }

    logits = ubc_forward(x_nchw, params)
    logits = jax.block_until_ready(logits)
    assert logits.shape == (B, NUM_CLASS), logits.shape
    assert bool(jnp.all(jnp.isfinite(logits)))

    # bf16 MXU operands with f32 accumulation vs f32 reference -> loose tol
    ref = _forward_ref(x_nchw, params)
    assert bool(jnp.allclose(logits, ref, atol=5e-2, rtol=5e-2)), (
        "max abs diff %f" % float(jnp.max(jnp.abs(logits - ref))))

    print("KERNEL_OK")
</pallas_src>

<mosaic_0001>
module attributes {stable_mosaic.version = 11 : i64} {
  func.func @_fused_image_kernel(%arg0: i32, %arg1: memref<1x256x36xbf16, #tpu.memory_space<vmem>>, %arg2: memref<36x32xbf16, #tpu.memory_space<vmem>>, %arg3: memref<1x32xf32, #tpu.memory_space<vmem>>, %arg4: memref<288x32xbf16, #tpu.memory_space<vmem>>, %arg5: memref<1x32xf32, #tpu.memory_space<vmem>>, %arg6: memref<32x128xf32, #tpu.memory_space<vmem>>, %arg7: memref<1x128xf32, #tpu.memory_space<vmem>>, %arg8: memref<1x1x128xf32, #tpu.memory_space<vmem>>, %arg9: memref<18x18x32xbf16, #tpu.memory_space<vmem>>) attributes {dimension_semantics = [#tpu.dimension_semantics<parallel>], iteration_bounds = array<i64: 2>, scalar_prefetch = 0 : i64, scratch_operands = 1 : i64, tpu.core_type = #tpu.core_type<tc>, window_params = [{transform_indices = @transform_0, window_bounds = array<i64: 1, 256, 36>}, {pipeline_mode = #tpu.pipeline_mode<synchronous>, transform_indices = @transform_1, window_bounds = array<i64: 36, 32>}, {pipeline_mode = #tpu.pipeline_mode<synchronous>, transform_indices = @transform_2, window_bounds = array<i64: 1, 32>}, {pipeline_mode = #tpu.pipeline_mode<synchronous>, transform_indices = @transform_3, window_bounds = array<i64: 288, 32>}, {pipeline_mode = #tpu.pipeline_mode<synchronous>, transform_indices = @transform_4, window_bounds = array<i64: 1, 32>}, {pipeline_mode = #tpu.pipeline_mode<synchronous>, transform_indices = @transform_5, window_bounds = array<i64: 32, 128>}, {pipeline_mode = #tpu.pipeline_mode<synchronous>, transform_indices = @transform_6, window_bounds = array<i64: 1, 128>}, {transform_indices = @transform_7, window_bounds = array<i64: 1, 1, 128>}]} {
    %c0 = arith.constant 0 : index
    %c0_0 = arith.constant 0 : index
    %c0_1 = arith.constant 0 : index
    %0 = vector.load %arg1[%c0, %c0_0, %c0_1] : memref<1x256x36xbf16, #tpu.memory_space<vmem>>, vector<1x256x36xbf16>
    %1 = vector.shape_cast %0 : vector<1x256x36xbf16> to vector<256x36xbf16>
    %c0_2 = arith.constant 0 : index
    %c0_3 = arith.constant 0 : index
    %2 = vector.load %arg2[%c0_2, %c0_3] : memref<36x32xbf16, #tpu.memory_space<vmem>>, vector<36x32xbf16>
    %cst = arith.constant dense<0.000000e+00> : vector<256x32xf32>
    %3 = tpu.matmul %1, %2, %cst {dimension_numbers = #tpu.dot_dimension_numbers<[1], [0], [0], [1], [0, 0, 1, 1], [], []>} : vector<256x36xbf16>, vector<36x32xbf16>, vector<256x32xf32> -> vector<256x32xf32>
    %c0_4 = arith.constant 0 : index
    %c0_5 = arith.constant 0 : index
    %4 = vector.load %arg3[%c0_4, %c0_5] : memref<1x32xf32, #tpu.memory_space<vmem>>, vector<1x32xf32>
    %5 = vector.broadcast %4 : vector<1x32xf32> to vector<256x32xf32>
    %6 = arith.addf %3, %5 : vector<256x32xf32>
    %cst_6 = arith.constant 0.000000e+00 : f32
    %7 = vector.broadcast %cst_6 : f32 to vector<256x32xf32>
    %8 = arith.maximumf %6, %7 : vector<256x32xf32>
    %cst_7 = arith.constant 0.000000e+00 : bf16
    %9 = vector.broadcast %cst_7 : bf16 to vector<1x18x32xbf16>
    %cst_8 = arith.constant 0.000000e+00 : bf16
    %10 = vector.broadcast %cst_8 : bf16 to vector<18x1x32xbf16>
    %c0_9 = arith.constant 0 : index
    %c0_10 = arith.constant 0 : index
    %c0_11 = arith.constant 0 : index
    %11 = vector.load %arg9[%c0_9, %c0_10, %c0_11] : memref<18x18x32xbf16, #tpu.memory_space<vmem>>, vector<1x18x32xbf16>
    tpu.vector_store %arg9[%c0_9, %c0_10, %c0_11], %9 {strides = array<i32>} : memref<18x18x32xbf16, #tpu.memory_space<vmem>>, vector<1x18x32xbf16>,
    %c17 = arith.constant 17 : index
    %c0_12 = arith.constant 0 : index
    %c0_13 = arith.constant 0 : index
    %12 = vector.load %arg9[%c17, %c0_12, %c0_13] : memref<18x18x32xbf16, #tpu.memory_space<vmem>>, vector<1x18x32xbf16>
    tpu.vector_store %arg9[%c17, %c0_12, %c0_13], %9 {strides = array<i32>} : memref<18x18x32xbf16, #tpu.memory_space<vmem>>, vector<1x18x32xbf16>,
    %c0_14 = arith.constant 0 : index
    %c0_15 = arith.constant 0 : index
    %c0_16 = arith.constant 0 : index
    %13 = vector.load %arg9[%c0_14, %c0_15, %c0_16] : memref<18x18x32xbf16, #tpu.memory_space<vmem>>, vector<18x1x32xbf16>
    tpu.vector_store %arg9[%c0_14, %c0_15, %c0_16], %10 {strides = array<i32>} : memref<18x18x32xbf16, #tpu.memory_space<vmem>>, vector<18x1x32xbf16>,
    %c0_17 = arith.constant 0 : index
    %c17_18 = arith.constant 17 : index
    %c0_19 = arith.constant 0 : index
    %14 = vector.load %arg9[%c0_17, %c17_18, %c0_19] : memref<18x18x32xbf16, #tpu.memory_space<vmem>>, vector<18x1x32xbf16>
    tpu.vector_store %arg9[%c0_17, %c17_18, %c0_19], %10 {strides = array<i32>} : memref<18x18x32xbf16, #tpu.memory_space<vmem>>, vector<18x1x32xbf16>,
    %15 = vector.shape_cast %8 : vector<256x32xf32> to vector<16x16x32xf32>
    %16 = arith.truncf %15 : vector<16x16x32xf32> to vector<16x16x32xbf16>
    %c1 = arith.constant 1 : index
    %c1_20 = arith.constant 1 : index
    %c0_21 = arith.constant 0 : index
    %17 = vector.load %arg9[%c1, %c1_20, %c0_21] : memref<18x18x32xbf16, #tpu.memory_space<vmem>>, vector<16x16x32xbf16>
    tpu.vector_store %arg9[%c1, %c1_20, %c0_21], %16 {strides = array<i32>} : memref<18x18x32xbf16, #tpu.memory_space<vmem>>, vector<16x16x32xbf16>,
    %c0_22 = arith.constant 0 : index
    %c0_23 = arith.constant 0 : index
    %c0_24 = arith.constant 0 : index
    %18 = vector.load %arg9[%c0_22, %c0_23, %c0_24] : memref<18x18x32xbf16, #tpu.memory_space<vmem>>, vector<16x16x32xbf16>
    %19 = vector.shape_cast %18 : vector<16x16x32xbf16> to vector<256x32xbf16>
    %c0_25 = arith.constant 0 : index
    %c1_26 = arith.constant 1 : index
    %c0_27 = arith.constant 0 : index
    %20 = vector.load %arg9[%c0_25, %c1_26, %c0_27] : memref<18x18x32xbf16, #tpu.memory_space<vmem>>, vector<16x16x32xbf16>
    %21 = vector.shape_cast %20 : vector<16x16x32xbf16> to vector<256x32xbf16>
    %c0_28 = arith.constant 0 : index
    %c2 = arith.constant 2 : index
    %c0_29 = arith.constant 0 : index
    %22 = vector.load %arg9[%c0_28, %c2, %c0_29] : memref<18x18x32xbf16, #tpu.memory_space<vmem>>, vector<16x16x32xbf16>
    %23 = vector.shape_cast %22 : vector<16x16x32xbf16> to vector<256x32xbf16>
    %c1_30 = arith.constant 1 : index
    %c0_31 = arith.constant 0 : index
    %c0_32 = arith.constant 0 : index
    %24 = vector.load %arg9[%c1_30, %c0_31, %c0_32] : memref<18x18x32xbf16, #tpu.memory_space<vmem>>, vector<16x16x32xbf16>
    %25 = vector.shape_cast %24 : vector<16x16x32xbf16> to vector<256x32xbf16>
    %c1_33 = arith.constant 1 : index
    %c1_34 = arith.constant 1 : index
    %c0_35 = arith.constant 0 : index
    %26 = vector.load %arg9[%c1_33, %c1_34, %c0_35] : memref<18x18x32xbf16, #tpu.memory_space<vmem>>, vector<16x16x32xbf16>
    %27 = vector.shape_cast %26 : vector<16x16x32xbf16> to vector<256x32xbf16>
    %c1_36 = arith.constant 1 : index
    %c2_37 = arith.constant 2 : index
    %c0_38 = arith.constant 0 : index
    %28 = vector.load %arg9[%c1_36, %c2_37, %c0_38] : memref<18x18x32xbf16, #tpu.memory_space<vmem>>, vector<16x16x32xbf16>
    %29 = vector.shape_cast %28 : vector<16x16x32xbf16> to vector<256x32xbf16>
    %c2_39 = arith.constant 2 : index
    %c0_40 = arith.constant 0 : index
    %c0_41 = arith.constant 0 : index
    %30 = vector.load %arg9[%c2_39, %c0_40, %c0_41] : memref<18x18x32xbf16, #tpu.memory_space<vmem>>, vector<16x16x32xbf16>
    %31 = vector.shape_cast %30 : vector<16x16x32xbf16> to vector<256x32xbf16>
    %c2_42 = arith.constant 2 : index
    %c1_43 = arith.constant 1 : index
    %c0_44 = arith.constant 0 : index
    %32 = vector.load %arg9[%c2_42, %c1_43, %c0_44] : memref<18x18x32xbf16, #tpu.memory_space<vmem>>, vector<16x16x32xbf16>
    %33 = vector.shape_cast %32 : vector<16x16x32xbf16> to vector<256x32xbf16>
    %c2_45 = arith.constant 2 : index
    %c2_46 = arith.constant 2 : index
    %c0_47 = arith.constant 0 : index
    %34 = vector.load %arg9[%c2_45, %c2_46, %c0_47] : memref<18x18x32xbf16, #tpu.memory_space<vmem>>, vector<16x16x32xbf16>
    %35 = vector.shape_cast %34 : vector<16x16x32xbf16> to vector<256x32xbf16>
    %36 = tpu.concatenate %19, %21, %23, %25, %27, %29, %31, %33, %35 in 1 : vector<256x32xbf16>, vector<256x32xbf16>, vector<256x32xbf16>, vector<256x32xbf16>, vector<256x32xbf16>, vector<256x32xbf16>, vector<256x32xbf16>, vector<256x32xbf16>, vector<256x32xbf16> -> vector<256x288xbf16>
    %c0_48 = arith.constant 0 : index
    %c0_49 = arith.constant 0 : index
    %37 = vector.load %arg4[%c0_48, %c0_49] : memref<288x32xbf16, #tpu.memory_space<vmem>>, vector<288x32xbf16>
    %cst_50 = arith.constant dense<0.000000e+00> : vector<256x32xf32>
    %38 = tpu.matmul %36, %37, %cst_50 {dimension_numbers = #tpu.dot_dimension_numbers<[1], [0], [0], [1], [0, 0, 1, 1], [], []>} : vector<256x288xbf16>, vector<288x32xbf16>, vector<256x32xf32> -> vector<256x32xf32>
    %c0_51 = arith.constant 0 : index
    %c0_52 = arith.constant 0 : index
    %39 = vector.load %arg5[%c0_51, %c0_52] : memref<1x32xf32, #tpu.memory_space<vmem>>, vector<1x32xf32>
    %40 = vector.broadcast %39 : vector<1x32xf32> to vector<256x32xf32>
    %41 = arith.addf %38, %40 : vector<256x32xf32>
    %cst_53 = arith.constant 0.000000e+00 : f32
    %42 = vector.broadcast %cst_53 : f32 to vector<256x32xf32>
    %43 = arith.maximumf %41, %42 : vector<256x32xf32>
    %cst_54 = arith.constant dense<0.000000e+00> : vector<32xf32>
    %44 = vector.multi_reduction <add>, %43, %cst_54 [0] : vector<256x32xf32> to vector<32xf32>
    %45 = vector.shape_cast %44 : vector<32xf32> to vector<1x32xf32>
    %cst_55 = arith.constant 2.560000e+02 : f32
    %46 = vector.broadcast %cst_55 : f32 to vector<1x32xf32>
    %47 = arith.divf %45, %46 : vector<1x32xf32>
    %c0_56 = arith.constant 0 : index
    %c0_57 = arith.constant 0 : index
    %48 = vector.load %arg6[%c0_56, %c0_57] : memref<32x128xf32, #tpu.memory_space<vmem>>, vector<32x128xf32>
    %cst_58 = arith.constant dense<0.000000e+00> : vector<1x128xf32>
    %49 = tpu.matmul %47, %48, %cst_58 {dimension_numbers = #tpu.dot_dimension_numbers<[1], [0], [0], [1], [0, 0, 1, 1], [], []>} : vector<1x32xf32>, vector<32x128xf32>, vector<1x128xf32> -> vector<1x128xf32>
    %c0_59 = arith.constant 0 : index
    %c0_60 = arith.constant 0 : index
    %50 = vector.load %arg7[%c0_59, %c0_60] : memref<1x128xf32, #tpu.memory_space<vmem>>, vector<1x128xf32>
    %51 = arith.addf %49, %50 : vector<1x128xf32>
    %c0_61 = arith.constant 0 : index
    %c0_62 = arith.constant 0 : index
    %c0_63 = arith.constant 0 : index
    %52 = vector.load %arg8[%c0_61, %c0_62, %c0_63] : memref<1x1x128xf32, #tpu.memory_space<vmem>>, vector<1x1x128xf32>
    %53 = vector.shape_cast %52 : vector<1x1x128xf32> to vector<1x128xf32>
    %54 = vector.shape_cast %51 : vector<1x128xf32> to vector<1x1x128xf32>
    tpu.vector_store %arg8[%c0_61, %c0_62, %c0_63], %54 {strides = array<i32>} : memref<1x1x128xf32, #tpu.memory_space<vmem>>, vector<1x1x128xf32>,
    return
  }
  func.func @transform_0(%arg0: i32) -> (i32, i32, i32) {
    %c0_i32 = arith.constant 0 : i32
    %c0_i32_0 = arith.constant 0 : i32
    %c0_i32_1 = arith.constant 0 : i32
    return %arg0, %c0_i32, %c0_i32_0 : i32, i32, i32
  }
  func.func @transform_1(%arg0: i32) -> (i32, i32) {
    %c0_i32 = arith.constant 0 : i32
    %c0_i32_0 = arith.constant 0 : i32
    %c0_i32_1 = arith.constant 0 : i32
    return %c0_i32, %c0_i32_0 : i32, i32
  }
  func.func @transform_2(%arg0: i32) -> (i32, i32) {
    %c0_i32 = arith.constant 0 : i32
    %c0_i32_0 = arith.constant 0 : i32
    %c0_i32_1 = arith.constant 0 : i32
    return %c0_i32, %c0_i32_0 : i32, i32
  }
  func.func @transform_3(%arg0: i32) -> (i32, i32) {
    %c0_i32 = arith.constant 0 : i32
    %c0_i32_0 = arith.constant 0 : i32
    %c0_i32_1 = arith.constant 0 : i32
    return %c0_i32, %c0_i32_0 : i32, i32
  }
  func.func @transform_4(%arg0: i32) -> (i32, i32) {
    %c0_i32 = arith.constant 0 : i32
    %c0_i32_0 = arith.constant 0 : i32
    %c0_i32_1 = arith.constant 0 : i32
    return %c0_i32, %c0_i32_0 : i32, i32
  }
  func.func @transform_5(%arg0: i32) -> (i32, i32) {
    %c0_i32 = arith.constant 0 : i32
    %c0_i32_0 = arith.constant 0 : i32
    %c0_i32_1 = arith.constant 0 : i32
    return %c0_i32, %c0_i32_0 : i32, i32
  }
  func.func @transform_6(%arg0: i32) -> (i32, i32) {
    %c0_i32 = arith.constant 0 : i32
    %c0_i32_0 = arith.constant 0 : i32
    %c0_i32_1 = arith.constant 0 : i32
    return %c0_i32, %c0_i32_0 : i32, i32
  }
  func.func @transform_7(%arg0: i32) -> (i32, i32, i32) {
    %c0_i32 = arith.constant 0 : i32
    %c0_i32_0 = arith.constant 0 : i32
    %c0_i32_1 = arith.constant 0 : i32
    return %arg0, %c0_i32, %c0_i32_0 : i32, i32, i32
  }
}

</mosaic_0001>

<llo_original>
// kernel: tpu_custom_call.1
$region0: #{tpu_custom_call.1}
  #allocation0 [shape = 'u32[]', space=smem, size = 0x4, offset = 0x4, fixed_abs, tag = 'smem constant byte address 0x4 - core index']
  #allocation1 [shape = 'u32[144,128]{1,0:T(1,128)}', space=vmem, size = 0x12000, scoped, tag = 'internal scratch']
  #allocation2 [shape = 'bf16[18,18,32]{2,1,0:T(8,128)(2,1)}', space=vmem, size = 0x1b000, scoped, tag = 'scratch operand']
  %s0 = inlined_call_operand.vmem [shape: bf16[2,256,36], index: 0, kind: input, shape index: {}]
  %s1 = inlined_call_operand.vmem [shape: bf16[36,32], index: 1, kind: input, shape index: {}]
  %s2 = inlined_call_operand.vmem [shape: f32[1,32], index: 2, kind: input, shape index: {}]
  %s3 = inlined_call_operand.vmem [shape: bf16[288,32], index: 3, kind: input, shape index: {}]
  %s4 = inlined_call_operand.vmem [shape: f32[1,32], index: 4, kind: input, shape index: {}]
  %s5 = inlined_call_operand.vmem [shape: f32[32,128], index: 5, kind: input, shape index: {}]
  %s6 = inlined_call_operand.vmem [shape: f32[1,128], index: 6, kind: input, shape index: {}]
  %s7 = inlined_call_operand.hbm [shape: f32[2,1,128], index: 7, kind: output, shape index: {}]
  %s8 = sld [smem:[#allocation0]]
  $region61: #{tpu_custom_call.1} parent=0
    _
  %s10 = ssub.s32 1, %s8
  %s11 = scalar_select 0, %s10, %s8
  $region1: #{tpu_custom_call.1} parent=0
    #allocation3 [shape = 'u8[1024]{0}', space=vmem, size = 0x400, scoped, tag = 'output window, operand 0']
    #allocation4 [shape = 's32[2]{0}', space=sflag, size = 0x8, scoped, tag = 'scoped memory for tpu_custom_call.1']
    %12 = vsyncpa [#allocation4], 0
    %s13 = scalar_lea.sflag [#allocation4], 1
    %14 = vsyncpa %s13, 0
    loop: start=0, step=1, limit=4
    $region2: #{tpu_custom_call.1} parent=1 // loop_pre_header
      _
    $region3: #{tpu_custom_call.1} parent=1 // loop_header
      %s16 = sphi 0, %s20
      %p17 = scmp.ge.s32.totalorder %s16, 4
      %s26 = sphi 0, %s28
      %s29 = sphi 0, %s26
      %s30 = sphi 0, %s29
      %s46 = sphi 0, %s30
      %s50 = sphi 0, %s50
      %s52 = sphi 0, %s50
      %s53 = sphi 0, %s52
      %s67 = sphi 0, %s53
      %s71 = sphi 0, %s71
      %s73 = sphi 0, %s71
      %s74 = sphi 0, %s73
      %s88 = sphi 0, %s74
      %s92 = sphi 0, %s92
      %s94 = sphi 0, %s92
      %s95 = sphi 0, %s94
      %s109 = sphi 0, %s95
      %s113 = sphi 0, %s113
      %s115 = sphi 0, %s113
      %s116 = sphi 0, %s115
      %s130 = sphi 0, %s116
      %s134 = sphi 0, %s134
      %s136 = sphi 0, %s134
      %s137 = sphi 0, %s136
      %s151 = sphi 0, %s137
      %s155 = sphi 0, %s155
      %s157 = sphi 0, %s155
      %s158 = sphi 0, %s157
      %s172 = sphi 0, %s158
      %s178 = sphi 0, %s180
      %s181 = sphi 0, %s178
      %s182 = sphi 0, %s181
      %s198 = sphi 0, %s182
    $region4: #{tpu_custom_call.1} parent=1 // loop_header_branch
      %19 = sbr.rel (%p17) target = $region8
    $region5: #{tpu_custom_call.1} parent=1 // loop_body
      %s21 = ssub.s32 %s16, 1
      %s22 = ssub.s32 %s16, 2
      %s23 = sadd.s32 %s16, 1
      %s24 = ssub.s32 %s16, %s23
      %p25 = scmp.eq.s32.totalorder %s24, 0
      %s27 = sadd.s32 %s26, 1
      %s28 = scalar_select %p25, %s26, %s27
      %p31 = pneg %p25
      %p32 = scmp.eq.s32.totalorder %s16, 1
      %p33 = por %p31, %p32
      %p34 = scmp.ne.s32.totalorder %s26, %s29
      %p35 = scmp.eq.s32.totalorder %s16, 0
      %p36 = por %p34, %p35
      %p37 = scmp.ne.s32.totalorder %s26, %s29
      %p38 = scmp.eq.s32.totalorder %s21, 1
      %p39 = por %p37, %p38
      %p40 = scmp.ne.s32.totalorder %s29, %s30
      %p41 = scmp.eq.s32.totalorder %s21, 0
      %p42 = por %p40, %p41
      %p43 = scmp.ne.s32.totalorder %s29, %s30
      %p44 = scmp.eq.s32.totalorder %s22, 1
      %p45 = por %p43, %p44
      %p47 = scmp.ne.s32.totalorder %s30, %s46
      %p48 = scmp.eq.s32.totalorder %s22, 0
      %p49 = por %p47, %p48
      %s51 = sadd.s32 %s50, 1
      %p54 = scmp.eq.s32.totalorder %s16, 1
      %p55 = scmp.ne.s32.totalorder %s50, %s52
      %p56 = scmp.eq.s32.totalorder %s16, 0
      %p57 = por %p55, %p56
      %p58 = scmp.ne.s32.totalorder %s50, %s52
      %p59 = scmp.eq.s32.totalorder %s21, 1
      %p60 = por %p58, %p59
      %p61 = scmp.ne.s32.totalorder %s52, %s53
      %p62 = scmp.eq.s32.totalorder %s21, 0
      %p63 = por %p61, %p62
      %p64 = scmp.ne.s32.totalorder %s52, %s53
      %p65 = scmp.eq.s32.totalorder %s22, 1
      %p66 = por %p64, %p65
      %p68 = scmp.ne.s32.totalorder %s53, %s67
      %p69 = scmp.eq.s32.totalorder %s22, 0
      %p70 = por %p68, %p69
      %s72 = sadd.s32 %s71, 1
      %p75 = scmp.eq.s32.totalorder %s16, 1
      %p76 = scmp.ne.s32.totalorder %s71, %s73
      %p77 = scmp.eq.s32.totalorder %s16, 0
      %p78 = por %p76, %p77
      %p79 = scmp.ne.s32.totalorder %s71, %s73
      %p80 = scmp.eq.s32.totalorder %s21, 1
      %p81 = por %p79, %p80
      %p82 = scmp.ne.s32.totalorder %s73, %s74
      %p83 = scmp.eq.s32.totalorder %s21, 0
      %p84 = por %p82, %p83
      %p85 = scmp.ne.s32.totalorder %s73, %s74
      %p86 = scmp.eq.s32.totalorder %s22, 1
      %p87 = por %p85, %p86
      %p89 = scmp.ne.s32.totalorder %s74, %s88
      %p90 = scmp.eq.s32.totalorder %s22, 0
      %p91 = por %p89, %p90
      %s93 = sadd.s32 %s92, 1
      %p96 = scmp.eq.s32.totalorder %s16, 1
      %p97 = scmp.ne.s32.totalorder %s92, %s94
      %p98 = scmp.eq.s32.totalorder %s16, 0
      %p99 = por %p97, %p98
      %p100 = scmp.ne.s32.totalorder %s92, %s94
      %p101 = scmp.eq.s32.totalorder %s21, 1
      %p102 = por %p100, %p101
      %p103 = scmp.ne.s32.totalorder %s94, %s95
      %p104 = scmp.eq.s32.totalorder %s21, 0
      %p105 = por %p103, %p104
      %p106 = scmp.ne.s32.totalorder %s94, %s95
      %p107 = scmp.eq.s32.totalorder %s22, 1
      %p108 = por %p106, %p107
      %p110 = scmp.ne.s32.totalorder %s95, %s109
      %p111 = scmp.eq.s32.totalorder %s22, 0
      %p112 = por %p110, %p111
      %s114 = sadd.s32 %s113, 1
      %p117 = scmp.eq.s32.totalorder %s16, 1
      %p118 = scmp.ne.s32.totalorder %s113, %s115
      %p119 = scmp.eq.s32.totalorder %s16, 0
      %p120 = por %p118, %p119
      %p121 = scmp.ne.s32.totalorder %s113, %s115
      %p122 = scmp.eq.s32.totalorder %s21, 1
      %p123 = por %p121, %p122
      %p124 = scmp.ne.s32.totalorder %s115, %s116
      %p125 = scmp.eq.s32.totalorder %s21, 0
      %p126 = por %p124, %p125
      %p127 = scmp.ne.s32.totalorder %s115, %s116
      %p128 = scmp.eq.s32.totalorder %s22, 1
      %p129 = por %p127, %p128
      %p131 = scmp.ne.s32.totalorder %s116, %s130
      %p132 = scmp.eq.s32.totalorder %s22, 0
      %p133 = por %p131, %p132
      %s135 = sadd.s32 %s134, 1
      %p138 = scmp.eq.s32.totalorder %s16, 1
      %p139 = scmp.ne.s32.totalorder %s134, %s136
      %p140 = scmp.eq.s32.totalorder %s16, 0
      %p141 = por %p139, %p140
      %p142 = scmp.ne.s32.totalorder %s134, %s136
      %p143 = scmp.eq.s32.totalorder %s21, 1
      %p144 = por %p142, %p143
      %p145 = scmp.ne.s32.totalorder %s136, %s137
      %p146 = scmp.eq.s32.totalorder %s21, 0
      %p147 = por %p145, %p146
      %p148 = scmp.ne.s32.totalorder %s136, %s137
      %p149 = scmp.eq.s32.totalorder %s22, 1
      %p150 = por %p148, %p149
      %p152 = scmp.ne.s32.totalorder %s137, %s151
      %p153 = scmp.eq.s32.totalorder %s22, 0
      %p154 = por %p152, %p153
      %s156 = sadd.s32 %s155, 1
      %p159 = scmp.eq.s32.totalorder %s16, 1
      %p160 = scmp.ne.s32.totalorder %s155, %s157
      %p161 = scmp.eq.s32.totalorder %s16, 0
      %p162 = por %p160, %p161
      %p163 = scmp.ne.s32.totalorder %s155, %s157
      %p164 = scmp.eq.s32.totalorder %s21, 1
      %p165 = por %p163, %p164
      %p166 = scmp.ne.s32.totalorder %s157, %s158
      %p167 = scmp.eq.s32.totalorder %s21, 0
      %p168 = por %p166, %p167
      %p169 = scmp.ne.s32.totalorder %s157, %s158
      %p170 = scmp.eq.s32.totalorder %s22, 1
      %p171 = por %p169, %p170
      %p173 = scmp.ne.s32.totalorder %s158, %s172
      %p174 = scmp.eq.s32.totalorder %s22, 0
      %p175 = por %p173, %p174
      %s176 = ssub.s32 %s16, %s23
      %p177 = scmp.eq.s32.totalorder %s176, 0
      %s179 = sadd.s32 %s178, 1
      %s180 = scalar_select %p177, %s178, %s179
      %p183 = pneg %p177
      %p184 = scmp.eq.s32.totalorder %s16, 1
      %p185 = por %p183, %p184
      %p186 = scmp.ne.s32.totalorder %s178, %s181
      %p187 = scmp.eq.s32.totalorder %s16, 0
      %p188 = por %p186, %p187
      %p189 = scmp.ne.s32.totalorder %s178, %s181
      %p190 = scmp.eq.s32.totalorder %s21, 1
      %p191 = por %p189, %p190
      %p192 = scmp.ne.s32.totalorder %s181, %s182
      %p193 = scmp.eq.s32.totalorder %s21, 0
      %p194 = por %p192, %p193
      %p195 = scmp.ne.s32.totalorder %s181, %s182
      %p196 = scmp.eq.s32.totalorder %s22, 1
      %p197 = por %p195, %p196
      %p199 = scmp.ne.s32.totalorder %s182, %s198
      %p200 = scmp.eq.s32.totalorder %s22, 0
      %p201 = por %p199, %p200
      %p202 = scmp.le.s32.totalorder 1, %s16
      %p203 = scmp.lt.s32.totalorder %s16, 3
      %p204 = pnand %p202, %p203
      %p205 = pneg %p204
      // Predicated region
      $region9: #{tpu_custom_call.1} parent=5 // pred_check
        _
      $region10: #{tpu_custom_call.1} parent=5 // pred_check_branch
        %207 = sbr.rel (%p204) target = $region12
      $region11: #{tpu_custom_call.1} parent=5 // pred_region
        %s208 = ssub.s32 %s16, 1
        // Predicated region
        $region13: #{tpu_custom_call.1} parent=11 // pred_check
          %p209 = pneg %p63
        $region14: #{tpu_custom_call.1} parent=11 // pred_check_branch
          %211 = sbr.rel (%p209) target = $region16
        $region15: #{tpu_custom_call.1} parent=11 // pred_region
          _
        $region16: #{tpu_custom_call.1} parent=11 // pred_fallthru
          _
        // Predicated region
        $region17: #{tpu_custom_call.1} parent=11 // pred_check
          %p212 = pneg %p84
        $region18: #{tpu_custom_call.1} parent=11 // pred_check_branch
          %214 = sbr.rel (%p212) target = $region20
        $region19: #{tpu_custom_call.1} parent=11 // pred_region
          _
        $region20: #{tpu_custom_call.1} parent=11 // pred_fallthru
          _
        // Predicated region
        $region21: #{tpu_custom_call.1} parent=11 // pred_check
          %p215 = pneg %p105
        $region22: #{tpu_custom_call.1} parent=11 // pred_check_branch
          %217 = sbr.rel (%p215) target = $region24
        $region23: #{tpu_custom_call.1} parent=11 // pred_region
          _
        $region24: #{tpu_custom_call.1} parent=11 // pred_fallthru
          _
        // Predicated region
        $region25: #{tpu_custom_call.1} parent=11 // pred_check
          %p218 = pneg %p126
        $region26: #{tpu_custom_call.1} parent=11 // pred_check_branch
          %220 = sbr.rel (%p218) target = $region28
        $region27: #{tpu_custom_call.1} parent=11 // pred_region
          _
        $region28: #{tpu_custom_call.1} parent=11 // pred_fallthru
          _
        // Predicated region
        $region29: #{tpu_custom_call.1} parent=11 // pred_check
          %p221 = pneg %p147
        $region30: #{tpu_custom_call.1} parent=11 // pred_check_branch
          %223 = sbr.rel (%p221) target = $region32
        $region31: #{tpu_custom_call.1} parent=11 // pred_region
          _
        $region32: #{tpu_custom_call.1} parent=11 // pred_fallthru
          _
        // Predicated region
        $region33: #{tpu_custom_call.1} parent=11 // pred_check
          %p224 = pneg %p168
        $region34: #{tpu_custom_call.1} parent=11 // pred_check_branch
          %226 = sbr.rel (%p224) target = $region36
        $region35: #{tpu_custom_call.1} parent=11 // pred_region
          _
        $region36: #{tpu_custom_call.1} parent=11 // pred_fallthru
          _
      $region12: #{tpu_custom_call.1} parent=5 // pred_fallthru
        _
      %p227 = scmp.lt.s32.totalorder %s16, 2
      // Predicated region
      $region37: #{tpu_custom_call.1} parent=5 // pred_check
        %p228 = pneg %p227
      $region38: #{tpu_custom_call.1} parent=5 // pred_check_branch
        %230 = sbr.rel (%p228) target = $region40
      $region39: #{tpu_custom_call.1} parent=5 // pred_region
        // Predicated region
        $region41: #{tpu_custom_call.1} parent=39 // pred_check
          %p231 = pneg %p36
        $region42: #{tpu_custom_call.1} parent=39 // pred_check_branch
          %233 = sbr.rel (%p231) target = $region44
        $region43: #{tpu_custom_call.1} parent=39 // pred_region
          %p234 = scmp.lt.s32.totalorder %s16, 1
          %s235 = scalar_select %p234, %s16, 1
          %s236 = smul.addr %s235, 32
          %s237 = smul.addr %s236, 4
          %s238 = scalar_lea.vmem %s0, %s237
        $region44: #{tpu_custom_call.1} parent=39 // pred_fallthru
          _
      $region40: #{tpu_custom_call.1} parent=5 // pred_fallthru
        _
      %p239 = scmp.le.s32.totalorder 1, %s16
      %p240 = scmp.lt.s32.totalorder %s16, 3
      %p241 = pnand %p239, %p240
      %p242 = pneg %p241
      // Predicated region
      $region45: #{tpu_custom_call.1} parent=5 // pred_check
        _
      $region46: #{tpu_custom_call.1} parent=5 // pred_check_branch
        %244 = sbr.rel (%p241) target = $region48
      $region47: #{tpu_custom_call.1} parent=5 // pred_region
        %s245 = ssub.s32 %s16, 1
        %p246 = scmp.lt.s32.totalorder %s21, 1
        %s247 = scalar_select %p246, %s21, 1
        %s248 = smul.addr %s247, 32
        %s249 = smul.addr %s248, 4
        %s250 = scalar_lea.vmem %s0, %s249
        %p251 = pneg %p42
        %p252 = pneg %p39
        %p253 = pneg %p63
        %p254 = pneg %p60
        %p255 = pneg %p84
        %p256 = pneg %p81
        %p257 = pneg %p105
        %p258 = pneg %p102
        %p259 = pneg %p126
        %p260 = pneg %p123
        %p261 = pneg %p147
        %p262 = pneg %p144
        %p263 = pneg %p168
        %p264 = pneg %p165
        %p265 = pneg %p194
        %p266 = pneg %p191
        %s267 = sand.u32 %s181, 1
        %s268 = scalar_lea.sflag [#allocation4], %s267
        %s269 = sand.u32 %s181, 1
        %s270 = scalar_lea.vmem [#allocation3], %s269
        %p271 = scmp.lt.s32.totalorder %s21, 1
        %s272 = scalar_select %p271, %s21, 1
        %s273 = smul.addr %s272, 32
        %s274 = smul.addr %s273, 4
        %s275 = scalar_lea.vmem %s0, %s274
        %v277 = vld [vmem:[%s275] sm:$0xf]
        %v278 = vld [vmem:[%s275 + $0x4] sm:$0xf]
        %v279 = vld [vmem:[%s275 + $0x8] sm:$0xf]
        %v280 = vld [vmem:[%s275 + $0xc] sm:$0xf]
        %v281 = vld [vmem:[%s275 + $0x10] sm:$0xf]
        %v282 = vld [vmem:[%s275 + $0x14] sm:$0xf]
        %v283 = vld [vmem:[%s275 + $0x18] sm:$0xf]
        %v284 = vld [vmem:[%s275 + $0x1c] sm:$0xf]
        %v285 = vld [vmem:[%s275 + $0x20] sm:$0xf]
        %v286 = vld [vmem:[%s275 + $0x24] sm:$0xf]
        %v287 = vld [vmem:[%s275 + $0x28] sm:$0xf]
        %v288 = vld [vmem:[%s275 + $0x2c] sm:$0xf]
        %v289 = vld [vmem:[%s275 + $0x30] sm:$0xf]
        %v290 = vld [vmem:[%s275 + $0x34] sm:$0xf]
        %v291 = vld [vmem:[%s275 + $0x38] sm:$0xf]
        %v292 = vld [vmem:[%s275 + $0x3c] sm:$0xf]
        %v293 = vld [vmem:[%s275 + $0x40] sm:$0xf]
        %v294 = vld [vmem:[%s275 + $0x44] sm:$0xf]
        %v295 = vld [vmem:[%s275 + $0x48] sm:$0xf]
        %v296 = vld [vmem:[%s275 + $0x4c] sm:$0xf]
        %v297 = vld [vmem:[%s275 + $0x50] sm:$0xf]
        %v298 = vld [vmem:[%s275 + $0x54] sm:$0xf]
        %v299 = vld [vmem:[%s275 + $0x58] sm:$0xf]
        %v300 = vld [vmem:[%s275 + $0x5c] sm:$0xf]
        %v301 = vld [vmem:[%s275 + $0x60] sm:$0xf]
        %v302 = vld [vmem:[%s275 + $0x64] sm:$0xf]
        %v303 = vld [vmem:[%s275 + $0x68] sm:$0xf]
        %v304 = vld [vmem:[%s275 + $0x6c] sm:$0xf]
        %v305 = vld [vmem:[%s275 + $0x70] sm:$0xf]
        %v306 = vld [vmem:[%s275 + $0x74] sm:$0xf]
        %v307 = vld [vmem:[%s275 + $0x78] sm:$0xf]
        %v308 = vld [vmem:[%s275 + $0x7c] sm:$0xf]
        %v309 = vld [vmem:[%s1] sm:$0xf]
        %v310 = vld [vmem:[%s1 + $0x4] sm:$0xf]
        %v311 = vld [vmem:[%s1 + $0x8] sm:$0xf]
        %v312 = vld [vmem:[%s1 + $0xc] sm:$0xf]
        %v313 = vld [vmem:[%s1 + $0x10] sm:$0x3]
        %v314 = vld [vmem:[%s2] sm:$0x1]
        %v316 = vlaneseq
        %v317 = vshrl.u32 %v316, 7
        %v318 = vsub.s32 0, %v317
        %v319 = vrot.slane %v314, %v318
        %v353 = vunpack.c.l.b16 %v277
        %v354 = vunpack.c.l.b16 %v278
        %v355 = vunpack.c.l.b16 %v279
        %v356 = vunpack.c.l.b16 %v280
        %v357 = vunpack.c.l.b16 %v281
        %v358 = vunpack.c.l.b16 %v282
        %v359 = vunpack.c.l.b16 %v283
        %v360 = vunpack.c.l.b16 %v284
        %v361 = vunpack.c.l.b16 %v285
        %v362 = vunpack.c.l.b16 %v286
        %v363 = vunpack.c.l.b16 %v287
        %v364 = vunpack.c.l.b16 %v288
        %v365 = vunpack.c.l.b16 %v289
        %v366 = vunpack.c.l.b16 %v290
        %v367 = vunpack.c.l.b16 %v291
        %v368 = vunpack.c.l.b16 %v292
        %v369 = vunpack.c.l.b16 %v293
        %v370 = vunpack.c.l.b16 %v294
        %v371 = vunpack.c.l.b16 %v295
        %v372 = vunpack.c.l.b16 %v296
        %v373 = vunpack.c.l.b16 %v297
        %v374 = vunpack.c.l.b16 %v298
        %v375 = vunpack.c.l.b16 %v299
        %v376 = vunpack.c.l.b16 %v300
        %v377 = vunpack.c.l.b16 %v301
        %v378 = vunpack.c.l.b16 %v302
        %v379 = vunpack.c.l.b16 %v303
        %v380 = vunpack.c.l.b16 %v304
        %v381 = vunpack.c.l.b16 %v305
        %v382 = vunpack.c.l.b16 %v306
        %v383 = vunpack.c.l.b16 %v307
        %v384 = vunpack.c.l.b16 %v308
        %v385 = vpack.c.b16 %v354, %v353
        %v386 = vpack.c.b16 %v356, %v355
        %v387 = vpack.c.b16 %v358, %v357
        %v388 = vpack.c.b16 %v360, %v359
        %v389 = vpack.c.b16 %v362, %v361
        %v390 = vpack.c.b16 %v364, %v363
        %v391 = vpack.c.b16 %v366, %v365
        %v392 = vpack.c.b16 %v368, %v367
        %v393 = vpack.c.b16 %v370, %v369
        %v394 = vpack.c.b16 %v372, %v371
        %v395 = vpack.c.b16 %v374, %v373
        %v396 = vpack.c.b16 %v376, %v375
        %v397 = vpack.c.b16 %v378, %v377
        %v398 = vpack.c.b16 %v380, %v379
        %v399 = vpack.c.b16 %v382, %v381
        %v400 = vpack.c.b16 %v384, %v383
        %v406 = vunpack.c.l.b16 %v309
        %v407 = vunpack.c.l.b16 %v310
        %v408 = vunpack.c.l.b16 %v311
        %v409 = vunpack.c.l.b16 %v312
        %v410 = vunpack.c.l.b16 %v313
        %v411 = vpack.c.b16 %v407, %v406
        %v412 = vpack.c.b16 %v409, %v408
        %v413 = vpack.c.b16 %v410, %v410
        %vm416 = vcmask 293888
        %v418 = vsel %vm416, %v385, 0
        %v421 = vsel %vm416, %v386, 0
        %v424 = vsel %vm416, %v387, 0
        %v427 = vsel %vm416, %v388, 0
        %v430 = vsel %vm416, %v389, 0
        %v433 = vsel %vm416, %v390, 0
        %v436 = vsel %vm416, %v391, 0
        %v439 = vsel %vm416, %v392, 0
        %v442 = vsel %vm416, %v393, 0
        %v445 = vsel %vm416, %v394, 0
        %v448 = vsel %vm416, %v395, 0
        %v451 = vsel %vm416, %v396, 0
        %v454 = vsel %vm416, %v397, 0
        %v457 = vsel %vm416, %v398, 0
        %v460 = vsel %vm416, %v399, 0
        %v463 = vsel %vm416, %v400, 0
        %vm465 = vcmask 1041408
        %v467 = vsel %vm465, %v413, 0
        %469 = vmatprep.subr.bf16.mxu0 0
        %470 = vmatpush1.bf16.msra.mxu0 %v411
        %471 = vmatprep.subr.bf16.mxu0 0
        %472 = vmatpush1.bf16.msra.mxu0 %v412
        %473 = vmatprep.subr.bf16.mxu0 0
        %474 = vmatpush1.bf16.msra.mxu0 %v467
        %475 = vmatprep.subr.bf16.mxu0 0
        %476 = vmatpush1.bf16.msra.mxu0 0
        %477 = vmatprep.subr.bf16.mxu0 0
        %478 = vmatpush1.bf16.msra.mxu0 0
        %479 = vmatprep.subr.bf16.mxu0 0
        %480 = vmatpush1.bf16.msra.mxu0 0
        %481 = vmatprep.subr.bf16.mxu0 0
        %482 = vmatpush1.bf16.msra.mxu0 0
        %483 = vmatprep.subr.bf16.mxu0 0
        %484 = vmatpush1.bf16.msra.mxu0 0
        %485 = vmatprep.subr.bf16.mxu0 0
        %486 = vmatpush1.bf16.msra.mxu0 0
        %487 = vmatprep.subr.bf16.mxu0 0
        %488 = vmatpush1.bf16.msra.mxu0 0
        %489 = vmatprep.subr.bf16.mxu0 0
        %490 = vmatpush1.bf16.msra.mxu0 0
        %491 = vmatprep.subr.bf16.mxu0 0
        %492 = vmatpush1.bf16.msra.mxu0 0
        %493 = vmatprep.subr.bf16.mxu0 0
        %494 = vmatpush1.bf16.msra.mxu0 0
        %495 = vmatprep.subr.bf16.mxu0 0
        %496 = vmatpush1.bf16.msra.mxu0 0
        %497 = vmatprep.subr.bf16.mxu0 0
        %498 = vmatpush1.bf16.msra.mxu0 0
        %499 = vmatprep.subr.bf16.mxu0 0
        %500 = vmatpush1.bf16.msra.mxu0 0
        %501 = vmatprep.mubr.bf16.mxu0 0
        %502 = vmatmul.mubr.bf16.gmra.mrb[0].mxu0 %v418
        %v503 = vpop.f32.mrb[0].mxu0
        %v504 = vadd.f32 %v319, %v503
        %v505 = vpop.f32.mrb[0].mxu0
        %v506 = vpop.f32.mrb[0].mxu0
        %v507 = vadd.f32 %v319, %v506
        %v508 = vpop.f32.mrb[0].mxu0
        %509 = vmatprep.mubr.bf16.mxu0 0
        %510 = vmatmul.mubr.bf16.gmra.mrb[0].mxu0 %v421
        %v511 = vpop.f32.mrb[0].mxu0
        %v512 = vadd.f32 %v319, %v511
        %v513 = vpop.f32.mrb[0].mxu0
        %v514 = vpop.f32.mrb[0].mxu0
        %v515 = vadd.f32 %v319, %v514
        %v516 = vpop.f32.mrb[0].mxu0
        %517 = vmatprep.mubr.bf16.mxu0 0
        %518 = vmatmul.mubr.bf16.gmra.mrb[0].mxu0 %v424
        %v519 = vpop.f32.mrb[0].mxu0
        %v520 = vadd.f32 %v319, %v519
        %v521 = vpop.f32.mrb[0].mxu0
        %v522 = vpop.f32.mrb[0].mxu0
        %v523 = vadd.f32 %v319, %v522
        %v524 = vpop.f32.mrb[0].mxu0
        %525 = vmatprep.mubr.bf16.mxu0 0
        %526 = vmatmul.mubr.bf16.gmra.mrb[0].mxu0 %v427
        %v527 = vpop.f32.mrb[0].mxu0
        %v528 = vadd.f32 %v319, %v527
        %v529 = vpop.f32.mrb[0].mxu0
        %v530 = vpop.f32.mrb[0].mxu0
        %v531 = vadd.f32 %v319, %v530
        %v532 = vpop.f32.mrb[0].mxu0
        %533 = vmatprep.mubr.bf16.mxu0 0
        %534 = vmatmul.mubr.bf16.gmra.mrb[0].mxu0 %v430
        %v535 = vpop.f32.mrb[0].mxu0
        %v536 = vadd.f32 %v319, %v535
        %v537 = vpop.f32.mrb[0].mxu0
        %v538 = vpop.f32.mrb[0].mxu0
        %v539 = vadd.f32 %v319, %v538
        %v540 = vpop.f32.mrb[0].mxu0
        %541 = vmatprep.mubr.bf16.mxu0 0
        %542 = vmatmul.mubr.bf16.gmra.mrb[0].mxu0 %v433
        %v543 = vpop.f32.mrb[0].mxu0
        %v544 = vadd.f32 %v319, %v543
        %v545 = vpop.f32.mrb[0].mxu0
        %v546 = vpop.f32.mrb[0].mxu0
        %v547 = vadd.f32 %v319, %v546
        %v548 = vpop.f32.mrb[0].mxu0
        %549 = vmatprep.mubr.bf16.mxu0 0
        %550 = vmatmul.mubr.bf16.gmra.mrb[0].mxu0 %v436
        %v551 = vpop.f32.mrb[0].mxu0
        %v552 = vadd.f32 %v319, %v551
        %v553 = vpop.f32.mrb[0].mxu0
        %v554 = vpop.f32.mrb[0].mxu0
        %v555 = vadd.f32 %v319, %v554
        %v556 = vpop.f32.mrb[0].mxu0
        %557 = vmatprep.mubr.bf16.mxu0 0
        %558 = vmatmul.mubr.bf16.gmra.mrb[0].mxu0 %v439
        %v559 = vpop.f32.mrb[0].mxu0
        %v560 = vadd.f32 %v319, %v559
        %v561 = vpop.f32.mrb[0].mxu0
        %v562 = vpop.f32.mrb[0].mxu0
        %v563 = vadd.f32 %v319, %v562
        %v564 = vpop.f32.mrb[0].mxu0
        %565 = vmatprep.mubr.bf16.mxu0 0
        %566 = vmatmul.mubr.bf16.gmra.mrb[0].mxu0 %v442
        %v567 = vpop.f32.mrb[0].mxu0
        %v568 = vadd.f32 %v319, %v567
        %v569 = vpop.f32.mrb[0].mxu0
        %v570 = vpop.f32.mrb[0].mxu0
        %v571 = vadd.f32 %v319, %v570
        %v572 = vpop.f32.mrb[0].mxu0
        %573 = vmatprep.mubr.bf16.mxu0 0
        %574 = vmatmul.mubr.bf16.gmra.mrb[0].mxu0 %v445
        %v575 = vpop.f32.mrb[0].mxu0
        %v576 = vadd.f32 %v319, %v575
        %v577 = vpop.f32.mrb[0].mxu0
        %v578 = vpop.f32.mrb[0].mxu0
        %v579 = vadd.f32 %v319, %v578
        %v580 = vpop.f32.mrb[0].mxu0
        %581 = vmatprep.mubr.bf16.mxu0 0
        %582 = vmatmul.mubr.bf16.gmra.mrb[0].mxu0 %v448
        %v583 = vpop.f32.mrb[0].mxu0
        %v584 = vadd.f32 %v319, %v583
        %v585 = vpop.f32.mrb[0].mxu0
        %v586 = vpop.f32.mrb[0].mxu0
        %v587 = vadd.f32 %v319, %v586
        %v588 = vpop.f32.mrb[0].mxu0
        %589 = vmatprep.mubr.bf16.mxu0 0
        %590 = vmatmul.mubr.bf16.gmra.mrb[0].mxu0 %v451
        %v591 = vpop.f32.mrb[0].mxu0
        %v592 = vadd.f32 %v319, %v591
        %v593 = vpop.f32.mrb[0].mxu0
        %v594 = vpop.f32.mrb[0].mxu0
        %v595 = vadd.f32 %v319, %v594
        %v596 = vpop.f32.mrb[0].mxu0
        %597 = vmatprep.mubr.bf16.mxu0 0
        %598 = vmatmul.mubr.bf16.gmra.mrb[0].mxu0 %v454
        %v599 = vpop.f32.mrb[0].mxu0
        %v600 = vadd.f32 %v319, %v599
        %v601 = vpop.f32.mrb[0].mxu0
        %v602 = vpop.f32.mrb[0].mxu0
        %v603 = vadd.f32 %v319, %v602
        %v604 = vpop.f32.mrb[0].mxu0
        %605 = vmatprep.mubr.bf16.mxu0 0
        %606 = vmatmul.mubr.bf16.gmra.mrb[0].mxu0 %v457
        %v607 = vpop.f32.mrb[0].mxu0
        %v608 = vadd.f32 %v319, %v607
        %v609 = vpop.f32.mrb[0].mxu0
        %v610 = vpop.f32.mrb[0].mxu0
        %v611 = vadd.f32 %v319, %v610
        %v612 = vpop.f32.mrb[0].mxu0
        %613 = vmatprep.mubr.bf16.mxu0 0
        %614 = vmatmul.mubr.bf16.gmra.mrb[0].mxu0 %v460
        %v615 = vpop.f32.mrb[0].mxu0
        %v616 = vadd.f32 %v319, %v615
        %v617 = vpop.f32.mrb[0].mxu0
        %v618 = vpop.f32.mrb[0].mxu0
        %v619 = vadd.f32 %v319, %v618
        %v620 = vpop.f32.mrb[0].mxu0
        %621 = vmatprep.mubr.bf16.mxu0 0
        %622 = vmatmul.mubr.bf16.gmra.mrb[0].mxu0 %v463
        %v623 = vpop.f32.mrb[0].mxu0
        %v624 = vadd.f32 %v319, %v623
        %v625 = vpop.f32.mrb[0].mxu0
        %v626 = vpop.f32.mrb[0].mxu0
        %v627 = vadd.f32 %v319, %v626
        %v628 = vpop.f32.mrb[0].mxu0
        %629 = vdwg.mxu0
        %v630 = vmax.f32 %v504, 0.0
        %v631 = vmax.f32 %v507, 0.0
        %v632 = vmax.f32 %v512, 0.0
        %v633 = vmax.f32 %v515, 0.0
        %v634 = vmax.f32 %v520, 0.0
        %v635 = vmax.f32 %v523, 0.0
        %v636 = vmax.f32 %v528, 0.0
        %v637 = vmax.f32 %v531, 0.0
        %v638 = vmax.f32 %v536, 0.0
        %v639 = vmax.f32 %v539, 0.0
        %v640 = vmax.f32 %v544, 0.0
        %v641 = vmax.f32 %v547, 0.0
        %v642 = vmax.f32 %v552, 0.0
        %v643 = vmax.f32 %v555, 0.0
        %v644 = vmax.f32 %v560, 0.0
        %v645 = vmax.f32 %v563, 0.0
        %v646 = vmax.f32 %v568, 0.0
        %v647 = vmax.f32 %v571, 0.0
        %v648 = vmax.f32 %v576, 0.0
        %v649 = vmax.f32 %v579, 0.0
        %v650 = vmax.f32 %v584, 0.0
        %v651 = vmax.f32 %v587, 0.0
        %v652 = vmax.f32 %v592, 0.0
        %v653 = vmax.f32 %v595, 0.0
        %v654 = vmax.f32 %v600, 0.0
        %v655 = vmax.f32 %v603, 0.0
        %v656 = vmax.f32 %v608, 0.0
        %v657 = vmax.f32 %v611, 0.0
        %v658 = vmax.f32 %v616, 0.0
        %v659 = vmax.f32 %v619, 0.0
        %v660 = vmax.f32 %v624, 0.0
        %v661 = vmax.f32 %v627, 0.0
        %vm662 = vcmask 257024
        %663 = vst.msk [vmem:[#allocation2] sm:$0xf] %vm662, 0
        %664 = vst.msk [vmem:[#allocation2 + $0x4] sm:$0xf] %vm662, 0
        %vm665 = vcmask 253952
        %666 = vst.msk [vmem:[#allocation2 + $0x8] sm:$0x1] %vm665, 0
        %s667 = scalar_lea.vmem [#allocation2], 204
        %668 = vst.msk [vmem:[%s667] sm:$0xf] %vm662, 0
        %669 = vst.msk [vmem:[%s667 + $0x4] sm:$0xf] %vm662, 0
        %670 = vst.msk [vmem:[%s667 + $0x8] sm:$0x1] %vm665, 0
        %vm671 = vcmask 253952
        %vm672 = vsmask.f32 256
        %vm673 = vmand %vm671, %vm672
        %v674 = vld [vmem:[#allocation2] sm:$0x1]
        %v675 = vsel %vm673, 0, %v674
        %676 = vst [vmem:[#allocation2] sm:$0x1] %v675
        %v677 = vld [vmem:[#allocation2 + $0xc] sm:$0x1]
        %v678 = vsel %vm673, 0, %v677
        %679 = vst [vmem:[#allocation2 + $0xc] sm:$0x1] %v678
        %v680 = vld [vmem:[#allocation2 + $0x18] sm:$0x1]
        %v681 = vsel %vm673, 0, %v680
        %682 = vst [vmem:[#allocation2 + $0x18] sm:$0x1] %v681
        %v683 = vld [vmem:[#allocation2 + $0x24] sm:$0x1]
        %v684 = vsel %vm673, 0, %v683
        %685 = vst [vmem:[#allocation2 + $0x24] sm:$0x1] %v684
        %v686 = vld [vmem:[#allocation2 + $0x30] sm:$0x1]
        %v687 = vsel %vm673, 0, %v686
        %688 = vst [vmem:[#allocation2 + $0x30] sm:$0x1] %v687
        %v689 = vld [vmem:[#allocation2 + $0x3c] sm:$0x1]
        %v690 = vsel %vm673, 0, %v689
        %691 = vst [vmem:[#allocation2 + $0x3c] sm:$0x1] %v690
        %v692 = vld [vmem:[#allocation2 + $0x48] sm:$0x1]
        %v693 = vsel %vm673, 0, %v692
        %694 = vst [vmem:[#allocation2 + $0x48] sm:$0x1] %v693
        %v695 = vld [vmem:[#allocation2 + $0x54] sm:$0x1]
        %v696 = vsel %vm673, 0, %v695
        %697 = vst [vmem:[#allocation2 + $0x54] sm:$0x1] %v696
        %v698 = vld [vmem:[#allocation2 + $0x60] sm:$0x1]
        %v699 = vsel %vm673, 0, %v698
        %700 = vst [vmem:[#allocation2 + $0x60] sm:$0x1] %v699
        %v701 = vld [vmem:[#allocation2 + $0x6c] sm:$0x1]
        %v702 = vsel %vm673, 0, %v701
        %703 = vst [vmem:[#allocation2 + $0x6c] sm:$0x1] %v702
        %v704 = vld [vmem:[#allocation2 + $0x78] sm:$0x1]
        %v705 = vsel %vm673, 0, %v704
        %706 = vst [vmem:[#allocation2 + $0x78] sm:$0x1] %v705
        %v707 = vld [vmem:[#allocation2 + $0x84] sm:$0x1]
        %v708 = vsel %vm673, 0, %v707
        %709 = vst [vmem:[#allocation2 + $0x84] sm:$0x1] %v708
        %v710 = vld [vmem:[#allocation2 + $0x90] sm:$0x1]
        %v711 = vsel %vm673, 0, %v710
        %712 = vst [vmem:[#allocation2 + $0x90] sm:$0x1] %v711
        %v713 = vld [vmem:[#allocation2 + $0x9c] sm:$0x1]
        %v714 = vsel %vm673, 0, %v713
        %715 = vst [vmem:[#allocation2 + $0x9c] sm:$0x1] %v714
        %v716 = vld [vmem:[#allocation2 + $0xa8] sm:$0x1]
        %v717 = vsel %vm673, 0, %v716
        %718 = vst [vmem:[#allocation2 + $0xa8] sm:$0x1] %v717
        %v719 = vld [vmem:[#allocation2 + $0xb4] sm:$0x1]
        %v720 = vsel %vm673, 0, %v719
        %721 = vst [vmem:[#allocation2 + $0xb4] sm:$0x1] %v720
        %v722 = vld [vmem:[#allocation2 + $0xc0] sm:$0x1]
        %v723 = vsel %vm673, 0, %v722
        %724 = vst [vmem:[#allocation2 + $0xc0] sm:$0x1] %v723
        %v725 = vld [vmem:[#allocation2 + $0xcc] sm:$0x1]
        %v726 = vsel %vm673, 0, %v725
        %727 = vst [vmem:[#allocation2 + $0xcc] sm:$0x1] %v726
        %vm728 = vsmask.f32 7938
        %vm729 = vmand %vm671, %vm728
        %v730 = vld [vmem:[#allocation2 + $0x8] sm:$0x1]
        %v731 = vsel %vm729, 0, %v730
        %732 = vst [vmem:[#allocation2 + $0x8] sm:$0x1] %v731
        %v733 = vld [vmem:[#allocation2 + $0x14] sm:$0x1]
        %v734 = vsel %vm729, 0, %v733
        %735 = vst [vmem:[#allocation2 + $0x14] sm:$0x1] %v734
        %v736 = vld [vmem:[#allocation2 + $0x20] sm:$0x1]
        %v737 = vsel %vm729, 0, %v736
        %738 = vst [vmem:[#allocation2 + $0x20] sm:$0x1] %v737
        %v739 = vld [vmem:[#allocation2 + $0x2c] sm:$0x1]
        %v740 = vsel %vm729, 0, %v739
        %741 = vst [vmem:[#allocation2 + $0x2c] sm:$0x1] %v740
        %v742 = vld [vmem:[#allocation2 + $0x38] sm:$0x1]
        %v743 = vsel %vm729, 0, %v742
        %744 = vst [vmem:[#allocation2 + $0x38] sm:$0x1] %v743
        %v745 = vld [vmem:[#allocation2 + $0x44] sm:$0x1]
        %v746 = vsel %vm729, 0, %v745
        %747 = vst [vmem:[#allocation2 + $0x44] sm:$0x1] %v746
        %v748 = vld [vmem:[#allocation2 + $0x50] sm:$0x1]
        %v749 = vsel %vm729, 0, %v748
        %750 = vst [vmem:[#allocation2 + $0x50] sm:$0x1] %v749
        %v751 = vld [vmem:[#allocation2 + $0x5c] sm:$0x1]
        %v752 = vsel %vm729, 0, %v751
        %753 = vst [vmem:[#allocation2 + $0x5c] sm:$0x1] %v752
        %v754 = vld [vmem:[#allocation2 + $0x68] sm:$0x1]
        %v755 = vsel %vm729, 0, %v754
        %756 = vst [vmem:[#allocation2 + $0x68] sm:$0x1] %v755
        %v757 = vld [vmem:[#allocation2 + $0x74] sm:$0x1]
        %v758 = vsel %vm729, 0, %v757
        %759 = vst [vmem:[#allocation2 + $0x74] sm:$0x1] %v758
        %v760 = vld [vmem:[#allocation2 + $0x80] sm:$0x1]
        %v761 = vsel %vm729, 0, %v760
        %762 = vst [vmem:[#allocation2 + $0x80] sm:$0x1] %v761
        %v763 = vld [vmem:[#allocation2 + $0x8c] sm:$0x1]
        %v764 = vsel %vm729, 0, %v763
        %765 = vst [vmem:[#allocation2 + $0x8c] sm:$0x1] %v764
        %v766 = vld [vmem:[#allocation2 + $0x98] sm:$0x1]
        %v767 = vsel %vm729, 0, %v766
        %768 = vst [vmem:[#allocation2 + $0x98] sm:$0x1] %v767
        %v769 = vld [vmem:[#allocation2 + $0xa4] sm:$0x1]
        %v770 = vsel %vm729, 0, %v769
        %771 = vst [vmem:[#allocation2 + $0xa4] sm:$0x1] %v770
        %v772 = vld [vmem:[#allocation2 + $0xb0] sm:$0x1]
        %v773 = vsel %vm729, 0, %v772
        %774 = vst [vmem:[#allocation2 + $0xb0] sm:$0x1] %v773
        %v775 = vld [vmem:[#allocation2 + $0xbc] sm:$0x1]
        %v776 = vsel %vm729, 0, %v775
        %777 = vst [vmem:[#allocation2 + $0xbc] sm:$0x1] %v776
        %v778 = vld [vmem:[#allocation2 + $0xc8] sm:$0x1]
        %v779 = vsel %vm729, 0, %v778
        %780 = vst [vmem:[#allocation2 + $0xc8] sm:$0x1] %v779
        %v781 = vld [vmem:[#allocation2 + $0xd4] sm:$0x1]
        %v782 = vsel %vm729, 0, %v781
        %783 = vst [vmem:[#allocation2 + $0xd4] sm:$0x1] %v782
        %v784 = vpack.c.bf16 %v631, %v630
        %v785 = vpack.c.bf16 %v633, %v632
        %v786 = vpack.c.bf16 %v635, %v634
        %v787 = vpack.c.bf16 %v637, %v636
        %v788 = vpack.c.bf16 %v639, %v638
        %v789 = vpack.c.bf16 %v641, %v640
        %v790 = vpack.c.bf16 %v643, %v642
        %v791 = vpack.c.bf16 %v645, %v644
        %v792 = vpack.c.bf16 %v647, %v646
        %v793 = vpack.c.bf16 %v649, %v648
        %v794 = vpack.c.bf16 %v651, %v650
        %v795 = vpack.c.bf16 %v653, %v652
        %v796 = vpack.c.bf16 %v655, %v654
        %v797 = vpack.c.bf16 %v657, %v656
        %v798 = vpack.c.bf16 %v659, %v658
        %v799 = vpack.c.bf16 %v661, %v660
        %v816 = vunpack.c.l.b16 %v784
        %v817 = vunpack.c.h.b16 %v784
        %v818 = vunpack.c.l.b16 %v785
        %v819 = vunpack.c.h.b16 %v785
        %v820 = vunpack.c.l.b16 %v786
        %v821 = vunpack.c.h.b16 %v786
        %v822 = vunpack.c.l.b16 %v787
        %v823 = vunpack.c.h.b16 %v787
        %v824 = vunpack.c.l.b16 %v788
        %v825 = vunpack.c.h.b16 %v788
        %v826 = vunpack.c.l.b16 %v789
        %v827 = vunpack.c.h.b16 %v789
        %v828 = vunpack.c.l.b16 %v790
        %v829 = vunpack.c.h.b16 %v790
        %v830 = vunpack.c.l.b16 %v791
        %v831 = vunpack.c.h.b16 %v791
        %v832 = vunpack.c.l.b16 %v792
        %v833 = vunpack.c.h.b16 %v792
        %v834 = vunpack.c.l.b16 %v793
        %v835 = vunpack.c.h.b16 %v793
        %v836 = vunpack.c.l.b16 %v794
        %v837 = vunpack.c.h.b16 %v794
        %v838 = vunpack.c.l.b16 %v795
        %v839 = vunpack.c.h.b16 %v795
        %v840 = vunpack.c.l.b16 %v796
        %v841 = vunpack.c.h.b16 %v796
        %v842 = vunpack.c.l.b16 %v797
        %v843 = vunpack.c.h.b16 %v797
        %v844 = vunpack.c.l.b16 %v798
        %v845 = vunpack.c.h.b16 %v798
        %v846 = vunpack.c.l.b16 %v799
        %v847 = vunpack.c.h.b16 %v799
        %v848 = vpack.c.b16 %v816, %v816
        %v849 = vpack.c.b16 %v817, %v817
        %v850 = vpack.c.b16 %v818, %v818
        %v851 = vpack.c.b16 %v819, %v819
        %v852 = vpack.c.b16 %v820, %v820
        %v853 = vpack.c.b16 %v821, %v821
        %v854 = vpack.c.b16 %v822, %v822
        %v855 = vpack.c.b16 %v823, %v823
        %v856 = vpack.c.b16 %v824, %v824
        %v857 = vpack.c.b16 %v825, %v825
        %v858 = vpack.c.b16 %v826, %v826
        %v859 = vpack.c.b16 %v827, %v827
        %v860 = vpack.c.b16 %v828, %v828
        %v861 = vpack.c.b16 %v829, %v829
        %v862 = vpack.c.b16 %v830, %v830
        %v863 = vpack.c.b16 %v831, %v831
        %v864 = vpack.c.b16 %v832, %v832
        %v865 = vpack.c.b16 %v833, %v833
        %v866 = vpack.c.b16 %v834, %v834
        %v867 = vpack.c.b16 %v835, %v835
        %v868 = vpack.c.b16 %v836, %v836
        %v869 = vpack.c.b16 %v837, %v837
        %v870 = vpack.c.b16 %v838, %v838
        %v871 = vpack.c.b16 %v839, %v839
        %v872 = vpack.c.b16 %v840, %v840
        %v873 = vpack.c.b16 %v841, %v841
        %v874 = vpack.c.b16 %v842, %v842
        %v875 = vpack.c.b16 %v843, %v843
        %v876 = vpack.c.b16 %v844, %v844
        %v877 = vpack.c.b16 %v845, %v845
        %v878 = vpack.c.b16 %v846, %v846
        %v879 = vpack.c.b16 %v847, %v847
        %vm880 = vsmask.f32 4368
        %vm881 = vmor %vm672, %vm880
        %v883 = vshrl.u32 %v848, 16
        %v885 = vrot.slane %v883, 7
        %v886 = vshll.u32 %v848, 16
        %v888 = vor.u32 %v885, %v886
        %v889 = vrot.slane %v885, 4
        %v891 = vshrl.u32 %v849, 16
        %v893 = vrot.slane %v891, 7
        %v894 = vshll.u32 %v849, 16
        %v896 = vor.u32 %v893, %v894
        %v897 = vsel %vm881, %v889, %v896
        %v898 = vrot.slane %v893, 4
        %v900 = vshrl.u32 %v850, 16
        %v902 = vrot.slane %v900, 7
        %v903 = vshll.u32 %v850, 16
        %v905 = vor.u32 %v902, %v903
        %v906 = vrot.slane %v902, 4
        %v908 = vshrl.u32 %v851, 16
        %v910 = vrot.slane %v908, 7
        %v911 = vshll.u32 %v851, 16
        %v913 = vor.u32 %v910, %v911
        %v914 = vsel %vm881, %v906, %v913
        %v915 = vrot.slane %v910, 4
        %v917 = vshrl.u32 %v852, 16
        %v919 = vrot.slane %v917, 7
        %v920 = vshll.u32 %v852, 16
        %v922 = vor.u32 %v919, %v920
        %v923 = vrot.slane %v919, 4
        %v925 = vshrl.u32 %v853, 16
        %v927 = vrot.slane %v925, 7
        %v928 = vshll.u32 %v853, 16
        %v930 = vor.u32 %v927, %v928
        %v931 = vsel %vm881, %v923, %v930
        %v932 = vrot.slane %v927, 4
        %v934 = vshrl.u32 %v854, 16
        %v936 = vrot.slane %v934, 7
        %v937 = vshll.u32 %v854, 16
        %v939 = vor.u32 %v936, %v937
        %v940 = vrot.slane %v936, 4
        %v942 = vshrl.u32 %v855, 16
        %v944 = vrot.slane %v942, 7
        %v945 = vshll.u32 %v855, 16
        %v947 = vor.u32 %v944, %v945
        %v948 = vsel %vm881, %v940, %v947
        %v949 = vrot.slane %v944, 4
        %v951 = vshrl.u32 %v856, 16
        %v953 = vrot.slane %v951, 7
        %v954 = vshll.u32 %v856, 16
        %v956 = vor.u32 %v953, %v954
        %v957 = vrot.slane %v953, 4
        %v959 = vshrl.u32 %v857, 16
        %v961 = vrot.slane %v959, 7
        %v962 = vshll.u32 %v857, 16
        %v964 = vor.u32 %v961, %v962
        %v965 = vsel %vm881, %v957, %v964
        %v966 = vrot.slane %v961, 4
        %v968 = vshrl.u32 %v858, 16
        %v970 = vrot.slane %v968, 7
        %v971 = vshll.u32 %v858, 16
        %v973 = vor.u32 %v970, %v971
        %v974 = vrot.slane %v970, 4
        %v976 = vshrl.u32 %v859, 16
        %v978 = vrot.slane %v976, 7
        %v979 = vshll.u32 %v859, 16
        %v981 = vor.u32 %v978, %v979
        %v982 = vsel %vm881, %v974, %v981
        %v983 = vrot.slane %v978, 4
        %v985 = vshrl.u32 %v860, 16
        %v987 = vrot.slane %v985, 7
        %v988 = vshll.u32 %v860, 16
        %v990 = vor.u32 %v987, %v988
        %v991 = vrot.slane %v987, 4
        %v993 = vshrl.u32 %v861, 16
        %v995 = vrot.slane %v993, 7
        %v996 = vshll.u32 %v861, 16
        %v998 = vor.u32 %v995, %v996
        %v999 = vsel %vm881, %v991, %v998
        %v1000 = vrot.slane %v995, 4
        %v1002 = vshrl.u32 %v862, 16
        %v1004 = vrot.slane %v1002, 7
        %v1005 = vshll.u32 %v862, 16
        %v1007 = vor.u32 %v1004, %v1005
        %v1008 = vrot.slane %v1004, 4
        %v1010 = vshrl.u32 %v863, 16
        %v1012 = vrot.slane %v1010, 7
        %v1013 = vshll.u32 %v863, 16
        %v1015 = vor.u32 %v1012, %v1013
        %v1016 = vsel %vm881, %v1008, %v1015
        %v1017 = vrot.slane %v1012, 4
        %v1019 = vshrl.u32 %v864, 16
        %v1021 = vrot.slane %v1019, 7
        %v1022 = vshll.u32 %v864, 16
        %v1024 = vor.u32 %v1021, %v1022
        %v1025 = vrot.slane %v1021, 4
        %v1027 = vshrl.u32 %v865, 16
        %v1029 = vrot.slane %v1027, 7
        %v1030 = vshll.u32 %v865, 16
        %v1032 = vor.u32 %v1029, %v1030
        %v1033 = vsel %vm881, %v1025, %v1032
        %v1034 = vrot.slane %v1029, 4
        %v1036 = vshrl.u32 %v866, 16
        %v1038 = vrot.slane %v1036, 7
        %v1039 = vshll.u32 %v866, 16
        %v1041 = vor.u32 %v1038, %v1039
        %v1042 = vrot.slane %v1038, 4
        %v1044 = vshrl.u32 %v867, 16
        %v1046 = vrot.slane %v1044, 7
        %v1047 = vshll.u32 %v867, 16
        %v1049 = vor.u32 %v1046, %v1047
        %v1050 = vsel %vm881, %v1042, %v1049
        %v1051 = vrot.slane %v1046, 4
        %v1053 = vshrl.u32 %v868, 16
        %v1055 = vrot.slane %v1053, 7
        %v1056 = vshll.u32 %v868, 16
        %v1058 = vor.u32 %v1055, %v1056
        %v1059 = vrot.slane %v1055, 4
        %v1061 = vshrl.u32 %v869, 16
        %v1063 = vrot.slane %v1061, 7
        %v1064 = vshll.u32 %v869, 16
        %v1066 = vor.u32 %v1063, %v1064
        %v1067 = vsel %vm881, %v1059, %v1066
        %v1068 = vrot.slane %v1063, 4
        %v1070 = vshrl.u32 %v870, 16
        %v1072 = vrot.slane %v1070, 7
        %v1073 = vshll.u32 %v870, 16
        %v1075 = vor.u32 %v1072, %v1073
        %v1076 = vrot.slane %v1072, 4
        %v1078 = vshrl.u32 %v871, 16
        %v1080 = vrot.slane %v1078, 7
        %v1081 = vshll.u32 %v871, 16
        %v1083 = vor.u32 %v1080, %v1081
        %v1084 = vsel %vm881, %v1076, %v1083
        %v1085 = vrot.slane %v1080, 4
        %v1087 = vshrl.u32 %v872, 16
        %v1089 = vrot.slane %v1087, 7
        %v1090 = vshll.u32 %v872, 16
        %v1092 = vor.u32 %v1089, %v1090
        %v1093 = vrot.slane %v1089, 4
        %v1095 = vshrl.u32 %v873, 16
        %v1097 = vrot.slane %v1095, 7
        %v1098 = vshll.u32 %v873, 16
        %v1100 = vor.u32 %v1097, %v1098
        %v1101 = vsel %vm881, %v1093, %v1100
        %v1102 = vrot.slane %v1097, 4
        %v1104 = vshrl.u32 %v874, 16
        %v1106 = vrot.slane %v1104, 7
        %v1107 = vshll.u32 %v874, 16
        %v1109 = vor.u32 %v1106, %v1107
        %v1110 = vrot.slane %v1106, 4
        %v1112 = vshrl.u32 %v875, 16
        %v1114 = vrot.slane %v1112, 7
        %v1115 = vshll.u32 %v875, 16
        %v1117 = vor.u32 %v1114, %v1115
        %v1118 = vsel %vm881, %v1110, %v1117
        %v1119 = vrot.slane %v1114, 4
        %v1121 = vshrl.u32 %v876, 16
        %v1123 = vrot.slane %v1121, 7
        %v1124 = vshll.u32 %v876, 16
        %v1126 = vor.u32 %v1123, %v1124
        %v1127 = vrot.slane %v1123, 4
        %v1129 = vshrl.u32 %v877, 16
        %v1131 = vrot.slane %v1129, 7
        %v1132 = vshll.u32 %v877, 16
        %v1134 = vor.u32 %v1131, %v1132
        %v1135 = vsel %vm881, %v1127, %v1134
        %v1136 = vrot.slane %v1131, 4
        %v1138 = vshrl.u32 %v878, 16
        %v1140 = vrot.slane %v1138, 7
        %v1141 = vshll.u32 %v878, 16
        %v1143 = vor.u32 %v1140, %v1141
        %v1144 = vrot.slane %v1140, 4
        %v1146 = vshrl.u32 %v879, 16
        %v1148 = vrot.slane %v1146, 7
        %v1149 = vshll.u32 %v879, 16
        %v1151 = vor.u32 %v1148, %v1149
        %v1152 = vsel %vm881, %v1144, %v1151
        %v1153 = vrot.slane %v1148, 4
        %s1202 = scalar_lea.vmem [#allocation2], 12
        %vm1203 = vcmask 257024
        %vm1204 = vmand %vm1203, %vm728
        %v1205 = vld [vmem:[%s1202] sm:$0xf]
        %v1206 = vsel %vm1204, %v888, %v1205
        %1207 = vst [vmem:[%s1202] sm:$0xf] %v1206
        %1208 = vst.msk [vmem:[%s1202 + $0x4] sm:$0xf] %vm662, %v897
        %v1209 = vld [vmem:[%s1202 + $0x8] sm:$0x1]
        %v1210 = vsel %vm673, %v898, %v1209
        %1211 = vst [vmem:[%s1202 + $0x8] sm:$0x1] %v1210
        %v1212 = vld [vmem:[%s1202 + $0xc] sm:$0xf]
        %v1213 = vsel %vm1204, %v905, %v1212
        %1214 = vst [vmem:[%s1202 + $0xc] sm:$0xf] %v1213
        %1215 = vst.msk [vmem:[%s1202 + $0x10] sm:$0xf] %vm662, %v914
        %v1216 = vld [vmem:[%s1202 + $0x14] sm:$0x1]
        %v1217 = vsel %vm673, %v915, %v1216
        %1218 = vst [vmem:[%s1202 + $0x14] sm:$0x1] %v1217
        %v1219 = vld [vmem:[%s1202 + $0x18] sm:$0xf]
        %v1220 = vsel %vm1204, %v922, %v1219
        %1221 = vst [vmem:[%s1202 + $0x18] sm:$0xf] %v1220
        %1222 = vst.msk [vmem:[%s1202 + $0x1c] sm:$0xf] %vm662, %v931
        %v1223 = vld [vmem:[%s1202 + $0x20] sm:$0x1]
        %v1224 = vsel %vm673, %v932, %v1223
        %1225 = vst [vmem:[%s1202 + $0x20] sm:$0x1] %v1224
        %v1226 = vld [vmem:[%s1202 + $0x24] sm:$0xf]
        %v1227 = vsel %vm1204, %v939, %v1226
        %1228 = vst [vmem:[%s1202 + $0x24] sm:$0xf] %v1227
        %1229 = vst.msk [vmem:[%s1202 + $0x28] sm:$0xf] %vm662, %v948
        %v1230 = vld [vmem:[%s1202 + $0x2c] sm:$0x1]
        %v1231 = vsel %vm673, %v949, %v1230
        %1232 = vst [vmem:[%s1202 + $0x2c] sm:$0x1] %v1231
        %v1233 = vld [vmem:[%s1202 + $0x30] sm:$0xf]
        %v1234 = vsel %vm1204, %v956, %v1233
        %1235 = vst [vmem:[%s1202 + $0x30] sm:$0xf] %v1234
        %1236 = vst.msk [vmem:[%s1202 + $0x34] sm:$0xf] %vm662, %v965
        %v1237 = vld [vmem:[%s1202 + $0x38] sm:$0x1]
        %v1238 = vsel %vm673, %v966, %v1237
        %1239 = vst [vmem:[%s1202 + $0x38] sm:$0x1] %v1238
        %v1240 = vld [vmem:[%s1202 + $0x3c] sm:$0xf]
        %v1241 = vsel %vm1204, %v973, %v1240
        %1242 = vst [vmem:[%s1202 + $0x3c] sm:$0xf] %v1241
        %1243 = vst.msk [vmem:[%s1202 + $0x40] sm:$0xf] %vm662, %v982
        %v1244 = vld [vmem:[%s1202 + $0x44] sm:$0x1]
        %v1245 = vsel %vm673, %v983, %v1244
        %1246 = vst [vmem:[%s1202 + $0x44] sm:$0x1] %v1245
        %v1247 = vld [vmem:[%s1202 + $0x48] sm:$0xf]
        %v1248 = vsel %vm1204, %v990, %v1247
        %1249 = vst [vmem:[%s1202 + $0x48] sm:$0xf] %v1248
        %1250 = vst.msk [vmem:[%s1202 + $0x4c] sm:$0xf] %vm662, %v999
        %v1251 = vld [vmem:[%s1202 + $0x50] sm:$0x1]
        %v1252 = vsel %vm673, %v1000, %v1251
        %1253 = vst [vmem:[%s1202 + $0x50] sm:$0x1] %v1252
        %v1254 = vld [vmem:[%s1202 + $0x54] sm:$0xf]
        %v1255 = vsel %vm1204, %v1007, %v1254
        %1256 = vst [vmem:[%s1202 + $0x54] sm:$0xf] %v1255
        %1257 = vst.msk [vmem:[%s1202 + $0x58] sm:$0xf] %vm662, %v1016
        %v1258 = vld [vmem:[%s1202 + $0x5c] sm:$0x1]
        %v1259 = vsel %vm673, %v1017, %v1258
        %1260 = vst [vmem:[%s1202 + $0x5c] sm:$0x1] %v1259
        %v1261 = vld [vmem:[%s1202 + $0x60] sm:$0xf]
        %v1262 = vsel %vm1204, %v1024, %v1261
        %1263 = vst [vmem:[%s1202 + $0x60] sm:$0xf] %v1262
        %1264 = vst.msk [vmem:[%s1202 + $0x64] sm:$0xf] %vm662, %v1033
        %v1265 = vld [vmem:[%s1202 + $0x68] sm:$0x1]
        %v1266 = vsel %vm673, %v1034, %v1265
        %1267 = vst [vmem:[%s1202 + $0x68] sm:$0x1] %v1266
        %v1268 = vld [vmem:[%s1202 + $0x6c] sm:$0xf]
        %v1269 = vsel %vm1204, %v1041, %v1268
        %1270 = vst [vmem:[%s1202 + $0x6c] sm:$0xf] %v1269
        %1271 = vst.msk [vmem:[%s1202 + $0x70] sm:$0xf] %vm662, %v1050
        %v1272 = vld [vmem:[%s1202 + $0x74] sm:$0x1]
        %v1273 = vsel %vm673, %v1051, %v1272
        %1274 = vst [vmem:[%s1202 + $0x74] sm:$0x1] %v1273
        %v1275 = vld [vmem:[%s1202 + $0x78] sm:$0xf]
        %v1276 = vsel %vm1204, %v1058, %v1275
        %1277 = vst [vmem:[%s1202 + $0x78] sm:$0xf] %v1276
        %1278 = vst.msk [vmem:[%s1202 + $0x7c] sm:$0xf] %vm662, %v1067
        %v1279 = vld [vmem:[%s1202 + $0x80] sm:$0x1]
        %v1280 = vsel %vm673, %v1068, %v1279
        %1281 = vst [vmem:[%s1202 + $0x80] sm:$0x1] %v1280
        %v1282 = vld [vmem:[%s1202 + $0x84] sm:$0xf]
        %v1283 = vsel %vm1204, %v1075, %v1282
        %1284 = vst [vmem:[%s1202 + $0x84] sm:$0xf] %v1283
        %1285 = vst.msk [vmem:[%s1202 + $0x88] sm:$0xf] %vm662, %v1084
        %v1286 = vld [vmem:[%s1202 + $0x8c] sm:$0x1]
        %v1287 = vsel %vm673, %v1085, %v1286
        %1288 = vst [vmem:[%s1202 + $0x8c] sm:$0x1] %v1287
        %v1289 = vld [vmem:[%s1202 + $0x90] sm:$0xf]
        %v1290 = vsel %vm1204, %v1092, %v1289
        %1291 = vst [vmem:[%s1202 + $0x90] sm:$0xf] %v1290
        %1292 = vst.msk [vmem:[%s1202 + $0x94] sm:$0xf] %vm662, %v1101
        %v1293 = vld [vmem:[%s1202 + $0x98] sm:$0x1]
        %v1294 = vsel %vm673, %v1102, %v1293
        %1295 = vst [vmem:[%s1202 + $0x98] sm:$0x1] %v1294
        %v1296 = vld [vmem:[%s1202 + $0x9c] sm:$0xf]
        %v1297 = vsel %vm1204, %v1109, %v1296
        %1298 = vst [vmem:[%s1202 + $0x9c] sm:$0xf] %v1297
        %1299 = vst.msk [vmem:[%s1202 + $0xa0] sm:$0xf] %vm662, %v1118
        %v1300 = vld [vmem:[%s1202 + $0xa4] sm:$0x1]
        %v1301 = vsel %vm673, %v1119, %v1300
        %1302 = vst [vmem:[%s1202 + $0xa4] sm:$0x1] %v1301
        %v1303 = vld [vmem:[%s1202 + $0xa8] sm:$0xf]
        %v1304 = vsel %vm1204, %v1126, %v1303
        %1305 = vst [vmem:[%s1202 + $0xa8] sm:$0xf] %v1304
        %1306 = vst.msk [vmem:[%s1202 + $0xac] sm:$0xf] %vm662, %v1135
        %v1307 = vld [vmem:[%s1202 + $0xb0] sm:$0x1]
        %v1308 = vsel %vm673, %v1136, %v1307
        %1309 = vst [vmem:[%s1202 + $0xb0] sm:$0x1] %v1308
        %v1310 = vld [vmem:[%s1202 + $0xb4] sm:$0xf]
        %v1311 = vsel %vm1204, %v1143, %v1310
        %1312 = vst [vmem:[%s1202 + $0xb4] sm:$0xf] %v1311
        %1313 = vst.msk [vmem:[%s1202 + $0xb8] sm:$0xf] %vm662, %v1152
        %v1314 = vld [vmem:[%s1202 + $0xbc] sm:$0x1]
        %v1315 = vsel %vm673, %v1153, %v1314
        %1316 = vst [vmem:[%s1202 + $0xbc] sm:$0x1] %v1315
        %v1317 = vld [vmem:[#allocation2] sm:$0xf]
        %v1318 = vld [vmem:[#allocation2 + $0x4] sm:$0xf]
        %v1319 = vld [vmem:[#allocation2 + $0xc] sm:$0xf]
        %v1320 = vld [vmem:[#allocation2 + $0x10] sm:$0xf]
        %v1321 = vld [vmem:[#allocation2 + $0x18] sm:$0xf]
        %v1322 = vld [vmem:[#allocation2 + $0x1c] sm:$0xf]
        %v1323 = vld [vmem:[#allocation2 + $0x24] sm:$0xf]
        %v1324 = vld [vmem:[#allocation2 + $0x28] sm:$0xf]
        %v1325 = vld [vmem:[#allocation2 + $0x30] sm:$0xf]
        %v1326 = vld [vmem:[#allocation2 + $0x34] sm:$0xf]
        %v1327 = vld [vmem:[#allocation2 + $0x3c] sm:$0xf]
        %v1328 = vld [vmem:[#allocation2 + $0x40] sm:$0xf]
        %v1329 = vld [vmem:[#allocation2 + $0x48] sm:$0xf]
        %v1330 = vld [vmem:[#allocation2 + $0x4c] sm:$0xf]
        %v1331 = vld [vmem:[#allocation2 + $0x54] sm:$0xf]
        %v1332 = vld [vmem:[#allocation2 + $0x58] sm:$0xf]
        %v1333 = vld [vmem:[#allocation2 + $0x60] sm:$0xf]
        %v1334 = vld [vmem:[#allocation2 + $0x64] sm:$0xf]
        %v1335 = vld [vmem:[#allocation2 + $0x6c] sm:$0xf]
        %v1336 = vld [vmem:[#allocation2 + $0x70] sm:$0xf]
        %v1337 = vld [vmem:[#allocation2 + $0x78] sm:$0xf]
        %v1338 = vld [vmem:[#allocation2 + $0x7c] sm:$0xf]
        %v1339 = vld [vmem:[#allocation2 + $0x84] sm:$0xf]
        %v1340 = vld [vmem:[#allocation2 + $0x88] sm:$0xf]
        %v1341 = vld [vmem:[#allocation2 + $0x90] sm:$0xf]
        %v1342 = vld [vmem:[#allocation2 + $0x94] sm:$0xf]
        %v1343 = vld [vmem:[#allocation2 + $0x9c] sm:$0xf]
        %v1344 = vld [vmem:[#allocation2 + $0xa0] sm:$0xf]
        %v1345 = vld [vmem:[#allocation2 + $0xa8] sm:$0xf]
        %v1346 = vld [vmem:[#allocation2 + $0xac] sm:$0xf]
        %v1347 = vld [vmem:[#allocation2 + $0xb4] sm:$0xf]
        %v1348 = vld [vmem:[#allocation2 + $0xb8] sm:$0xf]
        %v1349 = vld [vmem:[#allocation2 + $0x8] sm:$0x1]
        %v1350 = vld [vmem:[#allocation2 + $0x14] sm:$0x1]
        %v1351 = vld [vmem:[#allocation2 + $0x20] sm:$0x1]
        %v1352 = vld [vmem:[#allocation2 + $0x2c] sm:$0x1]
        %v1353 = vld [vmem:[#allocation2 + $0x38] sm:$0x1]
        %v1354 = vld [vmem:[#allocation2 + $0x44] sm:$0x1]
        %v1355 = vld [vmem:[#allocation2 + $0x50] sm:$0x1]
        %v1356 = vld [vmem:[#allocation2 + $0x5c] sm:$0x1]
        %v1357 = vld [vmem:[#allocation2 + $0x68] sm:$0x1]
        %v1358 = vld [vmem:[#allocation2 + $0x74] sm:$0x1]
        %v1359 = vld [vmem:[#allocation2 + $0x80] sm:$0x1]
        %v1360 = vld [vmem:[#allocation2 + $0x8c] sm:$0x1]
        %v1361 = vld [vmem:[#allocation2 + $0x98] sm:$0x1]
        %v1362 = vld [vmem:[#allocation2 + $0xa4] sm:$0x1]
        %v1363 = vld [vmem:[#allocation2 + $0xb0] sm:$0x1]
        %v1364 = vld [vmem:[#allocation2 + $0xbc] sm:$0x1]
        %vm1365 = vsmask.f32 3328
        %vm1366 = vsmask.f32 7440
        %vm1367 = vmor %vm1365, %vm1366
        %v1369 = vshrl.u32 %v1317, 16
        %v1371 = vrot.slane %v1369, 4
        %v1372 = vshll.u32 %v1317, 16
        %v1374 = vrot.slane %v1372, 5
        %v1375 = vor.u32 %v1371, %v1374
        %v1376 = vrot.slane %v1375, 4
        %v1378 = vshll.u32 %v1318, 16
        %v1380 = vrot.slane %v1378, 5
        %v1381 = vsel %vm1367, %v1376, %v1380
        %v1382 = vshrl.u32 %v1318, 16
        %v1384 = vrot.slane %v1382, 4
        %v1385 = vor.u32 %v1384, %v1380
        %v1386 = vrot.slane %v1385, 4
        %v1388 = vshll.u32 %v1349, 16
        %v1390 = vrot.slane %v1388, 5
        %v1391 = vsel %vm1367, %v1386, %v1390
        %v1393 = vshrl.u32 %v1319, 16
        %v1395 = vrot.slane %v1393, 4
        %v1396 = vshll.u32 %v1319, 16
        %v1398 = vrot.slane %v1396, 5
        %v1399 = vor.u32 %v1395, %v1398
        %v1400 = vrot.slane %v1399, 4
        %v1402 = vshll.u32 %v1320, 16
        %v1404 = vrot.slane %v1402, 5
        %v1405 = vsel %vm1367, %v1400, %v1404
        %v1406 = vshrl.u32 %v1320, 16
        %v1408 = vrot.slane %v1406, 4
        %v1409 = vor.u32 %v1408, %v1404
        %v1410 = vrot.slane %v1409, 4
        %v1412 = vshll.u32 %v1350, 16
        %v1414 = vrot.slane %v1412, 5
        %v1415 = vsel %vm1367, %v1410, %v1414
        %v1417 = vshrl.u32 %v1321, 16
        %v1419 = vrot.slane %v1417, 4
        %v1420 = vshll.u32 %v1321, 16
        %v1422 = vrot.slane %v1420, 5
        %v1423 = vor.u32 %v1419, %v1422
        %v1424 = vrot.slane %v1423, 4
        %v1426 = vshll.u32 %v1322, 16
        %v1428 = vrot.slane %v1426, 5
        %v1429 = vsel %vm1367, %v1424, %v1428
        %v1430 = vshrl.u32 %v1322, 16
        %v1432 = vrot.slane %v1430, 4
        %v1433 = vor.u32 %v1432, %v1428
        %v1434 = vrot.slane %v1433, 4
        %v1436 = vshll.u32 %v1351, 16
        %v1438 = vrot.slane %v1436, 5
        %v1439 = vsel %vm1367, %v1434, %v1438
        %v1441 = vshrl.u32 %v1323, 16
        %v1443 = vrot.slane %v1441, 4
        %v1444 = vshll.u32 %v1323, 16
        %v1446 = vrot.slane %v1444, 5
        %v1447 = vor.u32 %v1443, %v1446
        %v1448 = vrot.slane %v1447, 4
        %v1450 = vshll.u32 %v1324, 16
        %v1452 = vrot.slane %v1450, 5
        %v1453 = vsel %vm1367, %v1448, %v1452
        %v1454 = vshrl.u32 %v1324, 16
        %v1456 = vrot.slane %v1454, 4
        %v1457 = vor.u32 %v1456, %v1452
        %v1458 = vrot.slane %v1457, 4
        %v1460 = vshll.u32 %v1352, 16
        %v1462 = vrot.slane %v1460, 5
        %v1463 = vsel %vm1367, %v1458, %v1462
        %v1465 = vshrl.u32 %v1325, 16
        %v1467 = vrot.slane %v1465, 4
        %v1468 = vshll.u32 %v1325, 16
        %v1470 = vrot.slane %v1468, 5
        %v1471 = vor.u32 %v1467, %v1470
        %v1472 = vrot.slane %v1471, 4
        %v1474 = vshll.u32 %v1326, 16
        %v1476 = vrot.slane %v1474, 5
        %v1477 = vsel %vm1367, %v1472, %v1476
        %v1478 = vshrl.u32 %v1326, 16
        %v1480 = vrot.slane %v1478, 4
        %v1481 = vor.u32 %v1480, %v1476
        %v1482 = vrot.slane %v1481, 4
        %v1484 = vshll.u32 %v1353, 16
        %v1486 = vrot.slane %v1484, 5
        %v1487 = vsel %vm1367, %v1482, %v1486
        %v1489 = vshrl.u32 %v1327, 16
        %v1491 = vrot.slane %v1489, 4
        %v1492 = vshll.u32 %v1327, 16
        %v1494 = vrot.slane %v1492, 5
        %v1495 = vor.u32 %v1491, %v1494
        %v1496 = vrot.slane %v1495, 4
        %v1498 = vshll.u32 %v1328, 16
        %v1500 = vrot.slane %v1498, 5
        %v1501 = vsel %vm1367, %v1496, %v1500
        %v1502 = vshrl.u32 %v1328, 16
        %v1504 = vrot.slane %v1502, 4
        %v1505 = vor.u32 %v1504, %v1500
        %v1506 = vrot.slane %v1505, 4
        %v1508 = vshll.u32 %v1354, 16
        %v1510 = vrot.slane %v1508, 5
        %v1511 = vsel %vm1367, %v1506, %v1510
        %v1513 = vshrl.u32 %v1329, 16
        %v1515 = vrot.slane %v1513, 4
        %v1516 = vshll.u32 %v1329, 16
        %v1518 = vrot.slane %v1516, 5
        %v1519 = vor.u32 %v1515, %v1518
        %v1520 = vrot.slane %v1519, 4
        %v1522 = vshll.u32 %v1330, 16
        %v1524 = vrot.slane %v1522, 5
        %v1525 = vsel %vm1367, %v1520, %v1524
        %v1526 = vshrl.u32 %v1330, 16
        %v1528 = vrot.slane %v1526, 4
        %v1529 = vor.u32 %v1528, %v1524
        %v1530 = vrot.slane %v1529, 4
        %v1532 = vshll.u32 %v1355, 16
        %v1534 = vrot.slane %v1532, 5
        %v1535 = vsel %vm1367, %v1530, %v1534
        %v1537 = vshrl.u32 %v1331, 16
        %v1539 = vrot.slane %v1537, 4
        %v1540 = vshll.u32 %v1331, 16
        %v1542 = vrot.slane %v1540, 5
        %v1543 = vor.u32 %v1539, %v1542
        %v1544 = vrot.slane %v1543, 4
        %v1546 = vshll.u32 %v1332, 16
        %v1548 = vrot.slane %v1546, 5
        %v1549 = vsel %vm1367, %v1544, %v1548
        %v1550 = vshrl.u32 %v1332, 16
        %v1552 = vrot.slane %v1550, 4
        %v1553 = vor.u32 %v1552, %v1548
        %v1554 = vrot.slane %v1553, 4
        %v1556 = vshll.u32 %v1356, 16
        %v1558 = vrot.slane %v1556, 5
        %v1559 = vsel %vm1367, %v1554, %v1558
        %v1561 = vshrl.u32 %v1333, 16
        %v1563 = vrot.slane %v1561, 4
        %v1564 = vshll.u32 %v1333, 16
        %v1566 = vrot.slane %v1564, 5
        %v1567 = vor.u32 %v1563, %v1566
        %v1568 = vrot.slane %v1567, 4
        %v1570 = vshll.u32 %v1334, 16
        %v1572 = vrot.slane %v1570, 5
        %v1573 = vsel %vm1367, %v1568, %v1572
        %v1574 = vshrl.u32 %v1334, 16
        %v1576 = vrot.slane %v1574, 4
        %v1577 = vor.u32 %v1576, %v1572
        %v1578 = vrot.slane %v1577, 4
        %v1580 = vshll.u32 %v1357, 16
        %v1582 = vrot.slane %v1580, 5
        %v1583 = vsel %vm1367, %v1578, %v1582
        %v1585 = vshrl.u32 %v1335, 16
        %v1587 = vrot.slane %v1585, 4
        %v1588 = vshll.u32 %v1335, 16
        %v1590 = vrot.slane %v1588, 5
        %v1591 = vor.u32 %v1587, %v1590
        %v1592 = vrot.slane %v1591, 4
        %v1594 = vshll.u32 %v1336, 16
        %v1596 = vrot.slane %v1594, 5
        %v1597 = vsel %vm1367, %v1592, %v1596
        %v1598 = vshrl.u32 %v1336, 16
        %v1600 = vrot.slane %v1598, 4
        %v1601 = vor.u32 %v1600, %v1596
        %v1602 = vrot.slane %v1601, 4
        %v1604 = vshll.u32 %v1358, 16
        %v1606 = vrot.slane %v1604, 5
        %v1607 = vsel %vm1367, %v1602, %v1606
        %v1609 = vshrl.u32 %v1337, 16
        %v1611 = vrot.slane %v1609, 4
        %v1612 = vshll.u32 %v1337, 16
        %v1614 = vrot.slane %v1612, 5
        %v1615 = vor.u32 %v1611, %v1614
        %v1616 = vrot.slane %v1615, 4
        %v1618 = vshll.u32 %v1338, 16
        %v1620 = vrot.slane %v1618, 5
        %v1621 = vsel %vm1367, %v1616, %v1620
        %v1622 = vshrl.u32 %v1338, 16
        %v1624 = vrot.slane %v1622, 4
        %v1625 = vor.u32 %v1624, %v1620
        %v1626 = vrot.slane %v1625, 4
        %v1628 = vshll.u32 %v1359, 16
        %v1630 = vrot.slane %v1628, 5
        %v1631 = vsel %vm1367, %v1626, %v1630
        %v1633 = vshrl.u32 %v1339, 16
        %v1635 = vrot.slane %v1633, 4
        %v1636 = vshll.u32 %v1339, 16
        %v1638 = vrot.slane %v1636, 5
        %v1639 = vor.u32 %v1635, %v1638
        %v1640 = vrot.slane %v1639, 4
        %v1642 = vshll.u32 %v1340, 16
        %v1644 = vrot.slane %v1642, 5
        %v1645 = vsel %vm1367, %v1640, %v1644
        %v1646 = vshrl.u32 %v1340, 16
        %v1648 = vrot.slane %v1646, 4
        %v1649 = vor.u32 %v1648, %v1644
        %v1650 = vrot.slane %v1649, 4
        %v1652 = vshll.u32 %v1360, 16
        %v1654 = vrot.slane %v1652, 5
        %v1655 = vsel %vm1367, %v1650, %v1654
        %v1657 = vshrl.u32 %v1341, 16
        %v1659 = vrot.slane %v1657, 4
        %v1660 = vshll.u32 %v1341, 16
        %v1662 = vrot.slane %v1660, 5
        %v1663 = vor.u32 %v1659, %v1662
        %v1664 = vrot.slane %v1663, 4
        %v1666 = vshll.u32 %v1342, 16
        %v1668 = vrot.slane %v1666, 5
        %v1669 = vsel %vm1367, %v1664, %v1668
        %v1670 = vshrl.u32 %v1342, 16
        %v1672 = vrot.slane %v1670, 4
        %v1673 = vor.u32 %v1672, %v1668
        %v1674 = vrot.slane %v1673, 4
        %v1676 = vshll.u32 %v1361, 16
        %v1678 = vrot.slane %v1676, 5
        %v1679 = vsel %vm1367, %v1674, %v1678
        %v1681 = vshrl.u32 %v1343, 16
        %v1683 = vrot.slane %v1681, 4
        %v1684 = vshll.u32 %v1343, 16
        %v1686 = vrot.slane %v1684, 5
        %v1687 = vor.u32 %v1683, %v1686
        %v1688 = vrot.slane %v1687, 4
        %v1690 = vshll.u32 %v1344, 16
        %v1692 = vrot.slane %v1690, 5
        %v1693 = vsel %vm1367, %v1688, %v1692
        %v1694 = vshrl.u32 %v1344, 16
        %v1696 = vrot.slane %v1694, 4
        %v1697 = vor.u32 %v1696, %v1692
        %v1698 = vrot.slane %v1697, 4
        %v1700 = vshll.u32 %v1362, 16
        %v1702 = vrot.slane %v1700, 5
        %v1703 = vsel %vm1367, %v1698, %v1702
        %v1705 = vshrl.u32 %v1345, 16
        %v1707 = vrot.slane %v1705, 4
        %v1708 = vshll.u32 %v1345, 16
        %v1710 = vrot.slane %v1708, 5
        %v1711 = vor.u32 %v1707, %v1710
        %v1712 = vrot.slane %v1711, 4
        %v1714 = vshll.u32 %v1346, 16
        %v1716 = vrot.slane %v1714, 5
        %v1717 = vsel %vm1367, %v1712, %v1716
        %v1718 = vshrl.u32 %v1346, 16
        %v1720 = vrot.slane %v1718, 4
        %v1721 = vor.u32 %v1720, %v1716
        %v1722 = vrot.slane %v1721, 4
        %v1724 = vshll.u32 %v1363, 16
        %v1726 = vrot.slane %v1724, 5
        %v1727 = vsel %vm1367, %v1722, %v1726
        %v1729 = vshrl.u32 %v1347, 16
        %v1731 = vrot.slane %v1729, 4
        %v1732 = vshll.u32 %v1347, 16
        %v1734 = vrot.slane %v1732, 5
        %v1735 = vor.u32 %v1731, %v1734
        %v1736 = vrot.slane %v1735, 4
        %v1738 = vshll.u32 %v1348, 16
        %v1740 = vrot.slane %v1738, 5
        %v1741 = vsel %vm1367, %v1736, %v1740
        %v1742 = vshrl.u32 %v1348, 16
        %v1744 = vrot.slane %v1742, 4
        %v1745 = vor.u32 %v1744, %v1740
        %v1746 = vrot.slane %v1745, 4
        %v1748 = vshll.u32 %v1364, 16
        %v1750 = vrot.slane %v1748, 5
        %v1751 = vsel %vm1367, %v1746, %v1750
        %v1752 = vld [vmem:[#allocation2] sm:$0xe]
        %v1753 = vld [vmem:[#allocation2 + $0xc] sm:$0xe]
        %v1754 = vld [vmem:[#allocation2 + $0x18] sm:$0xe]
        %v1755 = vld [vmem:[#allocation2 + $0x24] sm:$0xe]
        %v1756 = vld [vmem:[#allocation2 + $0x30] sm:$0xe]
        %v1757 = vld [vmem:[#allocation2 + $0x3c] sm:$0xe]
        %v1758 = vld [vmem:[#allocation2 + $0x48] sm:$0xe]
        %v1759 = vld [vmem:[#allocation2 + $0x54] sm:$0xe]
        %v1760 = vld [vmem:[#allocation2 + $0x60] sm:$0xe]
        %v1761 = vld [vmem:[#allocation2 + $0x6c] sm:$0xe]
        %v1762 = vld [vmem:[#allocation2 + $0x78] sm:$0xe]
        %v1763 = vld [vmem:[#allocation2 + $0x84] sm:$0xe]
        %v1764 = vld [vmem:[#allocation2 + $0x90] sm:$0xe]
        %v1765 = vld [vmem:[#allocation2 + $0x9c] sm:$0xe]
        %v1766 = vld [vmem:[#allocation2 + $0xa8] sm:$0xe]
        %v1767 = vld [vmem:[#allocation2 + $0xb4] sm:$0xe]
        %vm1816 = vcmask 1042432
        %vm1817 = vcmask 1046532
        %vm1818 = vmor %vm1816, %vm1817
        %v1819 = vrot.slane %v1752, 5
        %v1820 = vrot.slane %v1819, 4
        %v1821 = vrot.slane %v1318, 5
        %v1822 = vsel %vm1818, %v1820, %v1821
        %v1823 = vrot.slane %v1821, 4
        %v1824 = vrot.slane %v1349, 5
        %v1825 = vsel %vm1818, %v1823, %v1824
        %v1826 = vrot.slane %v1753, 5
        %v1827 = vrot.slane %v1826, 4
        %v1828 = vrot.slane %v1320, 5
        %v1829 = vsel %vm1818, %v1827, %v1828
        %v1830 = vrot.slane %v1828, 4
        %v1831 = vrot.slane %v1350, 5
        %v1832 = vsel %vm1818, %v1830, %v1831
        %v1833 = vrot.slane %v1754, 5
        %v1834 = vrot.slane %v1833, 4
        %v1835 = vrot.slane %v1322, 5
        %v1836 = vsel %vm1818, %v1834, %v1835
        %v1837 = vrot.slane %v1835, 4
        %v1838 = vrot.slane %v1351, 5
        %v1839 = vsel %vm1818, %v1837, %v1838
        %v1840 = vrot.slane %v1755, 5
        %v1841 = vrot.slane %v1840, 4
        %v1842 = vrot.slane %v1324, 5
        %v1843 = vsel %vm1818, %v1841, %v1842
        %v1844 = vrot.slane %v1842, 4
        %v1845 = vrot.slane %v1352, 5
        %v1846 = vsel %vm1818, %v1844, %v1845
        %v1847 = vrot.slane %v1756, 5
        %v1848 = vrot.slane %v1847, 4
        %v1849 = vrot.slane %v1326, 5
        %v1850 = vsel %vm1818, %v1848, %v1849
        %v1851 = vrot.slane %v1849, 4
        %v1852 = vrot.slane %v1353, 5
        %v1853 = vsel %vm1818, %v1851, %v1852
        %v1854 = vrot.slane %v1757, 5
        %v1855 = vrot.slane %v1854, 4
        %v1856 = vrot.slane %v1328, 5
        %v1857 = vsel %vm1818, %v1855, %v1856
        %v1858 = vrot.slane %v1856, 4
        %v1859 = vrot.slane %v1354, 5
        %v1860 = vsel %vm1818, %v1858, %v1859
        %v1861 = vrot.slane %v1758, 5
        %v1862 = vrot.slane %v1861, 4
        %v1863 = vrot.slane %v1330, 5
        %v1864 = vsel %vm1818, %v1862, %v1863
        %v1865 = vrot.slane %v1863, 4
        %v1866 = vrot.slane %v1355, 5
        %v1867 = vsel %vm1818, %v1865, %v1866
        %v1868 = vrot.slane %v1759, 5
        %v1869 = vrot.slane %v1868, 4
        %v1870 = vrot.slane %v1332, 5
        %v1871 = vsel %vm1818, %v1869, %v1870
        %v1872 = vrot.slane %v1870, 4
        %v1873 = vrot.slane %v1356, 5
        %v1874 = vsel %vm1818, %v1872, %v1873
        %v1875 = vrot.slane %v1760, 5
        %v1876 = vrot.slane %v1875, 4
        %v1877 = vrot.slane %v1334, 5
        %v1878 = vsel %vm1818, %v1876, %v1877
        %v1879 = vrot.slane %v1877, 4
        %v1880 = vrot.slane %v1357, 5
        %v1881 = vsel %vm1818, %v1879, %v1880
        %v1882 = vrot.slane %v1761, 5
        %v1883 = vrot.slane %v1882, 4
        %v1884 = vrot.slane %v1336, 5
        %v1885 = vsel %vm1818, %v1883, %v1884
        %v1886 = vrot.slane %v1884, 4
        %v1887 = vrot.slane %v1358, 5
        %v1888 = vsel %vm1818, %v1886, %v1887
        %v1889 = vrot.slane %v1762, 5
        %v1890 = vrot.slane %v1889, 4
        %v1891 = vrot.slane %v1338, 5
        %v1892 = vsel %vm1818, %v1890, %v1891
        %v1893 = vrot.slane %v1891, 4
        %v1894 = vrot.slane %v1359, 5
        %v1895 = vsel %vm1818, %v1893, %v1894
        %v1896 = vrot.slane %v1763, 5
        %v1897 = vrot.slane %v1896, 4
        %v1898 = vrot.slane %v1340, 5
        %v1899 = vsel %vm1818, %v1897, %v1898
        %v1900 = vrot.slane %v1898, 4
        %v1901 = vrot.slane %v1360, 5
        %v1902 = vsel %vm1818, %v1900, %v1901
        %v1903 = vrot.slane %v1764, 5
        %v1904 = vrot.slane %v1903, 4
        %v1905 = vrot.slane %v1342, 5
        %v1906 = vsel %vm1818, %v1904, %v1905
        %v1907 = vrot.slane %v1905, 4
        %v1908 = vrot.slane %v1361, 5
        %v1909 = vsel %vm1818, %v1907, %v1908
        %v1910 = vrot.slane %v1765, 5
        %v1911 = vrot.slane %v1910, 4
        %v1912 = vrot.slane %v1344, 5
        %v1913 = vsel %vm1818, %v1911, %v1912
        %v1914 = vrot.slane %v1912, 4
        %v1915 = vrot.slane %v1362, 5
        %v1916 = vsel %vm1818, %v1914, %v1915
        %v1917 = vrot.slane %v1766, 5
        %v1918 = vrot.slane %v1917, 4
        %v1919 = vrot.slane %v1346, 5
        %v1920 = vsel %vm1818, %v1918, %v1919
        %v1921 = vrot.slane %v1919, 4
        %v1922 = vrot.slane %v1363, 5
        %v1923 = vsel %vm1818, %v1921, %v1922
        %v1924 = vrot.slane %v1767, 5
        %v1925 = vrot.slane %v1924, 4
        %v1926 = vrot.slane %v1348, 5
        %v1927 = vsel %vm1818, %v1925, %v1926
        %v1928 = vrot.slane %v1926, 4
        %v1929 = vrot.slane %v1364, 5
        %v1930 = vsel %vm1818, %v1928, %v1929
        %v1931 = vld [vmem:[%s1202] sm:$0xf]
        %v1932 = vld [vmem:[%s1202 + $0x4] sm:$0xf]
        %v1933 = vld [vmem:[%s1202 + $0xc] sm:$0xf]
        %v1934 = vld [vmem:[%s1202 + $0x10] sm:$0xf]
        %v1935 = vld [vmem:[%s1202 + $0x18] sm:$0xf]
        %v1936 = vld [vmem:[%s1202 + $0x1c] sm:$0xf]
        %v1937 = vld [vmem:[%s1202 + $0x24] sm:$0xf]
        %v1938 = vld [vmem:[%s1202 + $0x28] sm:$0xf]
        %v1939 = vld [vmem:[%s1202 + $0x30] sm:$0xf]
        %v1940 = vld [vmem:[%s1202 + $0x34] sm:$0xf]
        %v1941 = vld [vmem:[%s1202 + $0x3c] sm:$0xf]
        %v1942 = vld [vmem:[%s1202 + $0x40] sm:$0xf]
        %v1943 = vld [vmem:[%s1202 + $0x48] sm:$0xf]
        %v1944 = vld [vmem:[%s1202 + $0x4c] sm:$0xf]
        %v1945 = vld [vmem:[%s1202 + $0x54] sm:$0xf]
        %v1946 = vld [vmem:[%s1202 + $0x58] sm:$0xf]
        %v1947 = vld [vmem:[%s1202 + $0x60] sm:$0xf]
        %v1948 = vld [vmem:[%s1202 + $0x64] sm:$0xf]
        %v1949 = vld [vmem:[%s1202 + $0x6c] sm:$0xf]
        %v1950 = vld [vmem:[%s1202 + $0x70] sm:$0xf]
        %v1951 = vld [vmem:[%s1202 + $0x78] sm:$0xf]
        %v1952 = vld [vmem:[%s1202 + $0x7c] sm:$0xf]
        %v1953 = vld [vmem:[%s1202 + $0x84] sm:$0xf]
        %v1954 = vld [vmem:[%s1202 + $0x88] sm:$0xf]
        %v1955 = vld [vmem:[%s1202 + $0x90] sm:$0xf]
        %v1956 = vld [vmem:[%s1202 + $0x94] sm:$0xf]
        %v1957 = vld [vmem:[%s1202 + $0x9c] sm:$0xf]
        %v1958 = vld [vmem:[%s1202 + $0xa0] sm:$0xf]
        %v1959 = vld [vmem:[%s1202 + $0xa8] sm:$0xf]
        %v1960 = vld [vmem:[%s1202 + $0xac] sm:$0xf]
        %v1961 = vld [vmem:[%s1202 + $0xb4] sm:$0xf]
        %v1962 = vld [vmem:[%s1202 + $0xb8] sm:$0xf]
        %v1963 = vld [vmem:[%s1202 + $0x8] sm:$0x1]
        %v1964 = vld [vmem:[%s1202 + $0x14] sm:$0x1]
        %v1965 = vld [vmem:[%s1202 + $0x20] sm:$0x1]
        %v1966 = vld [vmem:[%s1202 + $0x2c] sm:$0x1]
        %v1967 = vld [vmem:[%s1202 + $0x38] sm:$0x1]
        %v1968 = vld [vmem:[%s1202 + $0x44] sm:$0x1]
        %v1969 = vld [vmem:[%s1202 + $0x50] sm:$0x1]
        %v1970 = vld [vmem:[%s1202 + $0x5c] sm:$0x1]
        %v1971 = vld [vmem:[%s1202 + $0x68] sm:$0x1]
        %v1972 = vld [vmem:[%s1202 + $0x74] sm:$0x1]
        %v1973 = vld [vmem:[%s1202 + $0x80] sm:$0x1]
        %v1974 = vld [vmem:[%s1202 + $0x8c] sm:$0x1]
        %v1975 = vld [vmem:[%s1202 + $0x98] sm:$0x1]
        %v1976 = vld [vmem:[%s1202 + $0xa4] sm:$0x1]
        %v1977 = vld [vmem:[%s1202 + $0xb0] sm:$0x1]
        %v1978 = vld [vmem:[%s1202 + $0xbc] sm:$0x1]
        %v1980 = vshrl.u32 %v1931, 16
        %v1982 = vrot.slane %v1980, 4
        %v1983 = vshll.u32 %v1931, 16
        %v1985 = vrot.slane %v1983, 5
        %v1986 = vor.u32 %v1982, %v1985
        %v1987 = vrot.slane %v1986, 4
        %v1989 = vshll.u32 %v1932, 16
        %v1991 = vrot.slane %v1989, 5
        %v1992 = vsel %vm1367, %v1987, %v1991
        %v1993 = vshrl.u32 %v1932, 16
        %v1995 = vrot.slane %v1993, 4
        %v1996 = vor.u32 %v1995, %v1991
        %v1997 = vrot.slane %v1996, 4
        %v1999 = vshll.u32 %v1963, 16
        %v2001 = vrot.slane %v1999, 5
        %v2002 = vsel %vm1367, %v1997, %v2001
        %v2004 = vshrl.u32 %v1933, 16
        %v2006 = vrot.slane %v2004, 4
        %v2007 = vshll.u32 %v1933, 16
        %v2009 = vrot.slane %v2007, 5
        %v2010 = vor.u32 %v2006, %v2009
        %v2011 = vrot.slane %v2010, 4
        %v2013 = vshll.u32 %v1934, 16
        %v2015 = vrot.slane %v2013, 5
        %v2016 = vsel %vm1367, %v2011, %v2015
        %v2017 = vshrl.u32 %v1934, 16
        %v2019 = vrot.slane %v2017, 4
        %v2020 = vor.u32 %v2019, %v2015
        %v2021 = vrot.slane %v2020, 4
        %v2023 = vshll.u32 %v1964, 16
        %v2025 = vrot.slane %v2023, 5
        %v2026 = vsel %vm1367, %v2021, %v2025
        %v2028 = vshrl.u32 %v1935, 16
        %v2030 = vrot.slane %v2028, 4
        %v2031 = vshll.u32 %v1935, 16
        %v2033 = vrot.slane %v2031, 5
        %v2034 = vor.u32 %v2030, %v2033
        %v2035 = vrot.slane %v2034, 4
        %v2037 = vshll.u32 %v1936, 16
        %v2039 = vrot.slane %v2037, 5
        %v2040 = vsel %vm1367, %v2035, %v2039
        %v2041 = vshrl.u32 %v1936, 16
        %v2043 = vrot.slane %v2041, 4
        %v2044 = vor.u32 %v2043, %v2039
        %v2045 = vrot.slane %v2044, 4
        %v2047 = vshll.u32 %v1965, 16
        %v2049 = vrot.slane %v2047, 5
        %v2050 = vsel %vm1367, %v2045, %v2049
        %v2052 = vshrl.u32 %v1937, 16
        %v2054 = vrot.slane %v2052, 4
        %v2055 = vshll.u32 %v1937, 16
        %v2057 = vrot.slane %v2055, 5
        %v2058 = vor.u32 %v2054, %v2057
        %v2059 = vrot.slane %v2058, 4
        %v2061 = vshll.u32 %v1938, 16
        %v2063 = vrot.slane %v2061, 5
        %v2064 = vsel %vm1367, %v2059, %v2063
        %v2065 = vshrl.u32 %v1938, 16
        %v2067 = vrot.slane %v2065, 4
        %v2068 = vor.u32 %v2067, %v2063
        %v2069 = vrot.slane %v2068, 4
        %v2071 = vshll.u32 %v1966, 16
        %v2073 = vrot.slane %v2071, 5
        %v2074 = vsel %vm1367, %v2069, %v2073
        %v2076 = vshrl.u32 %v1939, 16
        %v2078 = vrot.slane %v2076, 4
        %v2079 = vshll.u32 %v1939, 16
        %v2081 = vrot.slane %v2079, 5
        %v2082 = vor.u32 %v2078, %v2081
        %v2083 = vrot.slane %v2082, 4
        %v2085 = vshll.u32 %v1940, 16
        %v2087 = vrot.slane %v2085, 5
        %v2088 = vsel %vm1367, %v2083, %v2087
        %v2089 = vshrl.u32 %v1940, 16
        %v2091 = vrot.slane %v2089, 4
        %v2092 = vor.u32 %v2091, %v2087
        %v2093 = vrot.slane %v2092, 4
        %v2095 = vshll.u32 %v1967, 16
        %v2097 = vrot.slane %v2095, 5
        %v2098 = vsel %vm1367, %v2093, %v2097
        %v2100 = vshrl.u32 %v1941, 16
        %v2102 = vrot.slane %v2100, 4
        %v2103 = vshll.u32 %v1941, 16
        %v2105 = vrot.slane %v2103, 5
        %v2106 = vor.u32 %v2102, %v2105
        %v2107 = vrot.slane %v2106, 4
        %v2109 = vshll.u32 %v1942, 16
        %v2111 = vrot.slane %v2109, 5
        %v2112 = vsel %vm1367, %v2107, %v2111
        %v2113 = vshrl.u32 %v1942, 16
        %v2115 = vrot.slane %v2113, 4
        %v2116 = vor.u32 %v2115, %v2111
        %v2117 = vrot.slane %v2116, 4
        %v2119 = vshll.u32 %v1968, 16
        %v2121 = vrot.slane %v2119, 5
        %v2122 = vsel %vm1367, %v2117, %v2121
        %v2124 = vshrl.u32 %v1943, 16
        %v2126 = vrot.slane %v2124, 4
        %v2127 = vshll.u32 %v1943, 16
        %v2129 = vrot.slane %v2127, 5
        %v2130 = vor.u32 %v2126, %v2129
        %v2131 = vrot.slane %v2130, 4
        %v2133 = vshll.u32 %v1944, 16
        %v2135 = vrot.slane %v2133, 5
        %v2136 = vsel %vm1367, %v2131, %v2135
        %v2137 = vshrl.u32 %v1944, 16
        %v2139 = vrot.slane %v2137, 4
        %v2140 = vor.u32 %v2139, %v2135
        %v2141 = vrot.slane %v2140, 4
        %v2143 = vshll.u32 %v1969, 16
        %v2145 = vrot.slane %v2143, 5
        %v2146 = vsel %vm1367, %v2141, %v2145
        %v2148 = vshrl.u32 %v1945, 16
        %v2150 = vrot.slane %v2148, 4
        %v2151 = vshll.u32 %v1945, 16
        %v2153 = vrot.slane %v2151, 5
        %v2154 = vor.u32 %v2150, %v2153
        %v2155 = vrot.slane %v2154, 4
        %v2157 = vshll.u32 %v1946, 16
        %v2159 = vrot.slane %v2157, 5
        %v2160 = vsel %vm1367, %v2155, %v2159
        %v2161 = vshrl.u32 %v1946, 16
        %v2163 = vrot.slane %v2161, 4
        %v2164 = vor.u32 %v2163, %v2159
        %v2165 = vrot.slane %v2164, 4
        %v2167 = vshll.u32 %v1970, 16
        %v2169 = vrot.slane %v2167, 5
        %v2170 = vsel %vm1367, %v2165, %v2169
        %v2172 = vshrl.u32 %v1947, 16
        %v2174 = vrot.slane %v2172, 4
        %v2175 = vshll.u32 %v1947, 16
        %v2177 = vrot.slane %v2175, 5
        %v2178 = vor.u32 %v2174, %v2177
        %v2179 = vrot.slane %v2178, 4
        %v2181 = vshll.u32 %v1948, 16
        %v2183 = vrot.slane %v2181, 5
        %v2184 = vsel %vm1367, %v2179, %v2183
        %v2185 = vshrl.u32 %v1948, 16
        %v2187 = vrot.slane %v2185, 4
        %v2188 = vor.u32 %v2187, %v2183
        %v2189 = vrot.slane %v2188, 4
        %v2191 = vshll.u32 %v1971, 16
        %v2193 = vrot.slane %v2191, 5
        %v2194 = vsel %vm1367, %v2189, %v2193
        %v2196 = vshrl.u32 %v1949, 16
        %v2198 = vrot.slane %v2196, 4
        %v2199 = vshll.u32 %v1949, 16
        %v2201 = vrot.slane %v2199, 5
        %v2202 = vor.u32 %v2198, %v2201
        %v2203 = vrot.slane %v2202, 4
        %v2205 = vshll.u32 %v1950, 16
        %v2207 = vrot.slane %v2205, 5
        %v2208 = vsel %vm1367, %v2203, %v2207
        %v2209 = vshrl.u32 %v1950, 16
        %v2211 = vrot.slane %v2209, 4
        %v2212 = vor.u32 %v2211, %v2207
        %v2213 = vrot.slane %v2212, 4
        %v2215 = vshll.u32 %v1972, 16
        %v2217 = vrot.slane %v2215, 5
        %v2218 = vsel %vm1367, %v2213, %v2217
        %v2220 = vshrl.u32 %v1951, 16
        %v2222 = vrot.slane %v2220, 4
        %v2223 = vshll.u32 %v1951, 16
        %v2225 = vrot.slane %v2223, 5
        %v2226 = vor.u32 %v2222, %v2225
        %v2227 = vrot.slane %v2226, 4
        %v2229 = vshll.u32 %v1952, 16
        %v2231 = vrot.slane %v2229, 5
        %v2232 = vsel %vm1367, %v2227, %v2231
        %v2233 = vshrl.u32 %v1952, 16
        %v2235 = vrot.slane %v2233, 4
        %v2236 = vor.u32 %v2235, %v2231
        %v2237 = vrot.slane %v2236, 4
        %v2239 = vshll.u32 %v1973, 16
        %v2241 = vrot.slane %v2239, 5
        %v2242 = vsel %vm1367, %v2237, %v2241
        %v2244 = vshrl.u32 %v1953, 16
        %v2246 = vrot.slane %v2244, 4
        %v2247 = vshll.u32 %v1953, 16
        %v2249 = vrot.slane %v2247, 5
        %v2250 = vor.u32 %v2246, %v2249
        %v2251 = vrot.slane %v2250, 4
        %v2253 = vshll.u32 %v1954, 16
        %v2255 = vrot.slane %v2253, 5
        %v2256 = vsel %vm1367, %v2251, %v2255
        %v2257 = vshrl.u32 %v1954, 16
        %v2259 = vrot.slane %v2257, 4
        %v2260 = vor.u32 %v2259, %v2255
        %v2261 = vrot.slane %v2260, 4
        %v2263 = vshll.u32 %v1974, 16
        %v2265 = vrot.slane %v2263, 5
        %v2266 = vsel %vm1367, %v2261, %v2265
        %v2268 = vshrl.u32 %v1955, 16
        %v2270 = vrot.slane %v2268, 4
        %v2271 = vshll.u32 %v1955, 16
        %v2273 = vrot.slane %v2271, 5
        %v2274 = vor.u32 %v2270, %v2273
        %v2275 = vrot.slane %v2274, 4
        %v2277 = vshll.u32 %v1956, 16
        %v2279 = vrot.slane %v2277, 5
        %v2280 = vsel %vm1367, %v2275, %v2279
        %v2281 = vshrl.u32 %v1956, 16
        %v2283 = vrot.slane %v2281, 4
        %v2284 = vor.u32 %v2283, %v2279
        %v2285 = vrot.slane %v2284, 4
        %v2287 = vshll.u32 %v1975, 16
        %v2289 = vrot.slane %v2287, 5
        %v2290 = vsel %vm1367, %v2285, %v2289
        %v2292 = vshrl.u32 %v1957, 16
        %v2294 = vrot.slane %v2292, 4
        %v2295 = vshll.u32 %v1957, 16
        %v2297 = vrot.slane %v2295, 5
        %v2298 = vor.u32 %v2294, %v2297
        %v2299 = vrot.slane %v2298, 4
        %v2301 = vshll.u32 %v1958, 16
        %v2303 = vrot.slane %v2301, 5
        %v2304 = vsel %vm1367, %v2299, %v2303
        %v2305 = vshrl.u32 %v1958, 16
        %v2307 = vrot.slane %v2305, 4
        %v2308 = vor.u32 %v2307, %v2303
        %v2309 = vrot.slane %v2308, 4
        %v2311 = vshll.u32 %v1976, 16
        %v2313 = vrot.slane %v2311, 5
        %v2314 = vsel %vm1367, %v2309, %v2313
        %v2316 = vshrl.u32 %v1959, 16
        %v2318 = vrot.slane %v2316, 4
        %v2319 = vshll.u32 %v1959, 16
        %v2321 = vrot.slane %v2319, 5
        %v2322 = vor.u32 %v2318, %v2321
        %v2323 = vrot.slane %v2322, 4
        %v2325 = vshll.u32 %v1960, 16
        %v2327 = vrot.slane %v2325, 5
        %v2328 = vsel %vm1367, %v2323, %v2327
        %v2329 = vshrl.u32 %v1960, 16
        %v2331 = vrot.slane %v2329, 4
        %v2332 = vor.u32 %v2331, %v2327
        %v2333 = vrot.slane %v2332, 4
        %v2335 = vshll.u32 %v1977, 16
        %v2337 = vrot.slane %v2335, 5
        %v2338 = vsel %vm1367, %v2333, %v2337
        %v2340 = vshrl.u32 %v1961, 16
        %v2342 = vrot.slane %v2340, 4
        %v2343 = vshll.u32 %v1961, 16
        %v2345 = vrot.slane %v2343, 5
        %v2346 = vor.u32 %v2342, %v2345
        %v2347 = vrot.slane %v2346, 4
        %v2349 = vshll.u32 %v1962, 16
        %v2351 = vrot.slane %v2349, 5
        %v2352 = vsel %vm1367, %v2347, %v2351
        %v2353 = vshrl.u32 %v1962, 16
        %v2355 = vrot.slane %v2353, 4
        %v2356 = vor.u32 %v2355, %v2351
        %v2357 = vrot.slane %v2356, 4
        %v2359 = vshll.u32 %v1978, 16
        %v2361 = vrot.slane %v2359, 5
        %v2362 = vsel %vm1367, %v2357, %v2361
        %v2363 = vld [vmem:[%s1202] sm:$0xe]
        %v2364 = vld [vmem:[%s1202 + $0xc] sm:$0xe]
        %v2365 = vld [vmem:[%s1202 + $0x18] sm:$0xe]
        %v2366 = vld [vmem:[%s1202 + $0x24] sm:$0xe]
        %v2367 = vld [vmem:[%s1202 + $0x30] sm:$0xe]
        %v2368 = vld [vmem:[%s1202 + $0x3c] sm:$0xe]
        %v2369 = vld [vmem:[%s1202 + $0x48] sm:$0xe]
        %v2370 = vld [vmem:[%s1202 + $0x54] sm:$0xe]
        %v2371 = vld [vmem:[%s1202 + $0x60] sm:$0xe]
        %v2372 = vld [vmem:[%s1202 + $0x6c] sm:$0xe]
        %v2373 = vld [vmem:[%s1202 + $0x78] sm:$0xe]
        %v2374 = vld [vmem:[%s1202 + $0x84] sm:$0xe]
        %v2375 = vld [vmem:[%s1202 + $0x90] sm:$0xe]
        %v2376 = vld [vmem:[%s1202 + $0x9c] sm:$0xe]
        %v2377 = vld [vmem:[%s1202 + $0xa8] sm:$0xe]
        %v2378 = vld [vmem:[%s1202 + $0xb4] sm:$0xe]
        %v2427 = vrot.slane %v2363, 5
        %v2428 = vrot.slane %v2427, 4
        %v2429 = vrot.slane %v1932, 5
        %v2430 = vsel %vm1818, %v2428, %v2429
        %v2431 = vrot.slane %v2429, 4
        %v2432 = vrot.slane %v1963, 5
        %v2433 = vsel %vm1818, %v2431, %v2432
        %v2434 = vrot.slane %v2364, 5
        %v2435 = vrot.slane %v2434, 4
        %v2436 = vrot.slane %v1934, 5
        %v2437 = vsel %vm1818, %v2435, %v2436
        %v2438 = vrot.slane %v2436, 4
        %v2439 = vrot.slane %v1964, 5
        %v2440 = vsel %vm1818, %v2438, %v2439
        %v2441 = vrot.slane %v2365, 5
        %v2442 = vrot.slane %v2441, 4
        %v2443 = vrot.slane %v1936, 5
        %v2444 = vsel %vm1818, %v2442, %v2443
        %v2445 = vrot.slane %v2443, 4
        %v2446 = vrot.slane %v1965, 5
        %v2447 = vsel %vm1818, %v2445, %v2446
        %v2448 = vrot.slane %v2366, 5
        %v2449 = vrot.slane %v2448, 4
        %v2450 = vrot.slane %v1938, 5
        %v2451 = vsel %vm1818, %v2449, %v2450
        %v2452 = vrot.slane %v2450, 4
        %v2453 = vrot.slane %v1966, 5
        %v2454 = vsel %vm1818, %v2452, %v2453
        %v2455 = vrot.slane %v2367, 5
        %v2456 = vrot.slane %v2455, 4
        %v2457 = vrot.slane %v1940, 5
        %v2458 = vsel %vm1818, %v2456, %v2457
        %v2459 = vrot.slane %v2457, 4
        %v2460 = vrot.slane %v1967, 5
        %v2461 = vsel %vm1818, %v2459, %v2460
        %v2462 = vrot.slane %v2368, 5
        %v2463 = vrot.slane %v2462, 4
        %v2464 = vrot.slane %v1942, 5
        %v2465 = vsel %vm1818, %v2463, %v2464
        %v2466 = vrot.slane %v2464, 4
        %v2467 = vrot.slane %v1968, 5
        %v2468 = vsel %vm1818, %v2466, %v2467
        %v2469 = vrot.slane %v2369, 5
        %v2470 = vrot.slane %v2469, 4
        %v2471 = vrot.slane %v1944, 5
        %v2472 = vsel %vm1818, %v2470, %v2471
        %v2473 = vrot.slane %v2471, 4
        %v2474 = vrot.slane %v1969, 5
        %v2475 = vsel %vm1818, %v2473, %v2474
        %v2476 = vrot.slane %v2370, 5
        %v2477 = vrot.slane %v2476, 4
        %v2478 = vrot.slane %v1946, 5
        %v2479 = vsel %vm1818, %v2477, %v2478
        %v2480 = vrot.slane %v2478, 4
        %v2481 = vrot.slane %v1970, 5
        %v2482 = vsel %vm1818, %v2480, %v2481
        %v2483 = vrot.slane %v2371, 5
        %v2484 = vrot.slane %v2483, 4
        %v2485 = vrot.slane %v1948, 5
        %v2486 = vsel %vm1818, %v2484, %v2485
        %v2487 = vrot.slane %v2485, 4
        %v2488 = vrot.slane %v1971, 5
        %v2489 = vsel %vm1818, %v2487, %v2488
        %v2490 = vrot.slane %v2372, 5
        %v2491 = vrot.slane %v2490, 4
        %v2492 = vrot.slane %v1950, 5
        %v2493 = vsel %vm1818, %v2491, %v2492
        %v2494 = vrot.slane %v2492, 4
        %v2495 = vrot.slane %v1972, 5
        %v2496 = vsel %vm1818, %v2494, %v2495
        %v2497 = vrot.slane %v2373, 5
        %v2498 = vrot.slane %v2497, 4
        %v2499 = vrot.slane %v1952, 5
        %v2500 = vsel %vm1818, %v2498, %v2499
        %v2501 = vrot.slane %v2499, 4
        %v2502 = vrot.slane %v1973, 5
        %v2503 = vsel %vm1818, %v2501, %v2502
        %v2504 = vrot.slane %v2374, 5
        %v2505 = vrot.slane %v2504, 4
        %v2506 = vrot.slane %v1954, 5
        %v2507 = vsel %vm1818, %v2505, %v2506
        %v2508 = vrot.slane %v2506, 4
        %v2509 = vrot.slane %v1974, 5
        %v2510 = vsel %vm1818, %v2508, %v2509
        %v2511 = vrot.slane %v2375, 5
        %v2512 = vrot.slane %v2511, 4
        %v2513 = vrot.slane %v1956, 5
        %v2514 = vsel %vm1818, %v2512, %v2513
        %v2515 = vrot.slane %v2513, 4
        %v2516 = vrot.slane %v1975, 5
        %v2517 = vsel %vm1818, %v2515, %v2516
        %v2518 = vrot.slane %v2376, 5
        %v2519 = vrot.slane %v2518, 4
        %v2520 = vrot.slane %v1958, 5
        %v2521 = vsel %vm1818, %v2519, %v2520
        %v2522 = vrot.slane %v2520, 4
        %v2523 = vrot.slane %v1976, 5
        %v2524 = vsel %vm1818, %v2522, %v2523
        %v2525 = vrot.slane %v2377, 5
        %v2526 = vrot.slane %v2525, 4
        %v2527 = vrot.slane %v1960, 5
        %v2528 = vsel %vm1818, %v2526, %v2527
        %v2529 = vrot.slane %v2527, 4
        %v2530 = vrot.slane %v1977, 5
        %v2531 = vsel %vm1818, %v2529, %v2530
        %v2532 = vrot.slane %v2378, 5
        %v2533 = vrot.slane %v2532, 4
        %v2534 = vrot.slane %v1962, 5
        %v2535 = vsel %vm1818, %v2533, %v2534
        %v2536 = vrot.slane %v2534, 4
        %v2537 = vrot.slane %v1978, 5
        %v2538 = vsel %vm1818, %v2536, %v2537
        %s2539 = scalar_lea.vmem [#allocation2], 24
        %v2540 = vld [vmem:[%s2539] sm:$0xf]
        %v2541 = vld [vmem:[%s2539 + $0x4] sm:$0xf]
        %v2542 = vld [vmem:[%s2539 + $0xc] sm:$0xf]
        %v2543 = vld [vmem:[%s2539 + $0x10] sm:$0xf]
        %v2544 = vld [vmem:[%s2539 + $0x18] sm:$0xf]
        %v2545 = vld [vmem:[%s2539 + $0x1c] sm:$0xf]
        %v2546 = vld [vmem:[%s2539 + $0x24] sm:$0xf]
        %v2547 = vld [vmem:[%s2539 + $0x28] sm:$0xf]
        %v2548 = vld [vmem:[%s2539 + $0x30] sm:$0xf]
        %v2549 = vld [vmem:[%s2539 + $0x34] sm:$0xf]
        %v2550 = vld [vmem:[%s2539 + $0x3c] sm:$0xf]
        %v2551 = vld [vmem:[%s2539 + $0x40] sm:$0xf]
        %v2552 = vld [vmem:[%s2539 + $0x48] sm:$0xf]
        %v2553 = vld [vmem:[%s2539 + $0x4c] sm:$0xf]
        %v2554 = vld [vmem:[%s2539 + $0x54] sm:$0xf]
        %v2555 = vld [vmem:[%s2539 + $0x58] sm:$0xf]
        %v2556 = vld [vmem:[%s2539 + $0x60] sm:$0xf]
        %v2557 = vld [vmem:[%s2539 + $0x64] sm:$0xf]
        %v2558 = vld [vmem:[%s2539 + $0x6c] sm:$0xf]
        %v2559 = vld [vmem:[%s2539 + $0x70] sm:$0xf]
        %v2560 = vld [vmem:[%s2539 + $0x78] sm:$0xf]
        %v2561 = vld [vmem:[%s2539 + $0x7c] sm:$0xf]
        %v2562 = vld [vmem:[%s2539 + $0x84] sm:$0xf]
        %v2563 = vld [vmem:[%s2539 + $0x88] sm:$0xf]
        %v2564 = vld [vmem:[%s2539 + $0x90] sm:$0xf]
        %v2565 = vld [vmem:[%s2539 + $0x94] sm:$0xf]
        %v2566 = vld [vmem:[%s2539 + $0x9c] sm:$0xf]
        %v2567 = vld [vmem:[%s2539 + $0xa0] sm:$0xf]
        %v2568 = vld [vmem:[%s2539 + $0xa8] sm:$0xf]
        %v2569 = vld [vmem:[%s2539 + $0xac] sm:$0xf]
        %v2570 = vld [vmem:[%s2539 + $0xb4] sm:$0xf]
        %v2571 = vld [vmem:[%s2539 + $0xb8] sm:$0xf]
        %v2572 = vld [vmem:[%s2539 + $0x8] sm:$0x1]
        %v2573 = vld [vmem:[%s2539 + $0x14] sm:$0x1]
        %v2574 = vld [vmem:[%s2539 + $0x20] sm:$0x1]
        %v2575 = vld [vmem:[%s2539 + $0x2c] sm:$0x1]
        %v2576 = vld [vmem:[%s2539 + $0x38] sm:$0x1]
        %v2577 = vld [vmem:[%s2539 + $0x44] sm:$0x1]
        %v2578 = vld [vmem:[%s2539 + $0x50] sm:$0x1]
        %v2579 = vld [vmem:[%s2539 + $0x5c] sm:$0x1]
        %v2580 = vld [vmem:[%s2539 + $0x68] sm:$0x1]
        %v2581 = vld [vmem:[%s2539 + $0x74] sm:$0x1]
        %v2582 = vld [vmem:[%s2539 + $0x80] sm:$0x1]
        %v2583 = vld [vmem:[%s2539 + $0x8c] sm:$0x1]
        %v2584 = vld [vmem:[%s2539 + $0x98] sm:$0x1]
        %v2585 = vld [vmem:[%s2539 + $0xa4] sm:$0x1]
        %v2586 = vld [vmem:[%s2539 + $0xb0] sm:$0x1]
        %v2587 = vld [vmem:[%s2539 + $0xbc] sm:$0x1]
        %v2589 = vshrl.u32 %v2540, 16
        %v2591 = vrot.slane %v2589, 4
        %v2592 = vshll.u32 %v2540, 16
        %v2594 = vrot.slane %v2592, 5
        %v2595 = vor.u32 %v2591, %v2594
        %v2596 = vrot.slane %v2595, 4
        %v2598 = vshll.u32 %v2541, 16
        %v2600 = vrot.slane %v2598, 5
        %v2601 = vsel %vm1367, %v2596, %v2600
        %v2602 = vshrl.u32 %v2541, 16
        %v2604 = vrot.slane %v2602, 4
        %v2605 = vor.u32 %v2604, %v2600
        %v2606 = vrot.slane %v2605, 4
        %v2608 = vshll.u32 %v2572, 16
        %v2610 = vrot.slane %v2608, 5
        %v2611 = vsel %vm1367, %v2606, %v2610
        %v2613 = vshrl.u32 %v2542, 16
        %v2615 = vrot.slane %v2613, 4
        %v2616 = vshll.u32 %v2542, 16
        %v2618 = vrot.slane %v2616, 5
        %v2619 = vor.u32 %v2615, %v2618
        %v2620 = vrot.slane %v2619, 4
        %v2622 = vshll.u32 %v2543, 16
        %v2624 = vrot.slane %v2622, 5
        %v2625 = vsel %vm1367, %v2620, %v2624
        %v2626 = vshrl.u32 %v2543, 16
        %v2628 = vrot.slane %v2626, 4
        %v2629 = vor.u32 %v2628, %v2624
        %v2630 = vrot.slane %v2629, 4
        %v2632 = vshll.u32 %v2573, 16
        %v2634 = vrot.slane %v2632, 5
        %v2635 = vsel %vm1367, %v2630, %v2634
        %v2637 = vshrl.u32 %v2544, 16
        %v2639 = vrot.slane %v2637, 4
        %v2640 = vshll.u32 %v2544, 16
        %v2642 = vrot.slane %v2640, 5
        %v2643 = vor.u32 %v2639, %v2642
        %v2644 = vrot.slane %v2643, 4
        %v2646 = vshll.u32 %v2545, 16
        %v2648 = vrot.slane %v2646, 5
        %v2649 = vsel %vm1367, %v2644, %v2648
        %v2650 = vshrl.u32 %v2545, 16
        %v2652 = vrot.slane %v2650, 4
        %v2653 = vor.u32 %v2652, %v2648
        %v2654 = vrot.slane %v2653, 4
        %v2656 = vshll.u32 %v2574, 16
        %v2658 = vrot.slane %v2656, 5
        %v2659 = vsel %vm1367, %v2654, %v2658
        %v2661 = vshrl.u32 %v2546, 16
        %v2663 = vrot.slane %v2661, 4
        %v2664 = vshll.u32 %v2546, 16
        %v2666 = vrot.slane %v2664, 5
        %v2667 = vor.u32 %v2663, %v2666
        %v2668 = vrot.slane %v2667, 4
        %v2670 = vshll.u32 %v2547, 16
        %v2672 = vrot.slane %v2670, 5
        %v2673 = vsel %vm1367, %v2668, %v2672
        %v2674 = vshrl.u32 %v2547, 16
        %v2676 = vrot.slane %v2674, 4
        %v2677 = vor.u32 %v2676, %v2672
        %v2678 = vrot.slane %v2677, 4
        %v2680 = vshll.u32 %v2575, 16
        %v2682 = vrot.slane %v2680, 5
        %v2683 = vsel %vm1367, %v2678, %v2682
        %v2685 = vshrl.u32 %v2548, 16
        %v2687 = vrot.slane %v2685, 4
        %v2688 = vshll.u32 %v2548, 16
        %v2690 = vrot.slane %v2688, 5
        %v2691 = vor.u32 %v2687, %v2690
        %v2692 = vrot.slane %v2691, 4
        %v2694 = vshll.u32 %v2549, 16
        %v2696 = vrot.slane %v2694, 5
        %v2697 = vsel %vm1367, %v2692, %v2696
        %v2698 = vshrl.u32 %v2549, 16
        %v2700 = vrot.slane %v2698, 4
        %v2701 = vor.u32 %v2700, %v2696
        %v2702 = vrot.slane %v2701, 4
        %v2704 = vshll.u32 %v2576, 16
        %v2706 = vrot.slane %v2704, 5
        %v2707 = vsel %vm1367, %v2702, %v2706
        %v2709 = vshrl.u32 %v2550, 16
        %v2711 = vrot.slane %v2709, 4
        %v2712 = vshll.u32 %v2550, 16
        %v2714 = vrot.slane %v2712, 5
        %v2715 = vor.u32 %v2711, %v2714
        %v2716 = vrot.slane %v2715, 4
        %v2718 = vshll.u32 %v2551, 16
        %v2720 = vrot.slane %v2718, 5
        %v2721 = vsel %vm1367, %v2716, %v2720
        %v2722 = vshrl.u32 %v2551, 16
        %v2724 = vrot.slane %v2722, 4
        %v2725 = vor.u32 %v2724, %v2720
        %v2726 = vrot.slane %v2725, 4
        %v2728 = vshll.u32 %v2577, 16
        %v2730 = vrot.slane %v2728, 5
        %v2731 = vsel %vm1367, %v2726, %v2730
        %v2733 = vshrl.u32 %v2552, 16
        %v2735 = vrot.slane %v2733, 4
        %v2736 = vshll.u32 %v2552, 16
        %v2738 = vrot.slane %v2736, 5
        %v2739 = vor.u32 %v2735, %v2738
        %v2740 = vrot.slane %v2739, 4
        %v2742 = vshll.u32 %v2553, 16
        %v2744 = vrot.slane %v2742, 5
        %v2745 = vsel %vm1367, %v2740, %v2744
        %v2746 = vshrl.u32 %v2553, 16
        %v2748 = vrot.slane %v2746, 4
        %v2749 = vor.u32 %v2748, %v2744
        %v2750 = vrot.slane %v2749, 4
        %v2752 = vshll.u32 %v2578, 16
        %v2754 = vrot.slane %v2752, 5
        %v2755 = vsel %vm1367, %v2750, %v2754
        %v2757 = vshrl.u32 %v2554, 16
        %v2759 = vrot.slane %v2757, 4
        %v2760 = vshll.u32 %v2554, 16
        %v2762 = vrot.slane %v2760, 5
        %v2763 = vor.u32 %v2759, %v2762
        %v2764 = vrot.slane %v2763, 4
        %v2766 = vshll.u32 %v2555, 16
        %v2768 = vrot.slane %v2766, 5
        %v2769 = vsel %vm1367, %v2764, %v2768
        %v2770 = vshrl.u32 %v2555, 16
        %v2772 = vrot.slane %v2770, 4
        %v2773 = vor.u32 %v2772, %v2768
        %v2774 = vrot.slane %v2773, 4
        %v2776 = vshll.u32 %v2579, 16
        %v2778 = vrot.slane %v2776, 5
        %v2779 = vsel %vm1367, %v2774, %v2778
        %v2781 = vshrl.u32 %v2556, 16
        %v2783 = vrot.slane %v2781, 4
        %v2784 = vshll.u32 %v2556, 16
        %v2786 = vrot.slane %v2784, 5
        %v2787 = vor.u32 %v2783, %v2786
        %v2788 = vrot.slane %v2787, 4
        %v2790 = vshll.u32 %v2557, 16
        %v2792 = vrot.slane %v2790, 5
        %v2793 = vsel %vm1367, %v2788, %v2792
        %v2794 = vshrl.u32 %v2557, 16
        %v2796 = vrot.slane %v2794, 4
        %v2797 = vor.u32 %v2796, %v2792
        %v2798 = vrot.slane %v2797, 4
        %v2800 = vshll.u32 %v2580, 16
        %v2802 = vrot.slane %v2800, 5
        %v2803 = vsel %vm1367, %v2798, %v2802
        %v2805 = vshrl.u32 %v2558, 16
        %v2807 = vrot.slane %v2805, 4
        %v2808 = vshll.u32 %v2558, 16
        %v2810 = vrot.slane %v2808, 5
        %v2811 = vor.u32 %v2807, %v2810
        %v2812 = vrot.slane %v2811, 4
        %v2814 = vshll.u32 %v2559, 16
        %v2816 = vrot.slane %v2814, 5
        %v2817 = vsel %vm1367, %v2812, %v2816
        %v2818 = vshrl.u32 %v2559, 16
        %v2820 = vrot.slane %v2818, 4
        %v2821 = vor.u32 %v2820, %v2816
        %v2822 = vrot.slane %v2821, 4
        %v2824 = vshll.u32 %v2581, 16
        %v2826 = vrot.slane %v2824, 5
        %v2827 = vsel %vm1367, %v2822, %v2826
        %v2829 = vshrl.u32 %v2560, 16
        %v2831 = vrot.slane %v2829, 4
        %v2832 = vshll.u32 %v2560, 16
        %v2834 = vrot.slane %v2832, 5
        %v2835 = vor.u32 %v2831, %v2834
        %v2836 = vrot.slane %v2835, 4
        %v2838 = vshll.u32 %v2561, 16
        %v2840 = vrot.slane %v2838, 5
        %v2841 = vsel %vm1367, %v2836, %v2840
        %v2842 = vshrl.u32 %v2561, 16
        %v2844 = vrot.slane %v2842, 4
        %v2845 = vor.u32 %v2844, %v2840
        %v2846 = vrot.slane %v2845, 4
        %v2848 = vshll.u32 %v2582, 16
        %v2850 = vrot.slane %v2848, 5
        %v2851 = vsel %vm1367, %v2846, %v2850
        %v2853 = vshrl.u32 %v2562, 16
        %v2855 = vrot.slane %v2853, 4
        %v2856 = vshll.u32 %v2562, 16
        %v2858 = vrot.slane %v2856, 5
        %v2859 = vor.u32 %v2855, %v2858
        %v2860 = vrot.slane %v2859, 4
        %v2862 = vshll.u32 %v2563, 16
        %v2864 = vrot.slane %v2862, 5
        %v2865 = vsel %vm1367, %v2860, %v2864
        %v2866 = vshrl.u32 %v2563, 16
        %v2868 = vrot.slane %v2866, 4
        %v2869 = vor.u32 %v2868, %v2864
        %v2870 = vrot.slane %v2869, 4
        %v2872 = vshll.u32 %v2583, 16
        %v2874 = vrot.slane %v2872, 5
        %v2875 = vsel %vm1367, %v2870, %v2874
        %v2877 = vshrl.u32 %v2564, 16
        %v2879 = vrot.slane %v2877, 4
        %v2880 = vshll.u32 %v2564, 16
        %v2882 = vrot.slane %v2880, 5
        %v2883 = vor.u32 %v2879, %v2882
        %v2884 = vrot.slane %v2883, 4
        %v2886 = vshll.u32 %v2565, 16
        %v2888 = vrot.slane %v2886, 5
        %v2889 = vsel %vm1367, %v2884, %v2888
        %v2890 = vshrl.u32 %v2565, 16
        %v2892 = vrot.slane %v2890, 4
        %v2893 = vor.u32 %v2892, %v2888
        %v2894 = vrot.slane %v2893, 4
        %v2896 = vshll.u32 %v2584, 16
        %v2898 = vrot.slane %v2896, 5
        %v2899 = vsel %vm1367, %v2894, %v2898
        %v2901 = vshrl.u32 %v2566, 16
        %v2903 = vrot.slane %v2901, 4
        %v2904 = vshll.u32 %v2566, 16
        %v2906 = vrot.slane %v2904, 5
        %v2907 = vor.u32 %v2903, %v2906
        %v2908 = vrot.slane %v2907, 4
        %v2910 = vshll.u32 %v2567, 16
        %v2912 = vrot.slane %v2910, 5
        %v2913 = vsel %vm1367, %v2908, %v2912
        %v2914 = vshrl.u32 %v2567, 16
        %v2916 = vrot.slane %v2914, 4
        %v2917 = vor.u32 %v2916, %v2912
        %v2918 = vrot.slane %v2917, 4
        %v2920 = vshll.u32 %v2585, 16
        %v2922 = vrot.slane %v2920, 5
        %v2923 = vsel %vm1367, %v2918, %v2922
        %v2925 = vshrl.u32 %v2568, 16
        %v2927 = vrot.slane %v2925, 4
        %v2928 = vshll.u32 %v2568, 16
        %v2930 = vrot.slane %v2928, 5
        %v2931 = vor.u32 %v2927, %v2930
        %v2932 = vrot.slane %v2931, 4
        %v2934 = vshll.u32 %v2569, 16
        %v2936 = vrot.slane %v2934, 5
        %v2937 = vsel %vm1367, %v2932, %v2936
        %v2938 = vshrl.u32 %v2569, 16
        %v2940 = vrot.slane %v2938, 4
        %v2941 = vor.u32 %v2940, %v2936
        %v2942 = vrot.slane %v2941, 4
        %v2944 = vshll.u32 %v2586, 16
        %v2946 = vrot.slane %v2944, 5
        %v2947 = vsel %vm1367, %v2942, %v2946
        %v2949 = vshrl.u32 %v2570, 16
        %v2951 = vrot.slane %v2949, 4
        %v2952 = vshll.u32 %v2570, 16
        %v2954 = vrot.slane %v2952, 5
        %v2955 = vor.u32 %v2951, %v2954
        %v2956 = vrot.slane %v2955, 4
        %v2958 = vshll.u32 %v2571, 16
        %v2960 = vrot.slane %v2958, 5
        %v2961 = vsel %vm1367, %v2956, %v2960
        %v2962 = vshrl.u32 %v2571, 16
        %v2964 = vrot.slane %v2962, 4
        %v2965 = vor.u32 %v2964, %v2960
        %v2966 = vrot.slane %v2965, 4
        %v2968 = vshll.u32 %v2587, 16
        %v2970 = vrot.slane %v2968, 5
        %v2971 = vsel %vm1367, %v2966, %v2970
        %v2972 = vld [vmem:[%s2539] sm:$0xe]
        %v2973 = vld [vmem:[%s2539 + $0xc] sm:$0xe]
        %v2974 = vld [vmem:[%s2539 + $0x18] sm:$0xe]
        %v2975 = vld [vmem:[%s2539 + $0x24] sm:$0xe]
        %v2976 = vld [vmem:[%s2539 + $0x30] sm:$0xe]
        %v2977 = vld [vmem:[%s2539 + $0x3c] sm:$0xe]
        %v2978 = vld [vmem:[%s2539 + $0x48] sm:$0xe]
        %v2979 = vld [vmem:[%s2539 + $0x54] sm:$0xe]
        %v2980 = vld [vmem:[%s2539 + $0x60] sm:$0xe]
        %v2981 = vld [vmem:[%s2539 + $0x6c] sm:$0xe]
        %v2982 = vld [vmem:[%s2539 + $0x78] sm:$0xe]
        %v2983 = vld [vmem:[%s2539 + $0x84] sm:$0xe]
        %v2984 = vld [vmem:[%s2539 + $0x90] sm:$0xe]
        %v2985 = vld [vmem:[%s2539 + $0x9c] sm:$0xe]
        %v2986 = vld [vmem:[%s2539 + $0xa8] sm:$0xe]
        %v2987 = vld [vmem:[%s2539 + $0xb4] sm:$0xe]
        %v3036 = vrot.slane %v2972, 5
        %v3037 = vrot.slane %v3036, 4
        %v3038 = vrot.slane %v2541, 5
        %v3039 = vsel %vm1818, %v3037, %v3038
        %v3040 = vrot.slane %v3038, 4
        %v3041 = vrot.slane %v2572, 5
        %v3042 = vsel %vm1818, %v3040, %v3041
        %v3043 = vrot.slane %v2973, 5
        %v3044 = vrot.slane %v3043, 4
        %v3045 = vrot.slane %v2543, 5
        %v3046 = vsel %vm1818, %v3044, %v3045
        %v3047 = vrot.slane %v3045, 4
        %v3048 = vrot.slane %v2573, 5
        %v3049 = vsel %vm1818, %v3047, %v3048
        %v3050 = vrot.slane %v2974, 5
        %v3051 = vrot.slane %v3050, 4
        %v3052 = vrot.slane %v2545, 5
        %v3053 = vsel %vm1818, %v3051, %v3052
        %v3054 = vrot.slane %v3052, 4
        %v3055 = vrot.slane %v2574, 5
        %v3056 = vsel %vm1818, %v3054, %v3055
        %v3057 = vrot.slane %v2975, 5
        %v3058 = vrot.slane %v3057, 4
        %v3059 = vrot.slane %v2547, 5
        %v3060 = vsel %vm1818, %v3058, %v3059
        %v3061 = vrot.slane %v3059, 4
        %v3062 = vrot.slane %v2575, 5
        %v3063 = vsel %vm1818, %v3061, %v3062
        %v3064 = vrot.slane %v2976, 5
        %v3065 = vrot.slane %v3064, 4
        %v3066 = vrot.slane %v2549, 5
        %v3067 = vsel %vm1818, %v3065, %v3066
        %v3068 = vrot.slane %v3066, 4
        %v3069 = vrot.slane %v2576, 5
        %v3070 = vsel %vm1818, %v3068, %v3069
        %v3071 = vrot.slane %v2977, 5
        %v3072 = vrot.slane %v3071, 4
        %v3073 = vrot.slane %v2551, 5
        %v3074 = vsel %vm1818, %v3072, %v3073
        %v3075 = vrot.slane %v3073, 4
        %v3076 = vrot.slane %v2577, 5
        %v3077 = vsel %vm1818, %v3075, %v3076
        %v3078 = vrot.slane %v2978, 5
        %v3079 = vrot.slane %v3078, 4
        %v3080 = vrot.slane %v2553, 5
        %v3081 = vsel %vm1818, %v3079, %v3080
        %v3082 = vrot.slane %v3080, 4
        %v3083 = vrot.slane %v2578, 5
        %v3084 = vsel %vm1818, %v3082, %v3083
        %v3085 = vrot.slane %v2979, 5
        %v3086 = vrot.slane %v3085, 4
        %v3087 = vrot.slane %v2555, 5
        %v3088 = vsel %vm1818, %v3086, %v3087
        %v3089 = vrot.slane %v3087, 4
        %v3090 = vrot.slane %v2579, 5
        %v3091 = vsel %vm1818, %v3089, %v3090
        %v3092 = vrot.slane %v2980, 5
        %v3093 = vrot.slane %v3092, 4
        %v3094 = vrot.slane %v2557, 5
        %v3095 = vsel %vm1818, %v3093, %v3094
        %v3096 = vrot.slane %v3094, 4
        %v3097 = vrot.slane %v2580, 5
        %v3098 = vsel %vm1818, %v3096, %v3097
        %v3099 = vrot.slane %v2981, 5
        %v3100 = vrot.slane %v3099, 4
        %v3101 = vrot.slane %v2559, 5
        %v3102 = vsel %vm1818, %v3100, %v3101
        %v3103 = vrot.slane %v3101, 4
        %v3104 = vrot.slane %v2581, 5
        %v3105 = vsel %vm1818, %v3103, %v3104
        %v3106 = vrot.slane %v2982, 5
        %v3107 = vrot.slane %v3106, 4
        %v3108 = vrot.slane %v2561, 5
        %v3109 = vsel %vm1818, %v3107, %v3108
        %v3110 = vrot.slane %v3108, 4
        %v3111 = vrot.slane %v2582, 5
        %v3112 = vsel %vm1818, %v3110, %v3111
        %v3113 = vrot.slane %v2983, 5
        %v3114 = vrot.slane %v3113, 4
        %v3115 = vrot.slane %v2563, 5
        %v3116 = vsel %vm1818, %v3114, %v3115
        %v3117 = vrot.slane %v3115, 4
        %v3118 = vrot.slane %v2583, 5
        %v3119 = vsel %vm1818, %v3117, %v3118
        %v3120 = vrot.slane %v2984, 5
        %v3121 = vrot.slane %v3120, 4
        %v3122 = vrot.slane %v2565, 5
        %v3123 = vsel %vm1818, %v3121, %v3122
        %v3124 = vrot.slane %v3122, 4
        %v3125 = vrot.slane %v2584, 5
        %v3126 = vsel %vm1818, %v3124, %v3125
        %v3127 = vrot.slane %v2985, 5
        %v3128 = vrot.slane %v3127, 4
        %v3129 = vrot.slane %v2567, 5
        %v3130 = vsel %vm1818, %v3128, %v3129
        %v3131 = vrot.slane %v3129, 4
        %v3132 = vrot.slane %v2585, 5
        %v3133 = vsel %vm1818, %v3131, %v3132
        %v3134 = vrot.slane %v2986, 5
        %v3135 = vrot.slane %v3134, 4
        %v3136 = vrot.slane %v2569, 5
        %v3137 = vsel %vm1818, %v3135, %v3136
        %v3138 = vrot.slane %v3136, 4
        %v3139 = vrot.slane %v2586, 5
        %v3140 = vsel %vm1818, %v3138, %v3139
        %v3141 = vrot.slane %v2987, 5
        %v3142 = vrot.slane %v3141, 4
        %v3143 = vrot.slane %v2571, 5
        %v3144 = vsel %vm1818, %v3142, %v3143
        %v3145 = vrot.slane %v3143, 4
        %v3146 = vrot.slane %v2587, 5
        %v3147 = vsel %vm1818, %v3145, %v3146
        %v3164 = vunpack.c.l.b16 %v1317
        %v3165 = vunpack.c.l.b16 %v1318
        %v3166 = vunpack.c.l.b16 %v1319
        %v3167 = vunpack.c.l.b16 %v1320
        %v3168 = vunpack.c.l.b16 %v1321
        %v3169 = vunpack.c.l.b16 %v1322
        %v3170 = vunpack.c.l.b16 %v1323
        %v3171 = vunpack.c.l.b16 %v1324
        %v3172 = vunpack.c.l.b16 %v1325
        %v3173 = vunpack.c.l.b16 %v1326
        %v3174 = vunpack.c.l.b16 %v1327
        %v3175 = vunpack.c.l.b16 %v1328
        %v3176 = vunpack.c.l.b16 %v1329
        %v3177 = vunpack.c.l.b16 %v1330
        %v3178 = vunpack.c.l.b16 %v1331
        %v3179 = vunpack.c.l.b16 %v1332
        %v3180 = vunpack.c.l.b16 %v1333
        %v3181 = vunpack.c.l.b16 %v1334
        %v3182 = vunpack.c.l.b16 %v1335
        %v3183 = vunpack.c.l.b16 %v1336
        %v3184 = vunpack.c.l.b16 %v1337
        %v3185 = vunpack.c.l.b16 %v1338
        %v3186 = vunpack.c.l.b16 %v1339
        %v3187 = vunpack.c.l.b16 %v1340
        %v3188 = vunpack.c.l.b16 %v1341
        %v3189 = vunpack.c.l.b16 %v1342
        %v3190 = vunpack.c.l.b16 %v1343
        %v3191 = vunpack.c.l.b16 %v1344
        %v3192 = vunpack.c.l.b16 %v1345
        %v3193 = vunpack.c.l.b16 %v1346
        %v3194 = vunpack.c.l.b16 %v1347
        %v3195 = vunpack.c.l.b16 %v1348
        %v3196 = vpack.c.b16 %v3165, %v3164
        %v3197 = vpack.c.b16 %v3167, %v3166
        %v3198 = vpack.c.b16 %v3169, %v3168
        %v3199 = vpack.c.b16 %v3171, %v3170
        %v3200 = vpack.c.b16 %v3173, %v3172
        %v3201 = vpack.c.b16 %v3175, %v3174
        %v3202 = vpack.c.b16 %v3177, %v3176
        %v3203 = vpack.c.b16 %v3179, %v3178
        %v3204 = vpack.c.b16 %v3181, %v3180
        %v3205 = vpack.c.b16 %v3183, %v3182
        %v3206 = vpack.c.b16 %v3185, %v3184
        %v3207 = vpack.c.b16 %v3187, %v3186
        %v3208 = vpack.c.b16 %v3189, %v3188
        %v3209 = vpack.c.b16 %v3191, %v3190
        %v3210 = vpack.c.b16 %v3193, %v3192
        %v3211 = vpack.c.b16 %v3195, %v3194
        %v3212 = vunpack.c.l.b16 %v1381
        %v3213 = vunpack.c.l.b16 %v1391
        %v3214 = vunpack.c.l.b16 %v1405
        %v3215 = vunpack.c.l.b16 %v1415
        %v3216 = vunpack.c.l.b16 %v1429
        %v3217 = vunpack.c.l.b16 %v1439
        %v3218 = vunpack.c.l.b16 %v1453
        %v3219 = vunpack.c.l.b16 %v1463
        %v3220 = vunpack.c.l.b16 %v1477
        %v3221 = vunpack.c.l.b16 %v1487
        %v3222 = vunpack.c.l.b16 %v1501
        %v3223 = vunpack.c.l.b16 %v1511
        %v3224 = vunpack.c.l.b16 %v1525
        %v3225 = vunpack.c.l.b16 %v1535
        %v3226 = vunpack.c.l.b16 %v1549
        %v3227 = vunpack.c.l.b16 %v1559
        %v3228 = vunpack.c.l.b16 %v1573
        %v3229 = vunpack.c.l.b16 %v1583
        %v3230 = vunpack.c.l.b16 %v1597
        %v3231 = vunpack.c.l.b16 %v1607
        %v3232 = vunpack.c.l.b16 %v1621
        %v3233 = vunpack.c.l.b16 %v1631
        %v3234 = vunpack.c.l.b16 %v1645
        %v3235 = vunpack.c.l.b16 %v1655
        %v3236 = vunpack.c.l.b16 %v1669
        %v3237 = vunpack.c.l.b16 %v1679
        %v3238 = vunpack.c.l.b16 %v1693
        %v3239 = vunpack.c.l.b16 %v1703
        %v3240 = vunpack.c.l.b16 %v1717
        %v3241 = vunpack.c.l.b16 %v1727
        %v3242 = vunpack.c.l.b16 %v1741
        %v3243 = vunpack.c.l.b16 %v1751
        %v3244 = vpack.c.b16 %v3213, %v3212
        %v3245 = vpack.c.b16 %v3215, %v3214
        %v3246 = vpack.c.b16 %v3217, %v3216
        %v3247 = vpack.c.b16 %v3219, %v3218
        %v3248 = vpack.c.b16 %v3221, %v3220
        %v3249 = vpack.c.b16 %v3223, %v3222
        %v3250 = vpack.c.b16 %v3225, %v3224
        %v3251 = vpack.c.b16 %v3227, %v3226
        %v3252 = vpack.c.b16 %v3229, %v3228
        %v3253 = vpack.c.b16 %v3231, %v3230
        %v3254 = vpack.c.b16 %v3233, %v3232
        %v3255 = vpack.c.b16 %v3235, %v3234
        %v3256 = vpack.c.b16 %v3237, %v3236
        %v3257 = vpack.c.b16 %v3239, %v3238
        %v3258 = vpack.c.b16 %v3241, %v3240
        %v3259 = vpack.c.b16 %v3243, %v3242
        %3260 = vrot.lane.b32.xlu0 %v3244, 32
        %v3261 = vpop.permute.xlu0 %3260
        %3262 = vrot.lane.b32.xlu0 %v3245, 32
        %v3263 = vpop.permute.xlu0 %3262
        %3264 = vrot.lane.b32.xlu0 %v3246, 32
        %v3265 = vpop.permute.xlu0 %3264
        %3266 = vrot.lane.b32.xlu0 %v3247, 32
        %v3267 = vpop.permute.xlu0 %3266
        %3268 = vrot.lane.b32.xlu0 %v3248, 32
        %v3269 = vpop.permute.xlu0 %3268
        %3270 = vrot.lane.b32.xlu0 %v3249, 32
        %v3271 = vpop.permute.xlu0 %3270
        %3272 = vrot.lane.b32.xlu0 %v3250, 32
        %v3273 = vpop.permute.xlu0 %3272
        %3274 = vrot.lane.b32.xlu0 %v3251, 32
        %v3275 = vpop.permute.xlu0 %3274
        %3276 = vrot.lane.b32.xlu0 %v3252, 32
        %v3277 = vpop.permute.xlu0 %3276
        %3278 = vrot.lane.b32.xlu0 %v3253, 32
        %v3279 = vpop.permute.xlu0 %3278
        %3280 = vrot.lane.b32.xlu0 %v3254, 32
        %v3281 = vpop.permute.xlu0 %3280
        %3282 = vrot.lane.b32.xlu0 %v3255, 32
        %v3283 = vpop.permute.xlu0 %3282
        %3284 = vrot.lane.b32.xlu0 %v3256, 32
        %v3285 = vpop.permute.xlu0 %3284
        %3286 = vrot.lane.b32.xlu0 %v3257, 32
        %v3287 = vpop.permute.xlu0 %3286
        %3288 = vrot.lane.b32.xlu0 %v3258, 32
        %v3289 = vpop.permute.xlu0 %3288
        %3290 = vrot.lane.b32.xlu0 %v3259, 32
        %v3291 = vpop.permute.xlu0 %3290
        %v3292 = vunpack.c.l.b16 %v1822
        %v3293 = vunpack.c.l.b16 %v1825
        %v3294 = vunpack.c.l.b16 %v1829
        %v3295 = vunpack.c.l.b16 %v1832
        %v3296 = vunpack.c.l.b16 %v1836
        %v3297 = vunpack.c.l.b16 %v1839
        %v3298 = vunpack.c.l.b16 %v1843
        %v3299 = vunpack.c.l.b16 %v1846
        %v3300 = vunpack.c.l.b16 %v1850
        %v3301 = vunpack.c.l.b16 %v1853
        %v3302 = vunpack.c.l.b16 %v1857
        %v3303 = vunpack.c.l.b16 %v1860
        %v3304 = vunpack.c.l.b16 %v1864
        %v3305 = vunpack.c.l.b16 %v1867
        %v3306 = vunpack.c.l.b16 %v1871
        %v3307 = vunpack.c.l.b16 %v1874
        %v3308 = vunpack.c.l.b16 %v1878
        %v3309 = vunpack.c.l.b16 %v1881
        %v3310 = vunpack.c.l.b16 %v1885
        %v3311 = vunpack.c.l.b16 %v1888
        %v3312 = vunpack.c.l.b16 %v1892
        %v3313 = vunpack.c.l.b16 %v1895
        %v3314 = vunpack.c.l.b16 %v1899
        %v3315 = vunpack.c.l.b16 %v1902
        %v3316 = vunpack.c.l.b16 %v1906
        %v3317 = vunpack.c.l.b16 %v1909
        %v3318 = vunpack.c.l.b16 %v1913
        %v3319 = vunpack.c.l.b16 %v1916
        %v3320 = vunpack.c.l.b16 %v1920
        %v3321 = vunpack.c.l.b16 %v1923
        %v3322 = vunpack.c.l.b16 %v1927
        %v3323 = vunpack.c.l.b16 %v1930
        %v3324 = vpack.c.b16 %v3293, %v3292
        %v3325 = vpack.c.b16 %v3295, %v3294
        %v3326 = vpack.c.b16 %v3297, %v3296
        %v3327 = vpack.c.b16 %v3299, %v3298
        %v3328 = vpack.c.b16 %v3301, %v3300
        %v3329 = vpack.c.b16 %v3303, %v3302
        %v3330 = vpack.c.b16 %v3305, %v3304
        %v3331 = vpack.c.b16 %v3307, %v3306
        %v3332 = vpack.c.b16 %v3309, %v3308
        %v3333 = vpack.c.b16 %v3311, %v3310
        %v3334 = vpack.c.b16 %v3313, %v3312
        %v3335 = vpack.c.b16 %v3315, %v3314
        %v3336 = vpack.c.b16 %v3317, %v3316
        %v3337 = vpack.c.b16 %v3319, %v3318
        %v3338 = vpack.c.b16 %v3321, %v3320
        %v3339 = vpack.c.b16 %v3323, %v3322
        %3340 = vrot.lane.b32.xlu0 %v3324, 64
        %v3341 = vpop.permute.xlu0 %3340
        %3342 = vrot.lane.b32.xlu0 %v3325, 64
        %v3343 = vpop.permute.xlu0 %3342
        %3344 = vrot.lane.b32.xlu0 %v3326, 64
        %v3345 = vpop.permute.xlu0 %3344
        %3346 = vrot.lane.b32.xlu0 %v3327, 64
        %v3347 = vpop.permute.xlu0 %3346
        %3348 = vrot.lane.b32.xlu0 %v3328, 64
        %v3349 = vpop.permute.xlu0 %3348
        %3350 = vrot.lane.b32.xlu0 %v3329, 64
        %v3351 = vpop.permute.xlu0 %3350
        %3352 = vrot.lane.b32.xlu0 %v3330, 64
        %v3353 = vpop.permute.xlu0 %3352
        %3354 = vrot.lane.b32.xlu0 %v3331, 64
        %v3355 = vpop.permute.xlu0 %3354
        %3356 = vrot.lane.b32.xlu0 %v3332, 64
        %v3357 = vpop.permute.xlu0 %3356
        %3358 = vrot.lane.b32.xlu0 %v3333, 64
        %v3359 = vpop.permute.xlu0 %3358
        %3360 = vrot.lane.b32.xlu0 %v3334, 64
        %v3361 = vpop.permute.xlu0 %3360
        %3362 = vrot.lane.b32.xlu0 %v3335, 64
        %v3363 = vpop.permute.xlu0 %3362
        %3364 = vrot.lane.b32.xlu0 %v3336, 64
        %v3365 = vpop.permute.xlu0 %3364
        %3366 = vrot.lane.b32.xlu0 %v3337, 64
        %v3367 = vpop.permute.xlu0 %3366
        %3368 = vrot.lane.b32.xlu0 %v3338, 64
        %v3369 = vpop.permute.xlu0 %3368
        %3370 = vrot.lane.b32.xlu0 %v3339, 64
        %v3371 = vpop.permute.xlu0 %3370
        %v3388 = vunpack.c.l.b16 %v1931
        %v3389 = vunpack.c.l.b16 %v1932
        %v3390 = vunpack.c.l.b16 %v1933
        %v3391 = vunpack.c.l.b16 %v1934
        %v3392 = vunpack.c.l.b16 %v1935
        %v3393 = vunpack.c.l.b16 %v1936
        %v3394 = vunpack.c.l.b16 %v1937
        %v3395 = vunpack.c.l.b16 %v1938
        %v3396 = vunpack.c.l.b16 %v1939
        %v3397 = vunpack.c.l.b16 %v1940
        %v3398 = vunpack.c.l.b16 %v1941
        %v3399 = vunpack.c.l.b16 %v1942
        %v3400 = vunpack.c.l.b16 %v1943
        %v3401 = vunpack.c.l.b16 %v1944
        %v3402 = vunpack.c.l.b16 %v1945
        %v3403 = vunpack.c.l.b16 %v1946
        %v3404 = vunpack.c.l.b16 %v1947
        %v3405 = vunpack.c.l.b16 %v1948
        %v3406 = vunpack.c.l.b16 %v1949
        %v3407 = vunpack.c.l.b16 %v1950
        %v3408 = vunpack.c.l.b16 %v1951
        %v3409 = vunpack.c.l.b16 %v1952
        %v3410 = vunpack.c.l.b16 %v1953
        %v3411 = vunpack.c.l.b16 %v1954
        %v3412 = vunpack.c.l.b16 %v1955
        %v3413 = vunpack.c.l.b16 %v1956
        %v3414 = vunpack.c.l.b16 %v1957
        %v3415 = vunpack.c.l.b16 %v1958
        %v3416 = vunpack.c.l.b16 %v1959
        %v3417 = vunpack.c.l.b16 %v1960
        %v3418 = vunpack.c.l.b16 %v1961
        %v3419 = vunpack.c.l.b16 %v1962
        %v3420 = vpack.c.b16 %v3389, %v3388
        %v3421 = vpack.c.b16 %v3391, %v3390
        %v3422 = vpack.c.b16 %v3393, %v3392
        %v3423 = vpack.c.b16 %v3395, %v3394
        %v3424 = vpack.c.b16 %v3397, %v3396
        %v3425 = vpack.c.b16 %v3399, %v3398
        %v3426 = vpack.c.b16 %v3401, %v3400
        %v3427 = vpack.c.b16 %v3403, %v3402
        %v3428 = vpack.c.b16 %v3405, %v3404
        %v3429 = vpack.c.b16 %v3407, %v3406
        %v3430 = vpack.c.b16 %v3409, %v3408
        %v3431 = vpack.c.b16 %v3411, %v3410
        %v3432 = vpack.c.b16 %v3413, %v3412
        %v3433 = vpack.c.b16 %v3415, %v3414
        %v3434 = vpack.c.b16 %v3417, %v3416
        %v3435 = vpack.c.b16 %v3419, %v3418
        %3436 = vrot.lane.b32.xlu0 %v3420, 96
        %v3437 = vpop.permute.xlu0 %3436
        %3438 = vrot.lane.b32.xlu0 %v3421, 96
        %v3439 = vpop.permute.xlu0 %3438
        %3440 = vrot.lane.b32.xlu0 %v3422, 96
        %v3441 = vpop.permute.xlu0 %3440
        %3442 = vrot.lane.b32.xlu0 %v3423, 96
        %v3443 = vpop.permute.xlu0 %3442
        %3444 = vrot.lane.b32.xlu0 %v3424, 96
        %v3445 = vpop.permute.xlu0 %3444
        %3446 = vrot.lane.b32.xlu0 %v3425, 96
        %v3447 = vpop.permute.xlu0 %3446
        %3448 = vrot.lane.b32.xlu0 %v3426, 96
        %v3449 = vpop.permute.xlu0 %3448
        %3450 = vrot.lane.b32.xlu0 %v3427, 96
        %v3451 = vpop.permute.xlu0 %3450
        %3452 = vrot.lane.b32.xlu0 %v3428, 96
        %v3453 = vpop.permute.xlu0 %3452
        %3454 = vrot.lane.b32.xlu0 %v3429, 96
        %v3455 = vpop.permute.xlu0 %3454
        %3456 = vrot.lane.b32.xlu0 %v3430, 96
        %v3457 = vpop.permute.xlu0 %3456
        %3458 = vrot.lane.b32.xlu0 %v3431, 96
        %v3459 = vpop.permute.xlu0 %3458
        %3460 = vrot.lane.b32.xlu0 %v3432, 96
        %v3461 = vpop.permute.xlu0 %3460
        %3462 = vrot.lane.b32.xlu0 %v3433, 96
        %v3463 = vpop.permute.xlu0 %3462
        %3464 = vrot.lane.b32.xlu0 %v3434, 96
        %v3465 = vpop.permute.xlu0 %3464
        %3466 = vrot.lane.b32.xlu0 %v3435, 96
        %v3467 = vpop.permute.xlu0 %3466
        %v3468 = vunpack.c.l.b16 %v1992
        %v3469 = vunpack.c.l.b16 %v2002
        %v3470 = vunpack.c.l.b16 %v2016
        %v3471 = vunpack.c.l.b16 %v2026
        %v3472 = vunpack.c.l.b16 %v2040
        %v3473 = vunpack.c.l.b16 %v2050
        %v3474 = vunpack.c.l.b16 %v2064
        %v3475 = vunpack.c.l.b16 %v2074
        %v3476 = vunpack.c.l.b16 %v2088
        %v3477 = vunpack.c.l.b16 %v2098
        %v3478 = vunpack.c.l.b16 %v2112
        %v3479 = vunpack.c.l.b16 %v2122
        %v3480 = vunpack.c.l.b16 %v2136
        %v3481 = vunpack.c.l.b16 %v2146
        %v3482 = vunpack.c.l.b16 %v2160
        %v3483 = vunpack.c.l.b16 %v2170
        %v3484 = vunpack.c.l.b16 %v2184
        %v3485 = vunpack.c.l.b16 %v2194
        %v3486 = vunpack.c.l.b16 %v2208
        %v3487 = vunpack.c.l.b16 %v2218
        %v3488 = vunpack.c.l.b16 %v2232
        %v3489 = vunpack.c.l.b16 %v2242
        %v3490 = vunpack.c.l.b16 %v2256
        %v3491 = vunpack.c.l.b16 %v2266
        %v3492 = vunpack.c.l.b16 %v2280
        %v3493 = vunpack.c.l.b16 %v2290
        %v3494 = vunpack.c.l.b16 %v2304
        %v3495 = vunpack.c.l.b16 %v2314
        %v3496 = vunpack.c.l.b16 %v2328
        %v3497 = vunpack.c.l.b16 %v2338
        %v3498 = vunpack.c.l.b16 %v2352
        %v3499 = vunpack.c.l.b16 %v2362
        %v3500 = vpack.c.b16 %v3469, %v3468
        %v3501 = vpack.c.b16 %v3471, %v3470
        %v3502 = vpack.c.b16 %v3473, %v3472
        %v3503 = vpack.c.b16 %v3475, %v3474
        %v3504 = vpack.c.b16 %v3477, %v3476
        %v3505 = vpack.c.b16 %v3479, %v3478
        %v3506 = vpack.c.b16 %v3481, %v3480
        %v3507 = vpack.c.b16 %v3483, %v3482
        %v3508 = vpack.c.b16 %v3485, %v3484
        %v3509 = vpack.c.b16 %v3487, %v3486
        %v3510 = vpack.c.b16 %v3489, %v3488
        %v3511 = vpack.c.b16 %v3491, %v3490
        %v3512 = vpack.c.b16 %v3493, %v3492
        %v3513 = vpack.c.b16 %v3495, %v3494
        %v3514 = vpack.c.b16 %v3497, %v3496
        %v3515 = vpack.c.b16 %v3499, %v3498
        %v3516 = vunpack.c.l.b16 %v2430
        %v3517 = vunpack.c.l.b16 %v2433
        %v3518 = vunpack.c.l.b16 %v2437
        %v3519 = vunpack.c.l.b16 %v2440
        %v3520 = vunpack.c.l.b16 %v2444
        %v3521 = vunpack.c.l.b16 %v2447
        %v3522 = vunpack.c.l.b16 %v2451
        %v3523 = vunpack.c.l.b16 %v2454
        %v3524 = vunpack.c.l.b16 %v2458
        %v3525 = vunpack.c.l.b16 %v2461
        %v3526 = vunpack.c.l.b16 %v2465
        %v3527 = vunpack.c.l.b16 %v2468
        %v3528 = vunpack.c.l.b16 %v2472
        %v3529 = vunpack.c.l.b16 %v2475
        %v3530 = vunpack.c.l.b16 %v2479
        %v3531 = vunpack.c.l.b16 %v2482
        %v3532 = vunpack.c.l.b16 %v2486
        %v3533 = vunpack.c.l.b16 %v2489
        %v3534 = vunpack.c.l.b16 %v2493
        %v3535 = vunpack.c.l.b16 %v2496
        %v3536 = vunpack.c.l.b16 %v2500
        %v3537 = vunpack.c.l.b16 %v2503
        %v3538 = vunpack.c.l.b16 %v2507
        %v3539 = vunpack.c.l.b16 %v2510
        %v3540 = vunpack.c.l.b16 %v2514
        %v3541 = vunpack.c.l.b16 %v2517
        %v3542 = vunpack.c.l.b16 %v2521
        %v3543 = vunpack.c.l.b16 %v2524
        %v3544 = vunpack.c.l.b16 %v2528
        %v3545 = vunpack.c.l.b16 %v2531
        %v3546 = vunpack.c.l.b16 %v2535
        %v3547 = vunpack.c.l.b16 %v2538
        %v3548 = vpack.c.b16 %v3517, %v3516
        %v3549 = vpack.c.b16 %v3519, %v3518
        %v3550 = vpack.c.b16 %v3521, %v3520
        %v3551 = vpack.c.b16 %v3523, %v3522
        %v3552 = vpack.c.b16 %v3525, %v3524
        %v3553 = vpack.c.b16 %v3527, %v3526
        %v3554 = vpack.c.b16 %v3529, %v3528
        %v3555 = vpack.c.b16 %v3531, %v3530
        %v3556 = vpack.c.b16 %v3533, %v3532
        %v3557 = vpack.c.b16 %v3535, %v3534
        %v3558 = vpack.c.b16 %v3537, %v3536
        %v3559 = vpack.c.b16 %v3539, %v3538
        %v3560 = vpack.c.b16 %v3541, %v3540
        %v3561 = vpack.c.b16 %v3543, %v3542
        %v3562 = vpack.c.b16 %v3545, %v3544
        %v3563 = vpack.c.b16 %v3547, %v3546
        %3564 = vrot.lane.b32.xlu0 %v3548, 32
        %v3565 = vpop.permute.xlu0 %3564
        %3566 = vrot.lane.b32.xlu0 %v3549, 32
        %v3567 = vpop.permute.xlu0 %3566
        %3568 = vrot.lane.b32.xlu0 %v3550, 32
        %v3569 = vpop.permute.xlu0 %3568
        %3570 = vrot.lane.b32.xlu0 %v3551, 32
        %v3571 = vpop.permute.xlu0 %3570
        %3572 = vrot.lane.b32.xlu0 %v3552, 32
        %v3573 = vpop.permute.xlu0 %3572
        %3574 = vrot.lane.b32.xlu0 %v3553, 32
        %v3575 = vpop.permute.xlu0 %3574
        %3576 = vrot.lane.b32.xlu0 %v3554, 32
        %v3577 = vpop.permute.xlu0 %3576
        %3578 = vrot.lane.b32.xlu0 %v3555, 32
        %v3579 = vpop.permute.xlu0 %3578
        %3580 = vrot.lane.b32.xlu0 %v3556, 32
        %v3581 = vpop.permute.xlu0 %3580
        %3582 = vrot.lane.b32.xlu0 %v3557, 32
        %v3583 = vpop.permute.xlu0 %3582
        %3584 = vrot.lane.b32.xlu0 %v3558, 32
        %v3585 = vpop.permute.xlu0 %3584
        %3586 = vrot.lane.b32.xlu0 %v3559, 32
        %v3587 = vpop.permute.xlu0 %3586
        %3588 = vrot.lane.b32.xlu0 %v3560, 32
        %v3589 = vpop.permute.xlu0 %3588
        %3590 = vrot.lane.b32.xlu0 %v3561, 32
        %v3591 = vpop.permute.xlu0 %3590
        %3592 = vrot.lane.b32.xlu0 %v3562, 32
        %v3593 = vpop.permute.xlu0 %3592
        %3594 = vrot.lane.b32.xlu0 %v3563, 32
        %v3595 = vpop.permute.xlu0 %3594
        %v3612 = vunpack.c.l.b16 %v2540
        %v3613 = vunpack.c.l.b16 %v2541
        %v3614 = vunpack.c.l.b16 %v2542
        %v3615 = vunpack.c.l.b16 %v2543
        %v3616 = vunpack.c.l.b16 %v2544
        %v3617 = vunpack.c.l.b16 %v2545
        %v3618 = vunpack.c.l.b16 %v2546
        %v3619 = vunpack.c.l.b16 %v2547
        %v3620 = vunpack.c.l.b16 %v2548
        %v3621 = vunpack.c.l.b16 %v2549
        %v3622 = vunpack.c.l.b16 %v2550
        %v3623 = vunpack.c.l.b16 %v2551
        %v3624 = vunpack.c.l.b16 %v2552
        %v3625 = vunpack.c.l.b16 %v2553
        %v3626 = vunpack.c.l.b16 %v2554
        %v3627 = vunpack.c.l.b16 %v2555
        %v3628 = vunpack.c.l.b16 %v2556
        %v3629 = vunpack.c.l.b16 %v2557
        %v3630 = vunpack.c.l.b16 %v2558
        %v3631 = vunpack.c.l.b16 %v2559
        %v3632 = vunpack.c.l.b16 %v2560
        %v3633 = vunpack.c.l.b16 %v2561
        %v3634 = vunpack.c.l.b16 %v2562
        %v3635 = vunpack.c.l.b16 %v2563
        %v3636 = vunpack.c.l.b16 %v2564
        %v3637 = vunpack.c.l.b16 %v2565
        %v3638 = vunpack.c.l.b16 %v2566
        %v3639 = vunpack.c.l.b16 %v2567
        %v3640 = vunpack.c.l.b16 %v2568
        %v3641 = vunpack.c.l.b16 %v2569
        %v3642 = vunpack.c.l.b16 %v2570
        %v3643 = vunpack.c.l.b16 %v2571
        %v3644 = vpack.c.b16 %v3613, %v3612
        %v3645 = vpack.c.b16 %v3615, %v3614
        %v3646 = vpack.c.b16 %v3617, %v3616
        %v3647 = vpack.c.b16 %v3619, %v3618
        %v3648 = vpack.c.b16 %v3621, %v3620
        %v3649 = vpack.c.b16 %v3623, %v3622
        %v3650 = vpack.c.b16 %v3625, %v3624
        %v3651 = vpack.c.b16 %v3627, %v3626
        %v3652 = vpack.c.b16 %v3629, %v3628
        %v3653 = vpack.c.b16 %v3631, %v3630
        %v3654 = vpack.c.b16 %v3633, %v3632
        %v3655 = vpack.c.b16 %v3635, %v3634
        %v3656 = vpack.c.b16 %v3637, %v3636
        %v3657 = vpack.c.b16 %v3639, %v3638
        %v3658 = vpack.c.b16 %v3641, %v3640
        %v3659 = vpack.c.b16 %v3643, %v3642
        %3660 = vrot.lane.b32.xlu0 %v3644, 64
        %v3661 = vpop.permute.xlu0 %3660
        %3662 = vrot.lane.b32.xlu0 %v3645, 64
        %v3663 = vpop.permute.xlu0 %3662
        %3664 = vrot.lane.b32.xlu0 %v3646, 64
        %v3665 = vpop.permute.xlu0 %3664
        %3666 = vrot.lane.b32.xlu0 %v3647, 64
        %v3667 = vpop.permute.xlu0 %3666
        %3668 = vrot.lane.b32.xlu0 %v3648, 64
        %v3669 = vpop.permute.xlu0 %3668
        %3670 = vrot.lane.b32.xlu0 %v3649, 64
        %v3671 = vpop.permute.xlu0 %3670
        %3672 = vrot.lane.b32.xlu0 %v3650, 64
        %v3673 = vpop.permute.xlu0 %3672
        %3674 = vrot.lane.b32.xlu0 %v3651, 64
        %v3675 = vpop.permute.xlu0 %3674
        %3676 = vrot.lane.b32.xlu0 %v3652, 64
        %v3677 = vpop.permute.xlu0 %3676
        %3678 = vrot.lane.b32.xlu0 %v3653, 64
        %v3679 = vpop.permute.xlu0 %3678
        %3680 = vrot.lane.b32.xlu0 %v3654, 64
        %v3681 = vpop.permute.xlu0 %3680
        %3682 = vrot.lane.b32.xlu0 %v3655, 64
        %v3683 = vpop.permute.xlu0 %3682
        %3684 = vrot.lane.b32.xlu0 %v3656, 64
        %v3685 = vpop.permute.xlu0 %3684
        %3686 = vrot.lane.b32.xlu0 %v3657, 64
        %v3687 = vpop.permute.xlu0 %3686
        %3688 = vrot.lane.b32.xlu0 %v3658, 64
        %v3689 = vpop.permute.xlu0 %3688
        %3690 = vrot.lane.b32.xlu0 %v3659, 64
        %v3691 = vpop.permute.xlu0 %3690
        %v3692 = vunpack.c.l.b16 %v2601
        %v3693 = vunpack.c.l.b16 %v2611
        %v3694 = vunpack.c.l.b16 %v2625
        %v3695 = vunpack.c.l.b16 %v2635
        %v3696 = vunpack.c.l.b16 %v2649
        %v3697 = vunpack.c.l.b16 %v2659
        %v3698 = vunpack.c.l.b16 %v2673
        %v3699 = vunpack.c.l.b16 %v2683
        %v3700 = vunpack.c.l.b16 %v2697
        %v3701 = vunpack.c.l.b16 %v2707
        %v3702 = vunpack.c.l.b16 %v2721
        %v3703 = vunpack.c.l.b16 %v2731
        %v3704 = vunpack.c.l.b16 %v2745
        %v3705 = vunpack.c.l.b16 %v2755
        %v3706 = vunpack.c.l.b16 %v2769
        %v3707 = vunpack.c.l.b16 %v2779
        %v3708 = vunpack.c.l.b16 %v2793
        %v3709 = vunpack.c.l.b16 %v2803
        %v3710 = vunpack.c.l.b16 %v2817
        %v3711 = vunpack.c.l.b16 %v2827
        %v3712 = vunpack.c.l.b16 %v2841
        %v3713 = vunpack.c.l.b16 %v2851
        %v3714 = vunpack.c.l.b16 %v2865
        %v3715 = vunpack.c.l.b16 %v2875
        %v3716 = vunpack.c.l.b16 %v2889
        %v3717 = vunpack.c.l.b16 %v2899
        %v3718 = vunpack.c.l.b16 %v2913
        %v3719 = vunpack.c.l.b16 %v2923
        %v3720 = vunpack.c.l.b16 %v2937
        %v3721 = vunpack.c.l.b16 %v2947
        %v3722 = vunpack.c.l.b16 %v2961
        %v3723 = vunpack.c.l.b16 %v2971
        %v3724 = vpack.c.b16 %v3693, %v3692
        %v3725 = vpack.c.b16 %v3695, %v3694
        %v3726 = vpack.c.b16 %v3697, %v3696
        %v3727 = vpack.c.b16 %v3699, %v3698
        %v3728 = vpack.c.b16 %v3701, %v3700
        %v3729 = vpack.c.b16 %v3703, %v3702
        %v3730 = vpack.c.b16 %v3705, %v3704
        %v3731 = vpack.c.b16 %v3707, %v3706
        %v3732 = vpack.c.b16 %v3709, %v3708
        %v3733 = vpack.c.b16 %v3711, %v3710
        %v3734 = vpack.c.b16 %v3713, %v3712
        %v3735 = vpack.c.b16 %v3715, %v3714
        %v3736 = vpack.c.b16 %v3717, %v3716
        %v3737 = vpack.c.b16 %v3719, %v3718
        %v3738 = vpack.c.b16 %v3721, %v3720
        %v3739 = vpack.c.b16 %v3723, %v3722
        %3740 = vrot.lane.b32.xlu0 %v3724, 96
        %v3741 = vpop.permute.xlu0 %3740
        %3742 = vrot.lane.b32.xlu0 %v3725, 96
        %v3743 = vpop.permute.xlu0 %3742
        %3744 = vrot.lane.b32.xlu0 %v3726, 96
        %v3745 = vpop.permute.xlu0 %3744
        %3746 = vrot.lane.b32.xlu0 %v3727, 96
        %v3747 = vpop.permute.xlu0 %3746
        %3748 = vrot.lane.b32.xlu0 %v3728, 96
        %v3749 = vpop.permute.xlu0 %3748
        %3750 = vrot.lane.b32.xlu0 %v3729, 96
        %v3751 = vpop.permute.xlu0 %3750
        %3752 = vrot.lane.b32.xlu0 %v3730, 96
        %v3753 = vpop.permute.xlu0 %3752
        %3754 = vrot.lane.b32.xlu0 %v3731, 96
        %v3755 = vpop.permute.xlu0 %3754
        %3756 = vrot.lane.b32.xlu0 %v3732, 96
        %v3757 = vpop.permute.xlu0 %3756
        %3758 = vrot.lane.b32.xlu0 %v3733, 96
        %v3759 = vpop.permute.xlu0 %3758
        %3760 = vrot.lane.b32.xlu0 %v3734, 96
        %v3761 = vpop.permute.xlu0 %3760
        %3762 = vrot.lane.b32.xlu0 %v3735, 96
        %v3763 = vpop.permute.xlu0 %3762
        %3764 = vrot.lane.b32.xlu0 %v3736, 96
        %v3765 = vpop.permute.xlu0 %3764
        %3766 = vrot.lane.b32.xlu0 %v3737, 96
        %v3767 = vpop.permute.xlu0 %3766
        %3768 = vrot.lane.b32.xlu0 %v3738, 96
        %v3769 = vpop.permute.xlu0 %3768
        %3770 = vrot.lane.b32.xlu0 %v3739, 96
        %v3771 = vpop.permute.xlu0 %3770
        %v3772 = vunpack.c.l.b16 %v3039
        %v3773 = vunpack.c.l.b16 %v3042
        %v3774 = vunpack.c.l.b16 %v3046
        %v3775 = vunpack.c.l.b16 %v3049
        %v3776 = vunpack.c.l.b16 %v3053
        %v3777 = vunpack.c.l.b16 %v3056
        %v3778 = vunpack.c.l.b16 %v3060
        %v3779 = vunpack.c.l.b16 %v3063
        %v3780 = vunpack.c.l.b16 %v3067
        %v3781 = vunpack.c.l.b16 %v3070
        %v3782 = vunpack.c.l.b16 %v3074
        %v3783 = vunpack.c.l.b16 %v3077
        %v3784 = vunpack.c.l.b16 %v3081
        %v3785 = vunpack.c.l.b16 %v3084
        %v3786 = vunpack.c.l.b16 %v3088
        %v3787 = vunpack.c.l.b16 %v3091
        %v3788 = vunpack.c.l.b16 %v3095
        %v3789 = vunpack.c.l.b16 %v3098
        %v3790 = vunpack.c.l.b16 %v3102
        %v3791 = vunpack.c.l.b16 %v3105
        %v3792 = vunpack.c.l.b16 %v3109
        %v3793 = vunpack.c.l.b16 %v3112
        %v3794 = vunpack.c.l.b16 %v3116
        %v3795 = vunpack.c.l.b16 %v3119
        %v3796 = vunpack.c.l.b16 %v3123
        %v3797 = vunpack.c.l.b16 %v3126
        %v3798 = vunpack.c.l.b16 %v3130
        %v3799 = vunpack.c.l.b16 %v3133
        %v3800 = vunpack.c.l.b16 %v3137
        %v3801 = vunpack.c.l.b16 %v3140
        %v3802 = vunpack.c.l.b16 %v3144
        %v3803 = vunpack.c.l.b16 %v3147
        %v3804 = vpack.c.b16 %v3773, %v3772
        %v3805 = vpack.c.b16 %v3775, %v3774
        %v3806 = vpack.c.b16 %v3777, %v3776
        %v3807 = vpack.c.b16 %v3779, %v3778
        %v3808 = vpack.c.b16 %v3781, %v3780
        %v3809 = vpack.c.b16 %v3783, %v3782
        %v3810 = vpack.c.b16 %v3785, %v3784
        %v3811 = vpack.c.b16 %v3787, %v3786
        %v3812 = vpack.c.b16 %v3789, %v3788
        %v3813 = vpack.c.b16 %v3791, %v3790
        %v3814 = vpack.c.b16 %v3793, %v3792
        %v3815 = vpack.c.b16 %v3795, %v3794
        %v3816 = vpack.c.b16 %v3797, %v3796
        %v3817 = vpack.c.b16 %v3799, %v3798
        %v3818 = vpack.c.b16 %v3801, %v3800
        %v3819 = vpack.c.b16 %v3803, %v3802
        %vm3820 = vcmask 261120
        %v3823 = vsel %vm3820, %v3196, %v3261
        %v3826 = vsel %vm3820, %v3197, %v3263
        %v3829 = vsel %vm3820, %v3198, %v3265
        %v3832 = vsel %vm3820, %v3199, %v3267
        %v3835 = vsel %vm3820, %v3200, %v3269
        %v3838 = vsel %vm3820, %v3201, %v3271
        %v3841 = vsel %vm3820, %v3202, %v3273
        %v3844 = vsel %vm3820, %v3203, %v3275
        %v3847 = vsel %vm3820, %v3204, %v3277
        %v3850 = vsel %vm3820, %v3205, %v3279
        %v3853 = vsel %vm3820, %v3206, %v3281
        %v3856 = vsel %vm3820, %v3207, %v3283
        %v3859 = vsel %vm3820, %v3208, %v3285
        %v3862 = vsel %vm3820, %v3209, %v3287
        %v3865 = vsel %vm3820, %v3210, %v3289
        %v3868 = vsel %vm3820, %v3211, %v3291
        %vm3869 = vcmask 523264
        %v3871 = vsel %vm3869, %v3823, %v3341
        %v3873 = vsel %vm3869, %v3826, %v3343
        %v3875 = vsel %vm3869, %v3829, %v3345
        %v3877 = vsel %vm3869, %v3832, %v3347
        %v3879 = vsel %vm3869, %v3835, %v3349
        %v3881 = vsel %vm3869, %v3838, %v3351
        %v3883 = vsel %vm3869, %v3841, %v3353
        %v3885 = vsel %vm3869, %v3844, %v3355
        %v3887 = vsel %vm3869, %v3847, %v3357
        %v3889 = vsel %vm3869, %v3850, %v3359
        %v3891 = vsel %vm3869, %v3853, %v3361
        %v3893 = vsel %vm3869, %v3856, %v3363
        %v3895 = vsel %vm3869, %v3859, %v3365
        %v3897 = vsel %vm3869, %v3862, %v3367
        %v3899 = vsel %vm3869, %v3865, %v3369
        %v3901 = vsel %vm3869, %v3868, %v3371
        %vm3902 = vcmask 785408
        %v3904 = vsel %vm3902, %v3871, %v3437
        %v3907 = vsel %vm3902, %v3873, %v3439
        %v3910 = vsel %vm3902, %v3875, %v3441
        %v3913 = vsel %vm3902, %v3877, %v3443
        %v3916 = vsel %vm3902, %v3879, %v3445
        %v3919 = vsel %vm3902, %v3881, %v3447
        %v3922 = vsel %vm3902, %v3883, %v3449
        %v3925 = vsel %vm3902, %v3885, %v3451
        %v3928 = vsel %vm3902, %v3887, %v3453
        %v3931 = vsel %vm3902, %v3889, %v3455
        %v3934 = vsel %vm3902, %v3891, %v3457
        %v3937 = vsel %vm3902, %v3893, %v3459
        %v3940 = vsel %vm3902, %v3895, %v3461
        %v3943 = vsel %vm3902, %v3897, %v3463
        %v3946 = vsel %vm3902, %v3899, %v3465
        %v3949 = vsel %vm3902, %v3901, %v3467
        %v3953 = vsel %vm3820, %v3500, %v3565
        %v3956 = vsel %vm3820, %v3501, %v3567
        %v3959 = vsel %vm3820, %v3502, %v3569
        %v3962 = vsel %vm3820, %v3503, %v3571
        %v3965 = vsel %vm3820, %v3504, %v3573
        %v3968 = vsel %vm3820, %v3505, %v3575
        %v3971 = vsel %vm3820, %v3506, %v3577
        %v3974 = vsel %vm3820, %v3507, %v3579
        %v3977 = vsel %vm3820, %v3508, %v3581
        %v3980 = vsel %vm3820, %v3509, %v3583
        %v3983 = vsel %vm3820, %v3510, %v3585
        %v3986 = vsel %vm3820, %v3511, %v3587
        %v3989 = vsel %vm3820, %v3512, %v3589
        %v3992 = vsel %vm3820, %v3513, %v3591
        %v3995 = vsel %vm3820, %v3514, %v3593
        %v3998 = vsel %vm3820, %v3515, %v3595
        %v4000 = vsel %vm3869, %v3953, %v3661
        %v4002 = vsel %vm3869, %v3956, %v3663
        %v4004 = vsel %vm3869, %v3959, %v3665
        %v4006 = vsel %vm3869, %v3962, %v3667
        %v4008 = vsel %vm3869, %v3965, %v3669
        %v4010 = vsel %vm3869, %v3968, %v3671
        %v4012 = vsel %vm3869, %v3971, %v3673
        %v4014 = vsel %vm3869, %v3974, %v3675
        %v4016 = vsel %vm3869, %v3977, %v3677
        %v4018 = vsel %vm3869, %v3980, %v3679
        %v4020 = vsel %vm3869, %v3983, %v3681
        %v4022 = vsel %vm3869, %v3986, %v3683
        %v4024 = vsel %vm3869, %v3989, %v3685
        %v4026 = vsel %vm3869, %v3992, %v3687
        %v4028 = vsel %vm3869, %v3995, %v3689
        %v4030 = vsel %vm3869, %v3998, %v3691
        %v4032 = vsel %vm3902, %v4000, %v3741
        %v4035 = vsel %vm3902, %v4002, %v3743
        %v4038 = vsel %vm3902, %v4004, %v3745
        %v4041 = vsel %vm3902, %v4006, %v3747
        %v4044 = vsel %vm3902, %v4008, %v3749
        %v4047 = vsel %vm3902, %v4010, %v3751
        %v4050 = vsel %vm3902, %v4012, %v3753
        %v4053 = vsel %vm3902, %v4014, %v3755
        %v4056 = vsel %vm3902, %v4016, %v3757
        %v4059 = vsel %vm3902, %v4018, %v3759
        %v4062 = vsel %vm3902, %v4020, %v3761
        %v4065 = vsel %vm3902, %v4022, %v3763
        %v4068 = vsel %vm3902, %v4024, %v3765
        %v4071 = vsel %vm3902, %v4026, %v3767
        %v4074 = vsel %vm3902, %v4028, %v3769
        %v4077 = vsel %vm3902, %v4030, %v3771
        %v4079 = vld [vmem:[%s3] sm:$0xf]
        %v4080 = vld [vmem:[%s3 + $0x4] sm:$0xf]
        %v4081 = vld [vmem:[%s3 + $0x8] sm:$0xf]
        %v4082 = vld [vmem:[%s3 + $0xc] sm:$0xf]
        %v4083 = vld [vmem:[%s3 + $0x10] sm:$0xf]
        %v4084 = vld [vmem:[%s3 + $0x14] sm:$0xf]
        %v4085 = vld [vmem:[%s3 + $0x18] sm:$0xf]
        %v4086 = vld [vmem:[%s3 + $0x1c] sm:$0xf]
        %v4087 = vld [vmem:[%s3 + $0x20] sm:$0xf]
        %v4088 = vld [vmem:[%s3 + $0x24] sm:$0xf]
        %v4089 = vld [vmem:[%s3 + $0x28] sm:$0xf]
        %v4090 = vld [vmem:[%s3 + $0x2c] sm:$0xf]
        %v4091 = vld [vmem:[%s3 + $0x30] sm:$0xf]
        %v4092 = vld [vmem:[%s3 + $0x34] sm:$0xf]
        %v4093 = vld [vmem:[%s3 + $0x38] sm:$0xf]
        %v4094 = vld [vmem:[%s3 + $0x3c] sm:$0xf]
        %v4095 = vld [vmem:[%s3 + $0x40] sm:$0xf]
        %v4096 = vld [vmem:[%s3 + $0x44] sm:$0xf]
        %v4097 = vld [vmem:[%s3 + $0x48] sm:$0xf]
        %v4098 = vld [vmem:[%s3 + $0x4c] sm:$0xf]
        %v4099 = vld [vmem:[%s3 + $0x50] sm:$0xf]
        %v4100 = vld [vmem:[%s3 + $0x54] sm:$0xf]
        %v4101 = vld [vmem:[%s3 + $0x58] sm:$0xf]
        %v4102 = vld [vmem:[%s3 + $0x5c] sm:$0xf]
        %v4103 = vld [vmem:[%s3 + $0x60] sm:$0xf]
        %v4104 = vld [vmem:[%s3 + $0x64] sm:$0xf]
        %v4105 = vld [vmem:[%s3 + $0x68] sm:$0xf]
        %v4106 = vld [vmem:[%s3 + $0x6c] sm:$0xf]
        %v4107 = vld [vmem:[%s3 + $0x70] sm:$0xf]
        %v4108 = vld [vmem:[%s3 + $0x74] sm:$0xf]
        %v4109 = vld [vmem:[%s3 + $0x78] sm:$0xf]
        %v4110 = vld [vmem:[%s3 + $0x7c] sm:$0xf]
        %v4111 = vld [vmem:[%s3 + $0x80] sm:$0xf]
        %v4112 = vld [vmem:[%s3 + $0x84] sm:$0xf]
        %v4113 = vld [vmem:[%s3 + $0x88] sm:$0xf]
        %v4114 = vld [vmem:[%s3 + $0x8c] sm:$0xf]
        %v4115 = vld [vmem:[%s4] sm:$0x1]
        %v4117 = vlaneseq
        %v4118 = vshrl.u32 %v4117, 7
        %v4119 = vsub.s32 0, %v4118
        %v4120 = vrot.slane %v4115, %v4119
        %v4158 = vunpack.c.l.b16 %v4079
        %v4159 = vunpack.c.l.b16 %v4080
        %v4160 = vunpack.c.l.b16 %v4081
        %v4161 = vunpack.c.l.b16 %v4082
        %v4162 = vunpack.c.l.b16 %v4083
        %v4163 = vunpack.c.l.b16 %v4084
        %v4164 = vunpack.c.l.b16 %v4085
        %v4165 = vunpack.c.l.b16 %v4086
        %v4166 = vunpack.c.l.b16 %v4087
        %v4167 = vunpack.c.l.b16 %v4088
        %v4168 = vunpack.c.l.b16 %v4089
        %v4169 = vunpack.c.l.b16 %v4090
        %v4170 = vunpack.c.l.b16 %v4091
        %v4171 = vunpack.c.l.b16 %v4092
        %v4172 = vunpack.c.l.b16 %v4093
        %v4173 = vunpack.c.l.b16 %v4094
        %v4174 = vunpack.c.l.b16 %v4095
        %v4175 = vunpack.c.l.b16 %v4096
        %v4176 = vunpack.c.l.b16 %v4097
        %v4177 = vunpack.c.l.b16 %v4098
        %v4178 = vunpack.c.l.b16 %v4099
        %v4179 = vunpack.c.l.b16 %v4100
        %v4180 = vunpack.c.l.b16 %v4101
        %v4181 = vunpack.c.l.b16 %v4102
        %v4182 = vunpack.c.l.b16 %v4103
        %v4183 = vunpack.c.l.b16 %v4104
        %v4184 = vunpack.c.l.b16 %v4105
        %v4185 = vunpack.c.l.b16 %v4106
        %v4186 = vunpack.c.l.b16 %v4107
        %v4187 = vunpack.c.l.b16 %v4108
        %v4188 = vunpack.c.l.b16 %v4109
        %v4189 = vunpack.c.l.b16 %v4110
        %v4190 = vunpack.c.l.b16 %v4111
        %v4191 = vunpack.c.l.b16 %v4112
        %v4192 = vunpack.c.l.b16 %v4113
        %v4193 = vunpack.c.l.b16 %v4114
        %v4194 = vpack.c.b16 %v4159, %v4158
        %v4195 = vpack.c.b16 %v4161, %v4160
        %v4196 = vpack.c.b16 %v4163, %v4162
        %v4197 = vpack.c.b16 %v4165, %v4164
        %v4198 = vpack.c.b16 %v4167, %v4166
        %v4199 = vpack.c.b16 %v4169, %v4168
        %v4200 = vpack.c.b16 %v4171, %v4170
        %v4201 = vpack.c.b16 %v4173, %v4172
        %v4202 = vpack.c.b16 %v4175, %v4174
        %v4203 = vpack.c.b16 %v4177, %v4176
        %v4204 = vpack.c.b16 %v4179, %v4178
        %v4205 = vpack.c.b16 %v4181, %v4180
        %v4206 = vpack.c.b16 %v4183, %v4182
        %v4207 = vpack.c.b16 %v4185, %v4184
        %v4208 = vpack.c.b16 %v4187, %v4186
        %v4209 = vpack.c.b16 %v4189, %v4188
        %v4210 = vpack.c.b16 %v4191, %v4190
        %v4211 = vpack.c.b16 %v4193, %v4192
        %v4231 = vsel %vm3820, %v3804, 0
        %v4234 = vsel %vm3820, %v3805, 0
        %v4237 = vsel %vm3820, %v3806, 0
        %v4240 = vsel %vm3820, %v3807, 0
        %v4243 = vsel %vm3820, %v3808, 0
        %v4246 = vsel %vm3820, %v3809, 0
        %v4249 = vsel %vm3820, %v3810, 0
        %v4252 = vsel %vm3820, %v3811, 0
        %v4255 = vsel %vm3820, %v3812, 0
        %v4258 = vsel %vm3820, %v3813, 0
        %v4261 = vsel %vm3820, %v3814, 0
        %v4264 = vsel %vm3820, %v3815, 0
        %v4267 = vsel %vm3820, %v3816, 0
        %v4270 = vsel %vm3820, %v3817, 0
        %v4273 = vsel %vm3820, %v3818, 0
        %v4276 = vsel %vm3820, %v3819, 0
        %4278 = vmatprep.subr.bf16.mxu0 0
        %4279 = vmatpush1.bf16.msra.mxu0 %v4194
        %4280 = vmatprep.subr.bf16.mxu0 0
        %4281 = vmatpush1.bf16.msra.mxu0 %v4195
        %4282 = vmatprep.subr.bf16.mxu0 0
        %4283 = vmatpush1.bf16.msra.mxu0 %v4196
        %4284 = vmatprep.subr.bf16.mxu0 0
        %4285 = vmatpush1.bf16.msra.mxu0 %v4197
        %4286 = vmatprep.subr.bf16.mxu0 0
        %4287 = vmatpush1.bf16.msra.mxu0 %v4198
        %4288 = vmatprep.subr.bf16.mxu0 0
        %4289 = vmatpush1.bf16.msra.mxu0 %v4199
        %4290 = vmatprep.subr.bf16.mxu0 0
        %4291 = vmatpush1.bf16.msra.mxu0 %v4200
        %4292 = vmatprep.subr.bf16.mxu0 0
        %4293 = vmatpush1.bf16.msra.mxu0 %v4201
        %4294 = vmatprep.subr.bf16.mxu0 0
        %4295 = vmatpush1.bf16.msra.mxu0 %v4202
        %4296 = vmatprep.subr.bf16.mxu0 0
        %4297 = vmatpush1.bf16.msra.mxu0 %v4203
        %4298 = vmatprep.subr.bf16.mxu0 0
        %4299 = vmatpush1.bf16.msra.mxu0 %v4204
        %4300 = vmatprep.subr.bf16.mxu0 0
        %4301 = vmatpush1.bf16.msra.mxu0 %v4205
        %4302 = vmatprep.subr.bf16.mxu0 0
        %4303 = vmatpush1.bf16.msra.mxu0 %v4206
        %4304 = vmatprep.subr.bf16.mxu0 0
        %4305 = vmatpush1.bf16.msra.mxu0 %v4207
        %4306 = vmatprep.subr.bf16.mxu0 0
        %4307 = vmatpush1.bf16.msra.mxu0 %v4208
        %4308 = vmatprep.subr.bf16.mxu0 0
        %4309 = vmatpush1.bf16.msra.mxu0 %v4209
        %4310 = vmatprep.mubr.bf16.mxu0 %v4032
        %4311 = vmatmul.mubr.bf16.gmra.mrb[0].mxu0 %v3904
        %v4312 = vpop.f32.mrb[0].mxu0
        %v4313 = vadd.f32 %v4120, %v4312
        %v4314 = vpop.f32.mrb[0].mxu0
        %v4315 = vpop.f32.mrb[0].mxu0
        %v4316 = vadd.f32 %v4120, %v4315
        %v4317 = vpop.f32.mrb[0].mxu0
        %4318 = vmatprep.mubr.bf16.mxu0 %v4035
        %4319 = vmatmul.mubr.bf16.gmra.mrb[0].mxu0 %v3907
        %v4320 = vpop.f32.mrb[0].mxu0
        %v4321 = vadd.f32 %v4120, %v4320
        %v4322 = vpop.f32.mrb[0].mxu0
        %v4323 = vpop.f32.mrb[0].mxu0
        %v4324 = vadd.f32 %v4120, %v4323
        %v4325 = vpop.f32.mrb[0].mxu0
        %4326 = vmatprep.mubr.bf16.mxu0 %v4038
        %4327 = vmatmul.mubr.bf16.gmra.mrb[0].mxu0 %v3910
        %v4328 = vpop.f32.mrb[0].mxu0
        %v4329 = vadd.f32 %v4120, %v4328
        %v4330 = vpop.f32.mrb[0].mxu0
        %v4331 = vpop.f32.mrb[0].mxu0
        %v4332 = vadd.f32 %v4120, %v4331
        %v4333 = vpop.f32.mrb[0].mxu0
        %4334 = vmatprep.mubr.bf16.mxu0 %v4041
        %4335 = vmatmul.mubr.bf16.gmra.mrb[0].mxu0 %v3913
        %v4336 = vpop.f32.mrb[0].mxu0
        %v4337 = vadd.f32 %v4120, %v4336
        %v4338 = vpop.f32.mrb[0].mxu0
        %v4339 = vpop.f32.mrb[0].mxu0
        %v4340 = vadd.f32 %v4120, %v4339
        %v4341 = vpop.f32.mrb[0].mxu0
        %4342 = vmatprep.mubr.bf16.mxu0 %v4044
        %4343 = vmatmul.mubr.bf16.gmra.mrb[0].mxu0 %v3916
        %v4344 = vpop.f32.mrb[0].mxu0
        %v4345 = vadd.f32 %v4120, %v4344
        %v4346 = vpop.f32.mrb[0].mxu0
        %v4347 = vpop.f32.mrb[0].mxu0
        %v4348 = vadd.f32 %v4120, %v4347
        %v4349 = vpop.f32.mrb[0].mxu0
        %4350 = vmatprep.mubr.bf16.mxu0 %v4047
        %4351 = vmatmul.mubr.bf16.gmra.mrb[0].mxu0 %v3919
        %v4352 = vpop.f32.mrb[0].mxu0
        %v4353 = vadd.f32 %v4120, %v4352
        %v4354 = vpop.f32.mrb[0].mxu0
        %v4355 = vpop.f32.mrb[0].mxu0
        %v4356 = vadd.f32 %v4120, %v4355
        %v4357 = vpop.f32.mrb[0].mxu0
        %4358 = vmatprep.mubr.bf16.mxu0 %v4050
        %4359 = vmatmul.mubr.bf16.gmra.mrb[0].mxu0 %v3922
        %v4360 = vpop.f32.mrb[0].mxu0
        %v4361 = vadd.f32 %v4120, %v4360
        %v4362 = vpop.f32.mrb[0].mxu0
        %v4363 = vpop.f32.mrb[0].mxu0
        %v4364 = vadd.f32 %v4120, %v4363
        %v4365 = vpop.f32.mrb[0].mxu0
        %4366 = vmatprep.mubr.bf16.mxu0 %v4053
        %4367 = vmatmul.mubr.bf16.gmra.mrb[0].mxu0 %v3925
        %v4368 = vpop.f32.mrb[0].mxu0
        %v4369 = vadd.f32 %v4120, %v4368
        %v4370 = vpop.f32.mrb[0].mxu0
        %v4371 = vpop.f32.mrb[0].mxu0
        %v4372 = vadd.f32 %v4120, %v4371
        %v4373 = vpop.f32.mrb[0].mxu0
        %4374 = vmatprep.mubr.bf16.mxu0 %v4056
        %4375 = vmatmul.mubr.bf16.gmra.mrb[0].mxu0 %v3928
        %v4376 = vpop.f32.mrb[0].mxu0
        %v4377 = vadd.f32 %v4120, %v4376
        %v4378 = vpop.f32.mrb[0].mxu0
        %v4379 = vpop.f32.mrb[0].mxu0
        %v4380 = vadd.f32 %v4120, %v4379
        %v4381 = vpop.f32.mrb[0].mxu0
        %4382 = vmatprep.mubr.bf16.mxu0 %v4059
        %4383 = vmatmul.mubr.bf16.gmra.mrb[0].mxu0 %v3931
        %v4384 = vpop.f32.mrb[0].mxu0
        %v4385 = vadd.f32 %v4120, %v4384
        %v4386 = vpop.f32.mrb[0].mxu0
        %v4387 = vpop.f32.mrb[0].mxu0
        %v4388 = vadd.f32 %v4120, %v4387
        %v4389 = vpop.f32.mrb[0].mxu0
        %4390 = vmatprep.mubr.bf16.mxu0 %v4062
        %4391 = vmatmul.mubr.bf16.gmra.mrb[0].mxu0 %v3934
        %v4392 = vpop.f32.mrb[0].mxu0
        %v4393 = vadd.f32 %v4120, %v4392
        %v4394 = vpop.f32.mrb[0].mxu0
        %v4395 = vpop.f32.mrb[0].mxu0
        %v4396 = vadd.f32 %v4120, %v4395
        %v4397 = vpop.f32.mrb[0].mxu0
        %4398 = vmatprep.mubr.bf16.mxu0 %v4065
        %4399 = vmatmul.mubr.bf16.gmra.mrb[0].mxu0 %v3937
        %v4400 = vpop.f32.mrb[0].mxu0
        %v4401 = vadd.f32 %v4120, %v4400
        %v4402 = vpop.f32.mrb[0].mxu0
        %v4403 = vpop.f32.mrb[0].mxu0
        %v4404 = vadd.f32 %v4120, %v4403
        %v4405 = vpop.f32.mrb[0].mxu0
        %4406 = vmatprep.mubr.bf16.mxu0 %v4068
        %4407 = vmatmul.mubr.bf16.gmra.mrb[0].mxu0 %v3940
        %v4408 = vpop.f32.mrb[0].mxu0
        %v4409 = vadd.f32 %v4120, %v4408
        %v4410 = vpop.f32.mrb[0].mxu0
        %v4411 = vpop.f32.mrb[0].mxu0
        %v4412 = vadd.f32 %v4120, %v4411
        %v4413 = vpop.f32.mrb[0].mxu0
        %4414 = vmatprep.mubr.bf16.mxu0 %v4071
        %4415 = vmatmul.mubr.bf16.gmra.mrb[0].mxu0 %v3943
        %v4416 = vpop.f32.mrb[0].mxu0
        %v4417 = vadd.f32 %v4120, %v4416
        %v4418 = vpop.f32.mrb[0].mxu0
        %v4419 = vpop.f32.mrb[0].mxu0
        %v4420 = vadd.f32 %v4120, %v4419
        %v4421 = vpop.f32.mrb[0].mxu0
        %4422 = vmatprep.mubr.bf16.mxu0 %v4074
        %4423 = vmatmul.mubr.bf16.gmra.mrb[0].mxu0 %v3946
        %v4424 = vpop.f32.mrb[0].mxu0
        %v4425 = vadd.f32 %v4120, %v4424
        %v4426 = vpop.f32.mrb[0].mxu0
        %v4427 = vpop.f32.mrb[0].mxu0
        %v4428 = vadd.f32 %v4120, %v4427
        %v4429 = vpop.f32.mrb[0].mxu0
        %4430 = vmatprep.mubr.bf16.mxu0 %v4077
        %4431 = vmatmul.mubr.bf16.gmra.mrb[0].mxu0 %v3949
        %v4432 = vpop.f32.mrb[0].mxu0
        %v4433 = vadd.f32 %v4120, %v4432
        %v4434 = vpop.f32.mrb[0].mxu0
        %v4435 = vpop.f32.mrb[0].mxu0
        %v4436 = vadd.f32 %v4120, %v4435
        %v4437 = vpop.f32.mrb[0].mxu0
        %4438 = vdwg.mxu0
        %4439 = vmatprep.subr.bf16.mxu0 0
        %4440 = vmatpush1.bf16.msra.mxu0 %v4210
        %4441 = vmatprep.subr.bf16.mxu0 0
        %4442 = vmatpush1.bf16.msra.mxu0 %v4211
        %4443 = vmatprep.subr.bf16.mxu0 0
        %4444 = vmatpush1.bf16.msra.mxu0 0
        %4445 = vmatprep.subr.bf16.mxu0 0
        %4446 = vmatpush1.bf16.msra.mxu0 0
        %4447 = vmatprep.subr.bf16.mxu0 0
        %4448 = vmatpush1.bf16.msra.mxu0 0
        %4449 = vmatprep.subr.bf16.mxu0 0
        %4450 = vmatpush1.bf16.msra.mxu0 0
        %4451 = vmatprep.subr.bf16.mxu0 0
        %4452 = vmatpush1.bf16.msra.mxu0 0
        %4453 = vmatprep.subr.bf16.mxu0 0
        %4454 = vmatpush1.bf16.msra.mxu0 0
        %4455 = vmatprep.subr.bf16.mxu0 0
        %4456 = vmatpush1.bf16.msra.mxu0 0
        %4457 = vmatprep.subr.bf16.mxu0 0
        %4458 = vmatpush1.bf16.msra.mxu0 0
        %4459 = vmatprep.subr.bf16.mxu0 0
        %4460 = vmatpush1.bf16.msra.mxu0 0
        %4461 = vmatprep.subr.bf16.mxu0 0
        %4462 = vmatpush1.bf16.msra.mxu0 0
        %4463 = vmatprep.subr.bf16.mxu0 0
        %4464 = vmatpush1.bf16.msra.mxu0 0
        %4465 = vmatprep.subr.bf16.mxu0 0
        %4466 = vmatpush1.bf16.msra.mxu0 0
        %4467 = vmatprep.subr.bf16.mxu0 0
        %4468 = vmatpush1.bf16.msra.mxu0 0
        %4469 = vmatprep.subr.bf16.mxu0 0
        %4470 = vmatpush1.bf16.msra.mxu0 0
        %4471 = vmatprep.mubr.bf16.mxu0 0
        %4472 = vmatmul.mubr.bf16.gmra.mrb[0].mxu0 %v4231
        %v4473 = vpop.f32.mrb[0].mxu0
        %v4474 = vadd.f32 %v4313, %v4473
        %v4475 = vpop.f32.mrb[0].mxu0
        %v4476 = vpop.f32.mrb[0].mxu0
        %v4477 = vadd.f32 %v4316, %v4476
        %v4478 = vpop.f32.mrb[0].mxu0
        %4479 = vmatprep.mubr.bf16.mxu0 0
        %4480 = vmatmul.mubr.bf16.gmra.mrb[0].mxu0 %v4234
        %v4481 = vpop.f32.mrb[0].mxu0
        %v4482 = vadd.f32 %v4321, %v4481
        %v4483 = vpop.f32.mrb[0].mxu0
        %v4484 = vpop.f32.mrb[0].mxu0
        %v4485 = vadd.f32 %v4324, %v4484
        %v4486 = vpop.f32.mrb[0].mxu0
        %4487 = vmatprep.mubr.bf16.mxu0 0
        %4488 = vmatmul.mubr.bf16.gmra.mrb[0].mxu0 %v4237
        %v4489 = vpop.f32.mrb[0].mxu0
        %v4490 = vadd.f32 %v4329, %v4489
        %v4491 = vpop.f32.mrb[0].mxu0
        %v4492 = vpop.f32.mrb[0].mxu0
        %v4493 = vadd.f32 %v4332, %v4492
        %v4494 = vpop.f32.mrb[0].mxu0
        %4495 = vmatprep.mubr.bf16.mxu0 0
        %4496 = vmatmul.mubr.bf16.gmra.mrb[0].mxu0 %v4240
        %v4497 = vpop.f32.mrb[0].mxu0
        %v4498 = vadd.f32 %v4337, %v4497
        %v4499 = vpop.f32.mrb[0].mxu0
        %v4500 = vpop.f32.mrb[0].mxu0
        %v4501 = vadd.f32 %v4340, %v4500
        %v4502 = vpop.f32.mrb[0].mxu0
        %4503 = vmatprep.mubr.bf16.mxu0 0
        %4504 = vmatmul.mubr.bf16.gmra.mrb[0].mxu0 %v4243
        %v4505 = vpop.f32.mrb[0].mxu0
        %v4506 = vadd.f32 %v4345, %v4505
        %v4507 = vpop.f32.mrb[0].mxu0
        %v4508 = vpop.f32.mrb[0].mxu0
        %v4509 = vadd.f32 %v4348, %v4508
        %v4510 = vpop.f32.mrb[0].mxu0
        %4511 = vmatprep.mubr.bf16.mxu0 0
        %4512 = vmatmul.mubr.bf16.gmra.mrb[0].mxu0 %v4246
        %v4513 = vpop.f32.mrb[0].mxu0
        %v4514 = vadd.f32 %v4353, %v4513
        %v4515 = vpop.f32.mrb[0].mxu0
        %v4516 = vpop.f32.mrb[0].mxu0
        %v4517 = vadd.f32 %v4356, %v4516
        %v4518 = vpop.f32.mrb[0].mxu0
        %4519 = vmatprep.mubr.bf16.mxu0 0
        %4520 = vmatmul.mubr.bf16.gmra.mrb[0].mxu0 %v4249
        %v4521 = vpop.f32.mrb[0].mxu0
        %v4522 = vadd.f32 %v4361, %v4521
        %v4523 = vpop.f32.mrb[0].mxu0
        %v4524 = vpop.f32.mrb[0].mxu0
        %v4525 = vadd.f32 %v4364, %v4524
        %v4526 = vpop.f32.mrb[0].mxu0
        %4527 = vmatprep.mubr.bf16.mxu0 0
        %4528 = vmatmul.mubr.bf16.gmra.mrb[0].mxu0 %v4252
        %v4529 = vpop.f32.mrb[0].mxu0
        %v4530 = vadd.f32 %v4369, %v4529
        %v4531 = vpop.f32.mrb[0].mxu0
        %v4532 = vpop.f32.mrb[0].mxu0
        %v4533 = vadd.f32 %v4372, %v4532
        %v4534 = vpop.f32.mrb[0].mxu0
        %4535 = vmatprep.mubr.bf16.mxu0 0
        %4536 = vmatmul.mubr.bf16.gmra.mrb[0].mxu0 %v4255
        %v4537 = vpop.f32.mrb[0].mxu0
        %v4538 = vadd.f32 %v4377, %v4537
        %v4539 = vpop.f32.mrb[0].mxu0
        %v4540 = vpop.f32.mrb[0].mxu0
        %v4541 = vadd.f32 %v4380, %v4540
        %v4542 = vpop.f32.mrb[0].mxu0
        %4543 = vmatprep.mubr.bf16.mxu0 0
        %4544 = vmatmul.mubr.bf16.gmra.mrb[0].mxu0 %v4258
        %v4545 = vpop.f32.mrb[0].mxu0
        %v4546 = vadd.f32 %v4385, %v4545
        %v4547 = vpop.f32.mrb[0].mxu0
        %v4548 = vpop.f32.mrb[0].mxu0
        %v4549 = vadd.f32 %v4388, %v4548
        %v4550 = vpop.f32.mrb[0].mxu0
        %4551 = vmatprep.mubr.bf16.mxu0 0
        %4552 = vmatmul.mubr.bf16.gmra.mrb[0].mxu0 %v4261
        %v4553 = vpop.f32.mrb[0].mxu0
        %v4554 = vadd.f32 %v4393, %v4553
        %v4555 = vpop.f32.mrb[0].mxu0
        %v4556 = vpop.f32.mrb[0].mxu0
        %v4557 = vadd.f32 %v4396, %v4556
        %v4558 = vpop.f32.mrb[0].mxu0
        %4559 = vmatprep.mubr.bf16.mxu0 0
        %4560 = vmatmul.mubr.bf16.gmra.mrb[0].mxu0 %v4264
        %v4561 = vpop.f32.mrb[0].mxu0
        %v4562 = vadd.f32 %v4401, %v4561
        %v4563 = vpop.f32.mrb[0].mxu0
        %v4564 = vpop.f32.mrb[0].mxu0
        %v4565 = vadd.f32 %v4404, %v4564
        %v4566 = vpop.f32.mrb[0].mxu0
        %4567 = vmatprep.mubr.bf16.mxu0 0
        %4568 = vmatmul.mubr.bf16.gmra.mrb[0].mxu0 %v4267
        %v4569 = vpop.f32.mrb[0].mxu0
        %v4570 = vadd.f32 %v4409, %v4569
        %v4571 = vpop.f32.mrb[0].mxu0
        %v4572 = vpop.f32.mrb[0].mxu0
        %v4573 = vadd.f32 %v4412, %v4572
        %v4574 = vpop.f32.mrb[0].mxu0
        %4575 = vmatprep.mubr.bf16.mxu0 0
        %4576 = vmatmul.mubr.bf16.gmra.mrb[0].mxu0 %v4270
        %v4577 = vpop.f32.mrb[0].mxu0
        %v4578 = vadd.f32 %v4417, %v4577
        %v4579 = vpop.f32.mrb[0].mxu0
        %v4580 = vpop.f32.mrb[0].mxu0
        %v4581 = vadd.f32 %v4420, %v4580
        %v4582 = vpop.f32.mrb[0].mxu0
        %4583 = vmatprep.mubr.bf16.mxu0 0
        %4584 = vmatmul.mubr.bf16.gmra.mrb[0].mxu0 %v4273
        %v4585 = vpop.f32.mrb[0].mxu0
        %v4586 = vadd.f32 %v4425, %v4585
        %v4587 = vpop.f32.mrb[0].mxu0
        %v4588 = vpop.f32.mrb[0].mxu0
        %v4589 = vadd.f32 %v4428, %v4588
        %v4590 = vpop.f32.mrb[0].mxu0
        %4591 = vmatprep.mubr.bf16.mxu0 0
        %4592 = vmatmul.mubr.bf16.gmra.mrb[0].mxu0 %v4276
        %v4593 = vpop.f32.mrb[0].mxu0
        %v4594 = vadd.f32 %v4433, %v4593
        %v4595 = vpop.f32.mrb[0].mxu0
        %v4596 = vpop.f32.mrb[0].mxu0
        %v4597 = vadd.f32 %v4436, %v4596
        %v4598 = vpop.f32.mrb[0].mxu0
        %4599 = vdwg.mxu0
        %v4600 = vmax.f32 %v4474, 0.0
        %v4601 = vmax.f32 %v4477, 0.0
        %v4602 = vmax.f32 %v4482, 0.0
        %v4603 = vmax.f32 %v4485, 0.0
        %v4604 = vmax.f32 %v4490, 0.0
        %v4605 = vmax.f32 %v4493, 0.0
        %v4606 = vmax.f32 %v4498, 0.0
        %v4607 = vmax.f32 %v4501, 0.0
        %v4608 = vmax.f32 %v4506, 0.0
        %v4609 = vmax.f32 %v4509, 0.0
        %v4610 = vmax.f32 %v4514, 0.0
        %v4611 = vmax.f32 %v4517, 0.0
        %v4612 = vmax.f32 %v4522, 0.0
        %v4613 = vmax.f32 %v4525, 0.0
        %v4614 = vmax.f32 %v4530, 0.0
        %v4615 = vmax.f32 %v4533, 0.0
        %v4616 = vmax.f32 %v4538, 0.0
        %v4617 = vmax.f32 %v4541, 0.0
        %v4618 = vmax.f32 %v4546, 0.0
        %v4619 = vmax.f32 %v4549, 0.0
        %v4620 = vmax.f32 %v4554, 0.0
        %v4621 = vmax.f32 %v4557, 0.0
        %v4622 = vmax.f32 %v4562, 0.0
        %v4623 = vmax.f32 %v4565, 0.0
        %v4624 = vmax.f32 %v4570, 0.0
        %v4625 = vmax.f32 %v4573, 0.0
        %v4626 = vmax.f32 %v4578, 0.0
        %v4627 = vmax.f32 %v4581, 0.0
        %v4628 = vmax.f32 %v4586, 0.0
        %v4629 = vmax.f32 %v4589, 0.0
        %v4630 = vmax.f32 %v4594, 0.0
        %v4631 = vmax.f32 %v4597, 0.0
        %v4632 = vsel %vm3820, %v4600, 0.0
        %v4633 = vsel %vm3820, %v4601, 0.0
        %v4634 = vadd.f32 %v4632, %v4633
        %v4635 = vsel %vm3820, %v4602, 0.0
        %v4636 = vadd.f32 %v4634, %v4635
        %v4637 = vsel %vm3820, %v4603, 0.0
        %v4638 = vadd.f32 %v4636, %v4637
        %v4639 = vsel %vm3820, %v4604, 0.0
        %v4640 = vadd.f32 %v4638, %v4639
        %v4641 = vsel %vm3820, %v4605, 0.0
        %v4642 = vadd.f32 %v4640, %v4641
        %v4643 = vsel %vm3820, %v4606, 0.0
        %v4644 = vadd.f32 %v4642, %v4643
        %v4645 = vsel %vm3820, %v4607, 0.0
        %v4646 = vadd.f32 %v4644, %v4645
        %v4647 = vsel %vm3820, %v4608, 0.0
        %v4648 = vadd.f32 %v4646, %v4647
        %v4649 = vsel %vm3820, %v4609, 0.0
        %v4650 = vadd.f32 %v4648, %v4649
        %v4651 = vsel %vm3820, %v4610, 0.0
        %v4652 = vadd.f32 %v4650, %v4651
        %v4653 = vsel %vm3820, %v4611, 0.0
        %v4654 = vadd.f32 %v4652, %v4653
        %v4655 = vsel %vm3820, %v4612, 0.0
        %v4656 = vadd.f32 %v4654, %v4655
        %v4657 = vsel %vm3820, %v4613, 0.0
        %v4658 = vadd.f32 %v4656, %v4657
        %v4659 = vsel %vm3820, %v4614, 0.0
        %v4660 = vadd.f32 %v4658, %v4659
        %v4661 = vsel %vm3820, %v4615, 0.0
        %v4662 = vadd.f32 %v4660, %v4661
        %v4663 = vsel %vm3820, %v4616, 0.0
        %v4664 = vadd.f32 %v4662, %v4663
        %v4665 = vsel %vm3820, %v4617, 0.0
        %v4666 = vadd.f32 %v4664, %v4665
        %v4667 = vsel %vm3820, %v4618, 0.0
        %v4668 = vadd.f32 %v4666, %v4667
        %v4669 = vsel %vm3820, %v4619, 0.0
        %v4670 = vadd.f32 %v4668, %v4669
        %v4671 = vsel %vm3820, %v4620, 0.0
        %v4672 = vadd.f32 %v4670, %v4671
        %v4673 = vsel %vm3820, %v4621, 0.0
        %v4674 = vadd.f32 %v4672, %v4673
        %v4675 = vsel %vm3820, %v4622, 0.0
        %v4676 = vadd.f32 %v4674, %v4675
        %v4677 = vsel %vm3820, %v4623, 0.0
        %v4678 = vadd.f32 %v4676, %v4677
        %v4679 = vsel %vm3820, %v4624, 0.0
        %v4680 = vadd.f32 %v4678, %v4679
        %v4681 = vsel %vm3820, %v4625, 0.0
        %v4682 = vadd.f32 %v4680, %v4681
        %v4683 = vsel %vm3820, %v4626, 0.0
        %v4684 = vadd.f32 %v4682, %v4683
        %v4685 = vsel %vm3820, %v4627, 0.0
        %v4686 = vadd.f32 %v4684, %v4685
        %v4687 = vsel %vm3820, %v4628, 0.0
        %v4688 = vadd.f32 %v4686, %v4687
        %v4689 = vsel %vm3820, %v4629, 0.0
        %v4690 = vadd.f32 %v4688, %v4689
        %v4691 = vsel %vm3820, %v4630, 0.0
        %v4692 = vadd.f32 %v4690, %v4691
        %v4693 = vsel %vm3820, %v4631, 0.0
        %v4694 = vadd.f32 %v4692, %v4693
        %v4695 = vrot.slane %v4694, 4
        %v4696 = vadd.f32 %v4694, %v4695
        %v4697 = vrot.slane %v4696, 2
        %v4698 = vadd.f32 %v4696, %v4697
        %v4699 = vrot.slane %v4698, 1
        %v4700 = vadd.f32 %v4698, %v4699
        %v4701 = vrcp.pop 256.0
        %v4702 = vmul.f32 %v4700, %v4701
        %v4703 = vld [vmem:[%s5] sm:$0xff]
        %v4704 = vld [vmem:[%s5 + $0x8] sm:$0xff]
        %v4705 = vld [vmem:[%s5 + $0x10] sm:$0xff]
        %v4706 = vld [vmem:[%s5 + $0x18] sm:$0xff]
        %v4707 = vld [vmem:[%s6] sm:$0x1]
        %v4709 = vsel %vm3820, %v4702, 0
        %4711 = vmatprep.subr.mxu0 0.0
        %4712 = vmatpush1.msra.mxu0 %v4703
        %4713 = vmatprep.subr.mxu0 0.0
        %4714 = vmatpush1.msra.mxu0 %v4704
        %4715 = vmatprep.subr.mxu0 0.0
        %4716 = vmatpush1.msra.mxu0 %v4705
        %4717 = vmatprep.subr.mxu0 0.0
        %4718 = vmatpush1.msra.mxu0 %v4706
        %4719 = vmatprep.subr.mxu0 0.0
        %4720 = vmatpush1.msra.mxu0 0.0
        %4721 = vmatprep.subr.mxu0 0.0
        %4722 = vmatpush1.msra.mxu0 0.0
        %4723 = vmatprep.subr.mxu0 0.0
        %4724 = vmatpush1.msra.mxu0 0.0
        %4725 = vmatprep.subr.mxu0 0.0
        %4726 = vmatpush1.msra.mxu0 0.0
        %4727 = vmatprep.subr.mxu0 0.0
        %4728 = vmatpush1.msra.mxu0 0.0
        %4729 = vmatprep.subr.mxu0 0.0
        %4730 = vmatpush1.msra.mxu0 0.0
        %4731 = vmatprep.subr.mxu0 0.0
        %4732 = vmatpush1.msra.mxu0 0.0
        %4733 = vmatprep.subr.mxu0 0.0
        %4734 = vmatpush1.msra.mxu0 0.0
        %4735 = vmatprep.subr.mxu0 0.0
        %4736 = vmatpush1.msra.mxu0 0.0
        %4737 = vmatprep.subr.mxu0 0.0
        %4738 = vmatpush1.msra.mxu0 0.0
        %4739 = vmatprep.subr.mxu0 0.0
        %4740 = vmatpush1.msra.mxu0 0.0
        %4741 = vmatprep.subr.mxu0 0.0
        %4742 = vmatpush1.msra.mxu0 0.0
        %4743 = vmatprep.subr.mxu0 0.0
        %4744 = vmatpush1.msra.mxu0 0.0
        %4745 = vmatprep.subr.mxu0 0.0
        %4746 = vmatpush1.msra.mxu0 0.0
        %4747 = vmatprep.subr.mxu0 0.0
        %4748 = vmatpush1.msra.mxu0 0.0
        %4749 = vmatprep.subr.mxu0 0.0
        %4750 = vmatpush1.msra.mxu0 0.0
        %4751 = vmatprep.subr.mxu0 0.0
        %4752 = vmatpush1.msra.mxu0 0.0
        %4753 = vmatprep.subr.mxu0 0.0
        %4754 = vmatpush1.msra.mxu0 0.0
        %4755 = vmatprep.subr.mxu0 0.0
        %4756 = vmatpush1.msra.mxu0 0.0
        %4757 = vmatprep.subr.mxu0 0.0
        %4758 = vmatpush1.msra.mxu0 0.0
        %4759 = vmatprep.subr.mxu0 0.0
        %4760 = vmatpush1.msra.mxu0 0.0
        %4761 = vmatprep.subr.mxu0 0.0
        %4762 = vmatpush1.msra.mxu0 0.0
        %4763 = vmatprep.subr.mxu0 0.0
        %4764 = vmatpush1.msra.mxu0 0.0
        %4765 = vmatprep.subr.mxu0 0.0
        %4766 = vmatpush1.msra.mxu0 0.0
        %4767 = vmatprep.subr.mxu0 0.0
        %4768 = vmatpush1.msra.mxu0 0.0
        %4769 = vmatprep.subr.mxu0 0.0
        %4770 = vmatpush1.msra.mxu0 0.0
        %4771 = vmatprep.subr.mxu0 0.0
        %4772 = vmatpush1.msra.mxu0 0.0
        %4773 = vmatprep.subr.mxu0 0.0
        %4774 = vmatpush1.msra.mxu0 0.0
        %4775 = vmatprep.mubr.f32.mxu0 0.0
        %4776 = vmatmul.mubr.f32.gmra.mrb[0].mxu0 %v4709
        %v4777 = vpop.f32.mrb[0].mxu0
        %v4778 = vadd.f32 %v4707, %v4777
        %v4779 = vpop.f32.mrb[0].mxu0
        %4780 = vdwg.mxu0
        %4781 = vst [vmem:[%s270] sm:$0x1] %v4778
        %s4782 = sand.u32 %s181, 1
        %s4783 = scalar_lea.sflag [#allocation4], %s4782
        %s4784 = sand.u32 %s181, 1
        %s4785 = scalar_lea.vmem [#allocation3], %s4784
        // Predicated region
        $region49: #{tpu_custom_call.1} parent=47 // pred_check
          %p4786 = pneg %p191
        $region50: #{tpu_custom_call.1} parent=47 // pred_check_branch
          %4788 = sbr.rel (%p4786) target = $region52
        $region51: #{tpu_custom_call.1} parent=47 // pred_region
          %s4790 = ssub.s32 16, 16
          %4791 = vsyncadd %s4783, %s4790
          %s4792 = smul.addr %s21, 16
          %s4793 = scalar_lea.hbm %s7, %s4792
          %s4795 = sshll.u32 %s4785, 4
          %s4796 = int_to_ptr.vmem [resolvable:$true] %s4795
          %4798 = dma.vmem_to_hbm [thread:$0]  %s4796, 16, %s4793, %s4783
        $region52: #{tpu_custom_call.1} parent=47 // pred_fallthru
          _
      $region48: #{tpu_custom_call.1} parent=5 // pred_fallthru
        _
      %p4799 = scmp.le.s32.totalorder 2, %s16
      // Predicated region
      $region53: #{tpu_custom_call.1} parent=5 // pred_check
        %p4800 = pneg %p4799
      $region54: #{tpu_custom_call.1} parent=5 // pred_check_branch
        %4802 = sbr.rel (%p4800) target = $region56
      $region55: #{tpu_custom_call.1} parent=5 // pred_region
        %s4803 = ssub.s32 %s16, 2
        // Predicated region
        $region57: #{tpu_custom_call.1} parent=55 // pred_check
          %p4804 = pneg %p197
        $region58: #{tpu_custom_call.1} parent=55 // pred_check_branch
          %4806 = sbr.rel (%p4804) target = $region60
        $region59: #{tpu_custom_call.1} parent=55 // pred_region
          %s4807 = sand.u32 %s182, 1
          %s4808 = scalar_lea.sflag [#allocation4], %s4807
          %s4809 = sand.u32 %s182, 1
          %s4810 = scalar_lea.vmem [#allocation3], %s4809
          %4811 = dma.done %s4808, 16
        $region60: #{tpu_custom_call.1} parent=55 // pred_fallthru
          _
      $region56: #{tpu_custom_call.1} parent=5 // pred_fallthru
        _
    $region6: #{tpu_custom_call.1} parent=1 // loop_footer
      %s20 = sadd.s32 1, %s16
    $region7: #{tpu_custom_call.1} parent=1 // loop_footer_branch
      %15 = sbr.rel target = $region3
    $region8: #{tpu_custom_call.1} parent=1 // loop_exit
      _
    %4812 = vsyncpa [#allocation4], 1
    %s4813 = scalar_lea.sflag [#allocation4], 1
    %4814 = vsyncpa %s4813, 1

</llo_original>
